<compile_context>
chip_gen: v7x
topology: tpu7x:2x2x1
jax: 0.10.0
libtpu: 0.0.40
codegen_flags: <defaults>
</compile_context>

<pallas_src>
import functools

import jax
import jax.numpy as jnp
import numpy as np
from jax.experimental import pallas as pl
from jax.experimental.pallas import tpu as pltpu


# ---------------------------------------------------------------------------
# helpers
# ---------------------------------------------------------------------------
def _round_up(x, m):
    return ((x + m - 1) // m) * m


def _row_tile(M, t_max=512):
    """Pick an 8-aligned row tile ~balanced across cdiv(M, t_max) grid steps."""
    g = max(1, pl.cdiv(M, t_max))
    t = _round_up(pl.cdiv(M, g), 8)
    return t, pl.cdiv(M, t)


def _batch_tile(B, t_max=64):
    """Batch tile for the fused attention head (>=8 when possible)."""
    if B <= 8:
        return B, 1          # block second-to-last dim == full dim -> legal
    t = min(t_max, (B // 8) * 8)
    return t, pl.cdiv(B, t)


# ---------------------------------------------------------------------------
# Pallas kernels
# ---------------------------------------------------------------------------
def _linear_kernel(x_ref, w_ref, b_ref, o_ref, *, relu):
    """Fused GEMM + bias (+ ReLU).  x:(TM,K) bf16  w:(K,N) bf16  b:(1,N) f32."""
    y = jnp.dot(x_ref[...], w_ref[...], preferred_element_type=jnp.float32)
    y = y + b_ref[...]
    if relu:
        y = jnp.maximum(y, 0.0)
    o_ref[...] = y.astype(o_ref.dtype)


def pallas_linear(x, w, b, *, relu, out_dtype=jnp.bfloat16, tm_max=512):
    M, K = x.shape
    K2, N = w.shape
    assert K == K2
    tm, grid_m = _row_tile(M, tm_max)
    kern = functools.partial(_linear_kernel, relu=relu)
    return pl.pallas_call(
        kern,
        out_shape=jax.ShapeDtypeStruct((M, N), out_dtype),
        grid=(grid_m,),
        in_specs=[
            pl.BlockSpec((tm, K), lambda i: (i, 0)),
            pl.BlockSpec((K, N), lambda i: (0, 0)),   # weight stays resident
            pl.BlockSpec((1, N), lambda i: (0, 0)),
        ],
        out_specs=pl.BlockSpec((tm, N), lambda i: (i, 0)),
        compiler_params=pltpu.CompilerParams(dimension_semantics=("parallel",)),
    )(x, w, b)


def _conv3_theta_kernel(p_ref, w3_ref, b3_ref, wt_ref, bt_ref, x3_ref, th_ref):
    """conv3 GEMM + ReLU fused with theta2 (1x1 conv).  Rows = B*49 positions."""
    x3 = jnp.dot(p_ref[...], w3_ref[...], preferred_element_type=jnp.float32)
    x3 = jnp.maximum(x3 + b3_ref[...], 0.0)
    th = jnp.dot(x3.astype(jnp.bfloat16), wt_ref[...],
                 preferred_element_type=jnp.float32) + bt_ref[...]
    x3_ref[...] = x3.astype(x3_ref.dtype)
    th_ref[...] = th.astype(th_ref.dtype)


def pallas_conv3_theta(patches, w3, b3, wt, bt, *, tm_max=512):
    M, K = patches.shape
    N3 = w3.shape[1]
    Nt = wt.shape[1]
    tm, grid_m = _row_tile(M, tm_max)
    return pl.pallas_call(
        _conv3_theta_kernel,
        out_shape=(jax.ShapeDtypeStruct((M, N3), jnp.bfloat16),
                   jax.ShapeDtypeStruct((M, Nt), jnp.bfloat16)),
        grid=(grid_m,),
        in_specs=[
            pl.BlockSpec((tm, K), lambda i: (i, 0)),
            pl.BlockSpec((K, N3), lambda i: (0, 0)),
            pl.BlockSpec((1, N3), lambda i: (0, 0)),
            pl.BlockSpec((N3, Nt), lambda i: (0, 0)),
            pl.BlockSpec((1, Nt), lambda i: (0, 0)),
        ],
        out_specs=(pl.BlockSpec((tm, N3), lambda i: (i, 0)),
                   pl.BlockSpec((tm, Nt), lambda i: (i, 0))),
        compiler_params=pltpu.CompilerParams(dimension_semantics=("parallel",)),
    )(patches, w3, b3, wt, bt)


def _attn_head_kernel(x3_ref, th_ref, g_ref, wa_ref, ba_ref,
                      w4_ref, b4_ref, w5h_ref, w5g_ref, b5_ref, q_ref):
    """Fused tail per batch tile: alpha, goal attention, fc4, split fc5.

    x3:(TB,49,64) bf16  th:(TB,49,32) bf16  g:(TB,8) f32  q:(TB,128) f32.
    """
    g = g_ref[...]                                                    # (TB, 8)
    # alpha(goals)  (tiny K=8; keep f32)
    ag = jnp.dot(g, wa_ref[...], preferred_element_type=jnp.float32) + ba_ref[...]
    # attention scores over the 49 spatial positions
    th = th_ref[...].astype(jnp.float32)                              # (TB,49,32)
    s = jnp.sum(th * ag[:, None, :], axis=-1)                         # (TB,49)
    s_max = jnp.max(s, axis=-1, keepdims=True)
    e = jnp.exp(s - s_max)
    attn = e * pl.reciprocal(jnp.sum(e, axis=-1, keepdims=True), approx=True)
    # weighted aggregation of conv3 features
    x3 = x3_ref[...].astype(jnp.float32)                              # (TB,49,64)
    agg = jnp.sum(x3 * attn[:, :, None], axis=1)                      # (TB,64)
    # fc4 + ReLU
    h = jnp.dot(agg.astype(jnp.bfloat16), w4_ref[...],
                preferred_element_type=jnp.float32) + b4_ref[...]
    h = jnp.maximum(h, 0.0)                                           # (TB,512)
    # fc5 as split matmul (replaces concat): q = h@W5h + g@W5g + b5 (lane-padded)
    q = jnp.dot(h.astype(jnp.bfloat16), w5h_ref[...],
                preferred_element_type=jnp.float32)
    q = q + jnp.dot(g, w5g_ref[...], preferred_element_type=jnp.float32)
    q_ref[...] = q + b5_ref[...]


def pallas_attention_head(x3, th, goals, pp, num_actions):
    B, P, _ = x3.shape
    tb, grid_b = _batch_tile(B)
    n_pad = pp["w5h"].shape[1]
    q_pad = pl.pallas_call(
        _attn_head_kernel,
        out_shape=jax.ShapeDtypeStruct((B, n_pad), jnp.float32),
        grid=(grid_b,),
        in_specs=[
            pl.BlockSpec((tb, P, 64), lambda i: (i, 0, 0)),
            pl.BlockSpec((tb, P, 32), lambda i: (i, 0, 0)),
            pl.BlockSpec((tb, 8), lambda i: (i, 0)),
            pl.BlockSpec((8, 32), lambda i: (0, 0)),
            pl.BlockSpec((1, 32), lambda i: (0, 0)),
            pl.BlockSpec((64, 512), lambda i: (0, 0)),
            pl.BlockSpec((1, 512), lambda i: (0, 0)),
            pl.BlockSpec((512, n_pad), lambda i: (0, 0)),
            pl.BlockSpec((8, n_pad), lambda i: (0, 0)),
            pl.BlockSpec((1, n_pad), lambda i: (0, 0)),
        ],
        out_specs=pl.BlockSpec((tb, n_pad), lambda i: (i, 0)),
        compiler_params=pltpu.CompilerParams(dimension_semantics=("parallel",)),
    )(x3, th, goals, pp["wa"], pp["ba"], pp["w4"], pp["b4"],
      pp["w5h"], pp["w5g"], pp["b5"])
    return q_pad[:, :num_actions]


# ---------------------------------------------------------------------------
# JAX glue: im2col (pure data rearrangement) and parameter construction
# ---------------------------------------------------------------------------
def im2col(x, K, S):
    """x: (B,H,W,C) NHWC -> patches (B*Ho*Wo, K*K*C) in (kh, kw, cin) order."""
    B, H, W, C = x.shape
    Ho = (H - K) // S + 1
    Wo = (W - K) // S + 1
    cols = []
    for i in range(K):
        for j in range(K):
            cols.append(x[:, i:i + S * (Ho - 1) + 1:S, j:j + S * (Wo - 1) + 1:S, :])
    patches = jnp.stack(cols, axis=3)                 # (B, Ho, Wo, K*K, C)
    return patches.reshape(B * Ho * Wo, K * K * C), (Ho, Wo)


def _uinit(key, shape, fan_in):
    bound = 1.0 / np.sqrt(fan_in)
    return jax.random.uniform(key, shape, jnp.float32, -bound, bound)


def init_params(key, in_channels=4, num_actions=18):
    ks = jax.random.split(key, 14)
    p = {}
    # conv weights stored directly in GEMM layout (Kh*Kw*Cin, Cout)
    p["w1"] = _uinit(ks[0], (8 * 8 * in_channels, 32), 8 * 8 * in_channels)
    p["b1"] = _uinit(ks[1], (32,), 8 * 8 * in_channels)
    p["w2"] = _uinit(ks[2], (4 * 4 * 32, 64), 4 * 4 * 32)
    p["b2"] = _uinit(ks[3], (64,), 4 * 4 * 32)
    p["w3"] = _uinit(ks[4], (3 * 3 * 64, 64), 3 * 3 * 64)
    p["b3"] = _uinit(ks[5], (64,), 3 * 3 * 64)
    p["wt"] = _uinit(ks[6], (64, 32), 64)          # theta2 1x1 conv
    p["bt"] = _uinit(ks[7], (32,), 64)
    p["wa"] = _uinit(ks[8], (8, 32), 8)            # alpha linear
    p["ba"] = _uinit(ks[9], (32,), 8)
    p["w4"] = _uinit(ks[10], (64, 512), 64)        # fc4
    p["b4"] = _uinit(ks[11], (512,), 64)
    p["w5"] = _uinit(ks[12], (520, num_actions), 520)  # fc5 (concat weight)
    p["b5"] = _uinit(ks[13], (num_actions,), 520)
    return p


def prepare_params(p, lane=128):
    """Cast matmul weights to bf16, reshape biases, split + lane-pad fc5."""
    bf = jnp.bfloat16
    n = p["w5"].shape[1]
    n_pad = _round_up(max(n, lane), lane)
    pad = n_pad - n
    return {
        "w1": p["w1"].astype(bf), "b1": p["b1"].reshape(1, -1),
        "w2": p["w2"].astype(bf), "b2": p["b2"].reshape(1, -1),
        "w3": p["w3"].astype(bf), "b3": p["b3"].reshape(1, -1),
        "wt": p["wt"].astype(bf), "bt": p["bt"].reshape(1, -1),
        "wa": p["wa"],            "ba": p["ba"].reshape(1, -1),   # tiny K=8: keep f32
        "w4": p["w4"].astype(bf), "b4": p["b4"].reshape(1, -1),
        # fc5 split across [features | goals], zero-padded to lane width
        "w5h": jnp.pad(p["w5"][:512], ((0, 0), (0, pad))).astype(bf),
        "w5g": jnp.pad(p["w5"][512:], ((0, 0), (0, pad))),
        "b5": jnp.pad(p["b5"], (0, pad)).reshape(1, -1),
    }


# ---------------------------------------------------------------------------
# Forward pass
# ---------------------------------------------------------------------------
@functools.partial(jax.jit, static_argnames=("num_actions",))
def da1qn_forward(params, frames_nchw, goals, num_actions=18):
    frames = jnp.transpose(frames_nchw, (0, 2, 3, 1)).astype(jnp.bfloat16)  # NHWC bf16
    B = frames.shape[0]
    g = goals.reshape(B, 8).astype(jnp.float32)

    # conv1 (8x8 stride 4) + ReLU
    # TODO(synk): im2col patches still round-trip HBM; forming them in-kernel would
    #             remove the expanded-copy traffic entirely (bf16 halves it for now).
    patches, (Ho, Wo) = im2col(frames, 8, 4)
    x = pallas_linear(patches, params["w1"], params["b1"], relu=True)
    x = x.reshape(B, Ho, Wo, 32)

    # conv2 (4x4 stride 2) + ReLU
    patches, (Ho, Wo) = im2col(x, 4, 2)
    x = pallas_linear(patches, params["w2"], params["b2"], relu=True)
    x = x.reshape(B, Ho, Wo, 64)

    # conv3 (3x3 stride 1) + ReLU fused with theta2 (1x1 conv)
    patches, (Ho, Wo) = im2col(x, 3, 1)
    P = Ho * Wo                                                          # 49
    x3, th = pallas_conv3_theta(patches, params["w3"], params["b3"],
                                params["wt"], params["bt"])
    x3 = x3.reshape(B, P, 64)
    th = th.reshape(B, P, 32)

    # fused tail: alpha(goals), goal attention over 49 positions, fc4, fc5
    # TODO(synk): self.attention_weights module-attribute side effect is not reproduced.
    q = pallas_attention_head(x3, th, g, params, num_actions)           # (B, num_actions)
    return q


if __name__ == "__main__":
    key = jax.random.PRNGKey(0)
    k_param, k_frames, k_goals = jax.random.split(key, 3)

    raw_params = init_params(k_param, in_channels=4, num_actions=18)
    params = prepare_params(raw_params)

    B = 2
    frames = jax.random.uniform(k_frames, (B, 4, 84, 84), jnp.float32)  # NCHW, Atari-style
    goals = jax.random.normal(k_goals, (B, 8), jnp.float32)

    q_values = da1qn_forward(params, frames, goals, num_actions=18)
    jax.block_until_ready(q_values)
    assert q_values.shape == (B, 18) and q_values.dtype == jnp.float32
    assert bool(jnp.all(jnp.isfinite(q_values)))
    print("KERNEL_OK")
</pallas_src>

<mosaic_0001>
module attributes {stable_mosaic.version = 11 : i64} {
  func.func @_linear_kernel(%arg0: i32, %arg1: memref<400x256xbf16, #tpu.memory_space<vmem>>, %arg2: memref<256x32xbf16, #tpu.memory_space<vmem>>, %arg3: memref<1x32xf32, #tpu.memory_space<vmem>>, %arg4: memref<400x32xbf16, #tpu.memory_space<vmem>>) attributes {dimension_semantics = [#tpu.dimension_semantics<parallel>], iteration_bounds = array<i64: 2>, scalar_prefetch = 0 : i64, scratch_operands = 0 : i64, tpu.core_type = #tpu.core_type<tc>, window_params = [{transform_indices = @transform_0, window_bounds = array<i64: 400, 256>}, {pipeline_mode = #tpu.pipeline_mode<synchronous>, transform_indices = @transform_1, window_bounds = array<i64: 256, 32>}, {pipeline_mode = #tpu.pipeline_mode<synchronous>, transform_indices = @transform_2, window_bounds = array<i64: 1, 32>}, {transform_indices = @transform_3, window_bounds = array<i64: 400, 32>}]} {
    %c0 = arith.constant 0 : index
    %c0_0 = arith.constant 0 : index
    %0 = vector.load %arg1[%c0, %c0_0] : memref<400x256xbf16, #tpu.memory_space<vmem>>, vector<400x256xbf16>
    %c0_1 = arith.constant 0 : index
    %c0_2 = arith.constant 0 : index
    %1 = vector.load %arg2[%c0_1, %c0_2] : memref<256x32xbf16, #tpu.memory_space<vmem>>, vector<256x32xbf16>
    %cst = arith.constant dense<0.000000e+00> : vector<400x32xf32>
    %2 = tpu.matmul %0, %1, %cst {dimension_numbers = #tpu.dot_dimension_numbers<[1], [0], [0], [1], [0, 0, 1, 1], [], []>} : vector<400x256xbf16>, vector<256x32xbf16>, vector<400x32xf32> -> vector<400x32xf32>
    %c0_3 = arith.constant 0 : index
    %c0_4 = arith.constant 0 : index
    %3 = vector.load %arg3[%c0_3, %c0_4] : memref<1x32xf32, #tpu.memory_space<vmem>>, vector<1x32xf32>
    %4 = vector.broadcast %3 : vector<1x32xf32> to vector<400x32xf32>
    %5 = arith.addf %2, %4 : vector<400x32xf32>
    %cst_5 = arith.constant 0.000000e+00 : f32
    %6 = vector.broadcast %cst_5 : f32 to vector<400x32xf32>
    %7 = arith.maximumf %5, %6 : vector<400x32xf32>
    %8 = arith.truncf %7 : vector<400x32xf32> to vector<400x32xbf16>
    %c0_6 = arith.constant 0 : index
    %c0_7 = arith.constant 0 : index
    %9 = vector.load %arg4[%c0_6, %c0_7] : memref<400x32xbf16, #tpu.memory_space<vmem>>, vector<400x32xbf16>
    tpu.vector_store %arg4[%c0_6, %c0_7], %8 {strides = array<i32>} : memref<400x32xbf16, #tpu.memory_space<vmem>>, vector<400x32xbf16>,
    return
  }
  func.func @transform_0(%arg0: i32) -> (i32, i32) {
    %c0_i32 = arith.constant 0 : i32
    %c0_i32_0 = arith.constant 0 : i32
    return %arg0, %c0_i32 : i32, i32
  }
  func.func @transform_1(%arg0: i32) -> (i32, i32) {
    %c0_i32 = arith.constant 0 : i32
    %c0_i32_0 = arith.constant 0 : i32
    %c0_i32_1 = arith.constant 0 : i32
    return %c0_i32, %c0_i32_0 : i32, i32
  }
  func.func @transform_2(%arg0: i32) -> (i32, i32) {
    %c0_i32 = arith.constant 0 : i32
    %c0_i32_0 = arith.constant 0 : i32
    %c0_i32_1 = arith.constant 0 : i32
    return %c0_i32, %c0_i32_0 : i32, i32
  }
  func.func @transform_3(%arg0: i32) -> (i32, i32) {
    %c0_i32 = arith.constant 0 : i32
    %c0_i32_0 = arith.constant 0 : i32
    return %arg0, %c0_i32 : i32, i32
  }
}

module attributes {stable_mosaic.version = 11 : i64} {
  func.func @_linear_kernel(%arg0: i32, %arg1: memref<168x512xbf16, #tpu.memory_space<vmem>>, %arg2: memref<512x64xbf16, #tpu.memory_space<vmem>>, %arg3: memref<1x64xf32, #tpu.memory_space<vmem>>, %arg4: memref<168x64xbf16, #tpu.memory_space<vmem>>) attributes {dimension_semantics = [#tpu.dimension_semantics<parallel>], iteration_bounds = array<i64: 1>, scalar_prefetch = 0 : i64, scratch_operands = 0 : i64, tpu.core_type = #tpu.core_type<tc>, window_params = [{transform_indices = @transform_0, window_bounds = array<i64: 168, 512>}, {pipeline_mode = #tpu.pipeline_mode<synchronous>, transform_indices = @transform_1, window_bounds = array<i64: 512, 64>}, {pipeline_mode = #tpu.pipeline_mode<synchronous>, transform_indices = @transform_2, window_bounds = array<i64: 1, 64>}, {transform_indices = @transform_3, window_bounds = array<i64: 168, 64>}]} {
    %c0 = arith.constant 0 : index
    %c0_0 = arith.constant 0 : index
    %0 = vector.load %arg1[%c0, %c0_0] : memref<168x512xbf16, #tpu.memory_space<vmem>>, vector<168x512xbf16>
    %c0_1 = arith.constant 0 : index
    %c0_2 = arith.constant 0 : index
    %1 = vector.load %arg2[%c0_1, %c0_2] : memref<512x64xbf16, #tpu.memory_space<vmem>>, vector<512x64xbf16>
    %cst = arith.constant dense<0.000000e+00> : vector<168x64xf32>
    %2 = tpu.matmul %0, %1, %cst {dimension_numbers = #tpu.dot_dimension_numbers<[1], [0], [0], [1], [0, 0, 1, 1], [], []>} : vector<168x512xbf16>, vector<512x64xbf16>, vector<168x64xf32> -> vector<168x64xf32>
    %c0_3 = arith.constant 0 : index
    %c0_4 = arith.constant 0 : index
    %3 = vector.load %arg3[%c0_3, %c0_4] : memref<1x64xf32, #tpu.memory_space<vmem>>, vector<1x64xf32>
    %4 = vector.broadcast %3 : vector<1x64xf32> to vector<168x64xf32>
    %5 = arith.addf %2, %4 : vector<168x64xf32>
    %cst_5 = arith.constant 0.000000e+00 : f32
    %6 = vector.broadcast %cst_5 : f32 to vector<168x64xf32>
    %7 = arith.maximumf %5, %6 : vector<168x64xf32>
    %8 = arith.truncf %7 : vector<168x64xf32> to vector<168x64xbf16>
    %c0_6 = arith.constant 0 : index
    %c0_7 = arith.constant 0 : index
    %9 = vector.load %arg4[%c0_6, %c0_7] : memref<168x64xbf16, #tpu.memory_space<vmem>>, vector<168x64xbf16>
    tpu.vector_store %arg4[%c0_6, %c0_7], %8 {strides = array<i32>} : memref<168x64xbf16, #tpu.memory_space<vmem>>, vector<168x64xbf16>,
    return
  }
  func.func @transform_0(%arg0: i32) -> (i32, i32) {
    %c0_i32 = arith.constant 0 : i32
    %c0_i32_0 = arith.constant 0 : i32
    return %arg0, %c0_i32 : i32, i32
  }
  func.func @transform_1(%arg0: i32) -> (i32, i32) {
    %c0_i32 = arith.constant 0 : i32
    %c0_i32_0 = arith.constant 0 : i32
    %c0_i32_1 = arith.constant 0 : i32
    return %c0_i32, %c0_i32_0 : i32, i32
  }
  func.func @transform_2(%arg0: i32) -> (i32, i32) {
    %c0_i32 = arith.constant 0 : i32
    %c0_i32_0 = arith.constant 0 : i32
    %c0_i32_1 = arith.constant 0 : i32
    return %c0_i32, %c0_i32_0 : i32, i32
  }
  func.func @transform_3(%arg0: i32) -> (i32, i32) {
    %c0_i32 = arith.constant 0 : i32
    %c0_i32_0 = arith.constant 0 : i32
    return %arg0, %c0_i32 : i32, i32
  }
}

module attributes {stable_mosaic.version = 11 : i64} {
  func.func @_conv3_theta_kernel(%arg0: i32, %arg1: memref<104x576xbf16, #tpu.memory_space<vmem>>, %arg2: memref<576x64xbf16, #tpu.memory_space<vmem>>, %arg3: memref<1x64xf32, #tpu.memory_space<vmem>>, %arg4: memref<64x32xbf16, #tpu.memory_space<vmem>>, %arg5: memref<1x32xf32, #tpu.memory_space<vmem>>, %arg6: memref<104x64xbf16, #tpu.memory_space<vmem>>, %arg7: memref<104x32xbf16, #tpu.memory_space<vmem>>) attributes {dimension_semantics = [#tpu.dimension_semantics<parallel>], iteration_bounds = array<i64: 1>, scalar_prefetch = 0 : i64, scratch_operands = 0 : i64, tpu.core_type = #tpu.core_type<tc>, window_params = [{transform_indices = @transform_0, window_bounds = array<i64: 104, 576>}, {pipeline_mode = #tpu.pipeline_mode<synchronous>, transform_indices = @transform_1, window_bounds = array<i64: 576, 64>}, {pipeline_mode = #tpu.pipeline_mode<synchronous>, transform_indices = @transform_2, window_bounds = array<i64: 1, 64>}, {pipeline_mode = #tpu.pipeline_mode<synchronous>, transform_indices = @transform_3, window_bounds = array<i64: 64, 32>}, {pipeline_mode = #tpu.pipeline_mode<synchronous>, transform_indices = @transform_4, window_bounds = array<i64: 1, 32>}, {transform_indices = @transform_5, window_bounds = array<i64: 104, 64>}, {transform_indices = @transform_6, window_bounds = array<i64: 104, 32>}]} {
    %c0 = arith.constant 0 : index
    %c0_0 = arith.constant 0 : index
    %0 = vector.load %arg1[%c0, %c0_0] : memref<104x576xbf16, #tpu.memory_space<vmem>>, vector<104x576xbf16>
    %c0_1 = arith.constant 0 : index
    %c0_2 = arith.constant 0 : index
    %1 = vector.load %arg2[%c0_1, %c0_2] : memref<576x64xbf16, #tpu.memory_space<vmem>>, vector<576x64xbf16>
    %cst = arith.constant dense<0.000000e+00> : vector<104x64xf32>
    %2 = tpu.matmul %0, %1, %cst {dimension_numbers = #tpu.dot_dimension_numbers<[1], [0], [0], [1], [0, 0, 1, 1], [], []>} : vector<104x576xbf16>, vector<576x64xbf16>, vector<104x64xf32> -> vector<104x64xf32>
    %c0_3 = arith.constant 0 : index
    %c0_4 = arith.constant 0 : index
    %3 = vector.load %arg3[%c0_3, %c0_4] : memref<1x64xf32, #tpu.memory_space<vmem>>, vector<1x64xf32>
    %4 = vector.broadcast %3 : vector<1x64xf32> to vector<104x64xf32>
    %5 = arith.addf %2, %4 : vector<104x64xf32>
    %cst_5 = arith.constant 0.000000e+00 : f32
    %6 = vector.broadcast %cst_5 : f32 to vector<104x64xf32>
    %7 = arith.maximumf %5, %6 : vector<104x64xf32>
    %8 = arith.truncf %7 : vector<104x64xf32> to vector<104x64xbf16>
    %c0_6 = arith.constant 0 : index
    %c0_7 = arith.constant 0 : index
    %9 = vector.load %arg4[%c0_6, %c0_7] : memref<64x32xbf16, #tpu.memory_space<vmem>>, vector<64x32xbf16>
    %cst_8 = arith.constant dense<0.000000e+00> : vector<104x32xf32>
    %10 = tpu.matmul %8, %9, %cst_8 {dimension_numbers = #tpu.dot_dimension_numbers<[1], [0], [0], [1], [0, 0, 1, 1], [], []>} : vector<104x64xbf16>, vector<64x32xbf16>, vector<104x32xf32> -> vector<104x32xf32>
    %c0_9 = arith.constant 0 : index
    %c0_10 = arith.constant 0 : index
    %11 = vector.load %arg5[%c0_9, %c0_10] : memref<1x32xf32, #tpu.memory_space<vmem>>, vector<1x32xf32>
    %12 = vector.broadcast %11 : vector<1x32xf32> to vector<104x32xf32>
    %13 = arith.addf %10, %12 : vector<104x32xf32>
    %14 = arith.truncf %7 : vector<104x64xf32> to vector<104x64xbf16>
    %c0_11 = arith.constant 0 : index
    %c0_12 = arith.constant 0 : index
    %15 = vector.load %arg6[%c0_11, %c0_12] : memref<104x64xbf16, #tpu.memory_space<vmem>>, vector<104x64xbf16>
    tpu.vector_store %arg6[%c0_11, %c0_12], %14 {strides = array<i32>} : memref<104x64xbf16, #tpu.memory_space<vmem>>, vector<104x64xbf16>,
    %16 = arith.truncf %13 : vector<104x32xf32> to vector<104x32xbf16>
    %c0_13 = arith.constant 0 : index
    %c0_14 = arith.constant 0 : index
    %17 = vector.load %arg7[%c0_13, %c0_14] : memref<104x32xbf16, #tpu.memory_space<vmem>>, vector<104x32xbf16>
    tpu.vector_store %arg7[%c0_13, %c0_14], %16 {strides = array<i32>} : memref<104x32xbf16, #tpu.memory_space<vmem>>, vector<104x32xbf16>,
    return
  }
  func.func @transform_0(%arg0: i32) -> (i32, i32) {
    %c0_i32 = arith.constant 0 : i32
    %c0_i32_0 = arith.constant 0 : i32
    return %arg0, %c0_i32 : i32, i32
  }
  func.func @transform_1(%arg0: i32) -> (i32, i32) {
    %c0_i32 = arith.constant 0 : i32
    %c0_i32_0 = arith.constant 0 : i32
    %c0_i32_1 = arith.constant 0 : i32
    return %c0_i32, %c0_i32_0 : i32, i32
  }
  func.func @transform_2(%arg0: i32) -> (i32, i32) {
    %c0_i32 = arith.constant 0 : i32
    %c0_i32_0 = arith.constant 0 : i32
    %c0_i32_1 = arith.constant 0 : i32
    return %c0_i32, %c0_i32_0 : i32, i32
  }
  func.func @transform_3(%arg0: i32) -> (i32, i32) {
    %c0_i32 = arith.constant 0 : i32
    %c0_i32_0 = arith.constant 0 : i32
    %c0_i32_1 = arith.constant 0 : i32
    return %c0_i32, %c0_i32_0 : i32, i32
  }
  func.func @transform_4(%arg0: i32) -> (i32, i32) {
    %c0_i32 = arith.constant 0 : i32
    %c0_i32_0 = arith.constant 0 : i32
    %c0_i32_1 = arith.constant 0 : i32
    return %c0_i32, %c0_i32_0 : i32, i32
  }
  func.func @transform_5(%arg0: i32) -> (i32, i32) {
    %c0_i32 = arith.constant 0 : i32
    %c0_i32_0 = arith.constant 0 : i32
    return %arg0, %c0_i32 : i32, i32
  }
  func.func @transform_6(%arg0: i32) -> (i32, i32) {
    %c0_i32 = arith.constant 0 : i32
    %c0_i32_0 = arith.constant 0 : i32
    return %arg0, %c0_i32 : i32, i32
  }
}

module attributes {stable_mosaic.version = 11 : i64} {
  func.func @_attn_head_kernel(%arg0: i32, %arg1: memref<2x49x64xbf16, #tpu.memory_space<vmem>>, %arg2: memref<2x49x32xbf16, #tpu.memory_space<vmem>>, %arg3: memref<2x8xf32, #tpu.memory_space<vmem>>, %arg4: memref<8x32xf32, #tpu.memory_space<vmem>>, %arg5: memref<1x32xf32, #tpu.memory_space<vmem>>, %arg6: memref<64x512xbf16, #tpu.memory_space<vmem>>, %arg7: memref<1x512xf32, #tpu.memory_space<vmem>>, %arg8: memref<512x128xbf16, #tpu.memory_space<vmem>>, %arg9: memref<8x128xf32, #tpu.memory_space<vmem>>, %arg10: memref<1x128xf32, #tpu.memory_space<vmem>>, %arg11: memref<2x128xf32, #tpu.memory_space<vmem>>) attributes {dimension_semantics = [#tpu.dimension_semantics<parallel>], iteration_bounds = array<i64: 1>, scalar_prefetch = 0 : i64, scratch_operands = 0 : i64, tpu.core_type = #tpu.core_type<tc>, window_params = [{transform_indices = @transform_0, window_bounds = array<i64: 2, 49, 64>}, {transform_indices = @transform_1, window_bounds = array<i64: 2, 49, 32>}, {transform_indices = @transform_2, window_bounds = array<i64: 2, 8>}, {pipeline_mode = #tpu.pipeline_mode<synchronous>, transform_indices = @transform_3, window_bounds = array<i64: 8, 32>}, {pipeline_mode = #tpu.pipeline_mode<synchronous>, transform_indices = @transform_4, window_bounds = array<i64: 1, 32>}, {pipeline_mode = #tpu.pipeline_mode<synchronous>, transform_indices = @transform_5, window_bounds = array<i64: 64, 512>}, {pipeline_mode = #tpu.pipeline_mode<synchronous>, transform_indices = @transform_6, window_bounds = array<i64: 1, 512>}, {pipeline_mode = #tpu.pipeline_mode<synchronous>, transform_indices = @transform_7, window_bounds = array<i64: 512, 128>}, {pipeline_mode = #tpu.pipeline_mode<synchronous>, transform_indices = @transform_8, window_bounds = array<i64: 8, 128>}, {pipeline_mode = #tpu.pipeline_mode<synchronous>, transform_indices = @transform_9, window_bounds = array<i64: 1, 128>}, {transform_indices = @transform_10, window_bounds = array<i64: 2, 128>}]} {
    %c0 = arith.constant 0 : index
    %c0_0 = arith.constant 0 : index
    %0 = vector.load %arg3[%c0, %c0_0] : memref<2x8xf32, #tpu.memory_space<vmem>>, vector<2x8xf32>
    %c0_1 = arith.constant 0 : index
    %c0_2 = arith.constant 0 : index
    %1 = vector.load %arg4[%c0_1, %c0_2] : memref<8x32xf32, #tpu.memory_space<vmem>>, vector<8x32xf32>
    %cst = arith.constant dense<0.000000e+00> : vector<2x32xf32>
    %2 = tpu.matmul %0, %1, %cst {dimension_numbers = #tpu.dot_dimension_numbers<[1], [0], [0], [1], [0, 0, 1, 1], [], []>} : vector<2x8xf32>, vector<8x32xf32>, vector<2x32xf32> -> vector<2x32xf32>
    %c0_3 = arith.constant 0 : index
    %c0_4 = arith.constant 0 : index
    %3 = vector.load %arg5[%c0_3, %c0_4] : memref<1x32xf32, #tpu.memory_space<vmem>>, vector<1x32xf32>
    %4 = vector.broadcast %3 : vector<1x32xf32> to vector<2x32xf32>
    %5 = arith.addf %2, %4 : vector<2x32xf32>
    %c0_5 = arith.constant 0 : index
    %c0_6 = arith.constant 0 : index
    %c0_7 = arith.constant 0 : index
    %6 = vector.load %arg2[%c0_5, %c0_6, %c0_7] : memref<2x49x32xbf16, #tpu.memory_space<vmem>>, vector<2x49x32xbf16>
    %7 = arith.extf %6 : vector<2x49x32xbf16> to vector<2x49x32xf32>
    %8 = vector.shape_cast %5 : vector<2x32xf32> to vector<2x1x32xf32>
    %9 = vector.broadcast %8 : vector<2x1x32xf32> to vector<2x49x32xf32>
    %10 = arith.mulf %7, %9 : vector<2x49x32xf32>
    %cst_8 = arith.constant dense<0.000000e+00> : vector<2x49xf32>
    %11 = vector.multi_reduction <add>, %10, %cst_8 [2] : vector<2x49x32xf32> to vector<2x49xf32>
    %cst_9 = arith.constant dense<0xFF800000> : vector<2xf32>
    %12 = vector.multi_reduction <maximumf>, %11, %cst_9 [1] : vector<2x49xf32> to vector<2xf32>
    %13 = vector.shape_cast %12 : vector<2xf32> to vector<2x1xf32>
    %14 = vector.broadcast %13 : vector<2x1xf32> to vector<2x49xf32>
    %15 = arith.subf %11, %14 : vector<2x49xf32>
    %16 = math.exp %15 : vector<2x49xf32>
    %cst_10 = arith.constant dense<0.000000e+00> : vector<2xf32>
    %17 = vector.multi_reduction <add>, %16, %cst_10 [1] : vector<2x49xf32> to vector<2xf32>
    %18 = vector.shape_cast %17 : vector<2xf32> to vector<2x1xf32>
    %19 = tpu.reciprocal %18 {approx = true} : vector<2x1xf32> -> vector<2x1xf32>
    %20 = vector.broadcast %19 : vector<2x1xf32> to vector<2x49xf32>
    %21 = arith.mulf %16, %20 : vector<2x49xf32>
    %c0_11 = arith.constant 0 : index
    %c0_12 = arith.constant 0 : index
    %c0_13 = arith.constant 0 : index
    %22 = vector.load %arg1[%c0_11, %c0_12, %c0_13] : memref<2x49x64xbf16, #tpu.memory_space<vmem>>, vector<2x49x64xbf16>
    %23 = arith.extf %22 : vector<2x49x64xbf16> to vector<2x49x64xf32>
    %24 = vector.shape_cast %21 : vector<2x49xf32> to vector<2x49x1xf32>
    %25 = vector.broadcast %24 : vector<2x49x1xf32> to vector<2x49x64xf32>
    %26 = arith.mulf %23, %25 : vector<2x49x64xf32>
    %cst_14 = arith.constant dense<0.000000e+00> : vector<2x64xf32>
    %27 = vector.multi_reduction <add>, %26, %cst_14 [1] : vector<2x49x64xf32> to vector<2x64xf32>
    %28 = arith.truncf %27 : vector<2x64xf32> to vector<2x64xbf16>
    %c0_15 = arith.constant 0 : index
    %c0_16 = arith.constant 0 : index
    %29 = vector.load %arg6[%c0_15, %c0_16] : memref<64x512xbf16, #tpu.memory_space<vmem>>, vector<64x512xbf16>
    %cst_17 = arith.constant dense<0.000000e+00> : vector<2x512xf32>
    %30 = tpu.matmul %28, %29, %cst_17 {dimension_numbers = #tpu.dot_dimension_numbers<[1], [0], [0], [1], [0, 0, 1, 1], [], []>} : vector<2x64xbf16>, vector<64x512xbf16>, vector<2x512xf32> -> vector<2x512xf32>
    %c0_18 = arith.constant 0 : index
    %c0_19 = arith.constant 0 : index
    %31 = vector.load %arg7[%c0_18, %c0_19] : memref<1x512xf32, #tpu.memory_space<vmem>>, vector<1x512xf32>
    %32 = vector.broadcast %31 : vector<1x512xf32> to vector<2x512xf32>
    %33 = arith.addf %30, %32 : vector<2x512xf32>
    %cst_20 = arith.constant 0.000000e+00 : f32
    %34 = vector.broadcast %cst_20 : f32 to vector<2x512xf32>
    %35 = arith.maximumf %33, %34 : vector<2x512xf32>
    %36 = arith.truncf %35 : vector<2x512xf32> to vector<2x512xbf16>
    %c0_21 = arith.constant 0 : index
    %c0_22 = arith.constant 0 : index
    %37 = vector.load %arg8[%c0_21, %c0_22] : memref<512x128xbf16, #tpu.memory_space<vmem>>, vector<512x128xbf16>
    %cst_23 = arith.constant dense<0.000000e+00> : vector<2x128xf32>
    %38 = tpu.matmul %36, %37, %cst_23 {dimension_numbers = #tpu.dot_dimension_numbers<[1], [0], [0], [1], [0, 0, 1, 1], [], []>} : vector<2x512xbf16>, vector<512x128xbf16>, vector<2x128xf32> -> vector<2x128xf32>
    %c0_24 = arith.constant 0 : index
    %c0_25 = arith.constant 0 : index
    %39 = vector.load %arg9[%c0_24, %c0_25] : memref<8x128xf32, #tpu.memory_space<vmem>>, vector<8x128xf32>
    %cst_26 = arith.constant dense<0.000000e+00> : vector<2x128xf32>
    %40 = tpu.matmul %0, %39, %cst_26 {dimension_numbers = #tpu.dot_dimension_numbers<[1], [0], [0], [1], [0, 0, 1, 1], [], []>} : vector<2x8xf32>, vector<8x128xf32>, vector<2x128xf32> -> vector<2x128xf32>
    %41 = arith.addf %38, %40 : vector<2x128xf32>
    %c0_27 = arith.constant 0 : index
    %c0_28 = arith.constant 0 : index
    %42 = vector.load %arg10[%c0_27, %c0_28] : memref<1x128xf32, #tpu.memory_space<vmem>>, vector<1x128xf32>
    %43 = vector.broadcast %42 : vector<1x128xf32> to vector<2x128xf32>
    %44 = arith.addf %41, %43 : vector<2x128xf32>
    %c0_29 = arith.constant 0 : index
    %c0_30 = arith.constant 0 : index
    %45 = vector.load %arg11[%c0_29, %c0_30] : memref<2x128xf32, #tpu.memory_space<vmem>>, vector<2x128xf32>
    tpu.vector_store %arg11[%c0_29, %c0_30], %44 {strides = array<i32>} : memref<2x128xf32, #tpu.memory_space<vmem>>, vector<2x128xf32>,
    return
  }
  func.func @transform_0(%arg0: i32) -> (i32, i32, i32) {
    %c0_i32 = arith.constant 0 : i32
    %c0_i32_0 = arith.constant 0 : i32
    %c0_i32_1 = arith.constant 0 : i32
    return %arg0, %c0_i32, %c0_i32_0 : i32, i32, i32
  }
  func.func @transform_1(%arg0: i32) -> (i32, i32, i32) {
    %c0_i32 = arith.constant 0 : i32
    %c0_i32_0 = arith.constant 0 : i32
    %c0_i32_1 = arith.constant 0 : i32
    return %arg0, %c0_i32, %c0_i32_0 : i32, i32, i32
  }
  func.func @transform_2(%arg0: i32) -> (i32, i32) {
    %c0_i32 = arith.constant 0 : i32
    %c0_i32_0 = arith.constant 0 : i32
    return %arg0, %c0_i32 : i32, i32
  }
  func.func @transform_3(%arg0: i32) -> (i32, i32) {
    %c0_i32 = arith.constant 0 : i32
    %c0_i32_0 = arith.constant 0 : i32
    %c0_i32_1 = arith.constant 0 : i32
    return %c0_i32, %c0_i32_0 : i32, i32
  }
  func.func @transform_4(%arg0: i32) -> (i32, i32) {
    %c0_i32 = arith.constant 0 : i32
    %c0_i32_0 = arith.constant 0 : i32
    %c0_i32_1 = arith.constant 0 : i32
    return %c0_i32, %c0_i32_0 : i32, i32
  }
  func.func @transform_5(%arg0: i32) -> (i32, i32) {
    %c0_i32 = arith.constant 0 : i32
    %c0_i32_0 = arith.constant 0 : i32
    %c0_i32_1 = arith.constant 0 : i32
    return %c0_i32, %c0_i32_0 : i32, i32
  }
  func.func @transform_6(%arg0: i32) -> (i32, i32) {
    %c0_i32 = arith.constant 0 : i32
    %c0_i32_0 = arith.constant 0 : i32
    %c0_i32_1 = arith.constant 0 : i32
    return %c0_i32, %c0_i32_0 : i32, i32
  }
  func.func @transform_7(%arg0: i32) -> (i32, i32) {
    %c0_i32 = arith.constant 0 : i32
    %c0_i32_0 = arith.constant 0 : i32
    %c0_i32_1 = arith.constant 0 : i32
    return %c0_i32, %c0_i32_0 : i32, i32
  }
  func.func @transform_8(%arg0: i32) -> (i32, i32) {
    %c0_i32 = arith.constant 0 : i32
    %c0_i32_0 = arith.constant 0 : i32
    %c0_i32_1 = arith.constant 0 : i32
    return %c0_i32, %c0_i32_0 : i32, i32
  }
  func.func @transform_9(%arg0: i32) -> (i32, i32) {
    %c0_i32 = arith.constant 0 : i32
    %c0_i32_0 = arith.constant 0 : i32
    %c0_i32_1 = arith.constant 0 : i32
    return %c0_i32, %c0_i32_0 : i32, i32
  }
  func.func @transform_10(%arg0: i32) -> (i32, i32) {
    %c0_i32 = arith.constant 0 : i32
    %c0_i32_0 = arith.constant 0 : i32
    return %arg0, %c0_i32 : i32, i32
  }
}

</mosaic_0001>

<llo_original>
// kernel: da1qn_forward.4
$region0: #{da1qn_forward.4}
  #allocation0 [shape = 'u32[]', space=smem, size = 0x4, offset = 0x4, fixed_abs, tag = 'smem constant byte address 0x4 - core index']
  #allocation1 [shape = 'u32[144,128]{1,0:T(1,128)}', space=vmem, size = 0x12000, scoped, tag = 'internal scratch']
  %s0 = inlined_call_operand.vmem [shape: bf16[800,256], index: 0, kind: input, shape index: {}]
  %s1 = inlined_call_operand.vmem [shape: bf16[256,32], index: 1, kind: input, shape index: {}]
  %s2 = inlined_call_operand.vmem [shape: f32[1,32], index: 2, kind: input, shape index: {}]
  %s3 = inlined_call_operand.vmem [shape: bf16[800,32], index: 3, kind: output, shape index: {}]
  %s4 = sld [smem:[#allocation0]]
  $region45: #{da1qn_forward.4} parent=0
    _
  %s6 = ssub.s32 1, %s4
  %s7 = scalar_select 0, %s6, %s4
  loop: start=0, step=1, limit=4
  $region2: #{da1qn_forward.4} parent=0 // loop_pre_header
    _
  $region3: #{da1qn_forward.4} parent=0 // loop_header
    %s9 = sphi 0, %s13
    %p10 = scmp.ge.s32.totalorder %s9, 4
    %s19 = sphi 0, %s21
    %s22 = sphi 0, %s19
    %s23 = sphi 0, %s22
    %s39 = sphi 0, %s23
    %s43 = sphi 0, %s43
    %s45 = sphi 0, %s43
    %s46 = sphi 0, %s45
    %s60 = sphi 0, %s46
    %s64 = sphi 0, %s64
    %s66 = sphi 0, %s64
    %s67 = sphi 0, %s66
    %s81 = sphi 0, %s67
    %s87 = sphi 0, %s89
    %s90 = sphi 0, %s87
    %s91 = sphi 0, %s90
    %s107 = sphi 0, %s91
  $region4: #{da1qn_forward.4} parent=0 // loop_header_branch
    %12 = sbr.rel (%p10) target = $region8
  $region5: #{da1qn_forward.4} parent=0 // loop_body
    %s14 = ssub.s32 %s9, 1
    %s15 = ssub.s32 %s9, 2
    %s16 = sadd.s32 %s9, 1
    %s17 = ssub.s32 %s9, %s16
    %p18 = scmp.eq.s32.totalorder %s17, 0
    %s20 = sadd.s32 %s19, 1
    %s21 = scalar_select %p18, %s19, %s20
    %p24 = pneg %p18
    %p25 = scmp.eq.s32.totalorder %s9, 1
    %p26 = por %p24, %p25
    %p27 = scmp.ne.s32.totalorder %s19, %s22
    %p28 = scmp.eq.s32.totalorder %s9, 0
    %p29 = por %p27, %p28
    %p30 = scmp.ne.s32.totalorder %s19, %s22
    %p31 = scmp.eq.s32.totalorder %s14, 1
    %p32 = por %p30, %p31
    %p33 = scmp.ne.s32.totalorder %s22, %s23
    %p34 = scmp.eq.s32.totalorder %s14, 0
    %p35 = por %p33, %p34
    %p36 = scmp.ne.s32.totalorder %s22, %s23
    %p37 = scmp.eq.s32.totalorder %s15, 1
    %p38 = por %p36, %p37
    %p40 = scmp.ne.s32.totalorder %s23, %s39
    %p41 = scmp.eq.s32.totalorder %s15, 0
    %p42 = por %p40, %p41
    %s44 = sadd.s32 %s43, 1
    %p47 = scmp.eq.s32.totalorder %s9, 1
    %p48 = scmp.ne.s32.totalorder %s43, %s45
    %p49 = scmp.eq.s32.totalorder %s9, 0
    %p50 = por %p48, %p49
    %p51 = scmp.ne.s32.totalorder %s43, %s45
    %p52 = scmp.eq.s32.totalorder %s14, 1
    %p53 = por %p51, %p52
    %p54 = scmp.ne.s32.totalorder %s45, %s46
    %p55 = scmp.eq.s32.totalorder %s14, 0
    %p56 = por %p54, %p55
    %p57 = scmp.ne.s32.totalorder %s45, %s46
    %p58 = scmp.eq.s32.totalorder %s15, 1
    %p59 = por %p57, %p58
    %p61 = scmp.ne.s32.totalorder %s46, %s60
    %p62 = scmp.eq.s32.totalorder %s15, 0
    %p63 = por %p61, %p62
    %s65 = sadd.s32 %s64, 1
    %p68 = scmp.eq.s32.totalorder %s9, 1
    %p69 = scmp.ne.s32.totalorder %s64, %s66
    %p70 = scmp.eq.s32.totalorder %s9, 0
    %p71 = por %p69, %p70
    %p72 = scmp.ne.s32.totalorder %s64, %s66
    %p73 = scmp.eq.s32.totalorder %s14, 1
    %p74 = por %p72, %p73
    %p75 = scmp.ne.s32.totalorder %s66, %s67
    %p76 = scmp.eq.s32.totalorder %s14, 0
    %p77 = por %p75, %p76
    %p78 = scmp.ne.s32.totalorder %s66, %s67
    %p79 = scmp.eq.s32.totalorder %s15, 1
    %p80 = por %p78, %p79
    %p82 = scmp.ne.s32.totalorder %s67, %s81
    %p83 = scmp.eq.s32.totalorder %s15, 0
    %p84 = por %p82, %p83
    %s85 = ssub.s32 %s9, %s16
    %p86 = scmp.eq.s32.totalorder %s85, 0
    %s88 = sadd.s32 %s87, 1
    %s89 = scalar_select %p86, %s87, %s88
    %p92 = pneg %p86
    %p93 = scmp.eq.s32.totalorder %s9, 1
    %p94 = por %p92, %p93
    %p95 = scmp.ne.s32.totalorder %s87, %s90
    %p96 = scmp.eq.s32.totalorder %s9, 0
    %p97 = por %p95, %p96
    %p98 = scmp.ne.s32.totalorder %s87, %s90
    %p99 = scmp.eq.s32.totalorder %s14, 1
    %p100 = por %p98, %p99
    %p101 = scmp.ne.s32.totalorder %s90, %s91
    %p102 = scmp.eq.s32.totalorder %s14, 0
    %p103 = por %p101, %p102
    %p104 = scmp.ne.s32.totalorder %s90, %s91
    %p105 = scmp.eq.s32.totalorder %s15, 1
    %p106 = por %p104, %p105
    %p108 = scmp.ne.s32.totalorder %s91, %s107
    %p109 = scmp.eq.s32.totalorder %s15, 0
    %p110 = por %p108, %p109
    %p111 = scmp.le.s32.totalorder 1, %s9
    %p112 = scmp.lt.s32.totalorder %s9, 3
    %p113 = pnand %p111, %p112
    %p114 = pneg %p113
    // Predicated region
    $region9: #{da1qn_forward.4} parent=5 // pred_check
      _
    $region10: #{da1qn_forward.4} parent=5 // pred_check_branch
      %116 = sbr.rel (%p113) target = $region12
    $region11: #{da1qn_forward.4} parent=5 // pred_region
      %s117 = ssub.s32 %s9, 1
      // Predicated region
      $region13: #{da1qn_forward.4} parent=11 // pred_check
        %p118 = pneg %p56
      $region14: #{da1qn_forward.4} parent=11 // pred_check_branch
        %120 = sbr.rel (%p118) target = $region16
      $region15: #{da1qn_forward.4} parent=11 // pred_region
        _
      $region16: #{da1qn_forward.4} parent=11 // pred_fallthru
        _
      // Predicated region
      $region17: #{da1qn_forward.4} parent=11 // pred_check
        %p121 = pneg %p77
      $region18: #{da1qn_forward.4} parent=11 // pred_check_branch
        %123 = sbr.rel (%p121) target = $region20
      $region19: #{da1qn_forward.4} parent=11 // pred_region
        _
      $region20: #{da1qn_forward.4} parent=11 // pred_fallthru
        _
    $region12: #{da1qn_forward.4} parent=5 // pred_fallthru
      _
    %p124 = scmp.lt.s32.totalorder %s9, 2
    // Predicated region
    $region21: #{da1qn_forward.4} parent=5 // pred_check
      %p125 = pneg %p124
    $region22: #{da1qn_forward.4} parent=5 // pred_check_branch
      %127 = sbr.rel (%p125) target = $region24
    $region23: #{da1qn_forward.4} parent=5 // pred_region
      // Predicated region
      $region25: #{da1qn_forward.4} parent=23 // pred_check
        %p128 = pneg %p29
      $region26: #{da1qn_forward.4} parent=23 // pred_check_branch
        %130 = sbr.rel (%p128) target = $region28
      $region27: #{da1qn_forward.4} parent=23 // pred_region
        %s131 = smul.u32 50, %s9
        %p132 = scmp.lt.s32.totalorder %s131, 99
        %s133 = scalar_select %p132, %s131, 99
        %s134 = smul.addr %s133, 2
        %s135 = smul.addr %s134, 4
        %s136 = scalar_lea.vmem %s0, %s135
        %s137 = smul.u32 50, %s9
      $region28: #{da1qn_forward.4} parent=23 // pred_fallthru
        _
    $region24: #{da1qn_forward.4} parent=5 // pred_fallthru
      _
    %p138 = scmp.le.s32.totalorder 1, %s9
    %p139 = scmp.lt.s32.totalorder %s9, 3
    %p140 = pnand %p138, %p139
    %p141 = pneg %p140
    // Predicated region
    $region29: #{da1qn_forward.4} parent=5 // pred_check
      _
    $region30: #{da1qn_forward.4} parent=5 // pred_check_branch
      %143 = sbr.rel (%p140) target = $region32
    $region31: #{da1qn_forward.4} parent=5 // pred_region
      %s144 = ssub.s32 %s9, 1
      %s145 = smul.u32 50, %s14
      %p146 = scmp.lt.s32.totalorder %s145, 99
      %s147 = scalar_select %p146, %s145, 99
      %s148 = smul.addr %s147, 2
      %s149 = smul.addr %s148, 4
      %s150 = scalar_lea.vmem %s0, %s149
      %p151 = pneg %p35
      %p152 = pneg %p32
      %p153 = pneg %p56
      %p154 = pneg %p53
      %p155 = pneg %p77
      %p156 = pneg %p74
      %p157 = pneg %p103
      %p158 = pneg %p100
      %s159 = smul.u32 50, %s14
      %p160 = scmp.lt.s32.totalorder %s159, 99
      %s161 = scalar_select %p160, %s159, 99
      %s162 = smul.addr %s161, 4
      %s163 = scalar_lea.vmem %s3, %s162
      %s164 = smul.u32 50, %s14
      %p165 = scmp.lt.s32.totalorder %s164, 99
      %s166 = scalar_select %p165, %s164, 99
      %s167 = smul.addr %s166, 2
      %s168 = smul.addr %s167, 4
      %s169 = scalar_lea.vmem %s0, %s168
      %s170 = smul.u32 50, %s14
      %s171 = smul.u32 50, %s14
      %p172 = scmp.lt.s32.totalorder %s171, 99
      %s173 = scalar_select %p172, %s171, 99
      %s174 = smul.addr %s173, 4
      %s175 = scalar_lea.vmem %s3, %s174
      %s176 = smul.u32 50, %s14
      %v178 = vld [vmem:[%s169] sm:$0xff]
      %v179 = vld [vmem:[%s169 + $0x8] sm:$0xff]
      %v180 = vld [vmem:[%s169 + $0x10] sm:$0xff]
      %v181 = vld [vmem:[%s169 + $0x18] sm:$0xff]
      %v182 = vld [vmem:[%s169 + $0x20] sm:$0xff]
      %v183 = vld [vmem:[%s169 + $0x28] sm:$0xff]
      %v184 = vld [vmem:[%s169 + $0x30] sm:$0xff]
      %v185 = vld [vmem:[%s169 + $0x38] sm:$0xff]
      %v186 = vld [vmem:[%s169 + $0x40] sm:$0xff]
      %v187 = vld [vmem:[%s169 + $0x48] sm:$0xff]
      %v188 = vld [vmem:[%s169 + $0x50] sm:$0xff]
      %v189 = vld [vmem:[%s169 + $0x58] sm:$0xff]
      %v190 = vld [vmem:[%s169 + $0x60] sm:$0xff]
      %v191 = vld [vmem:[%s169 + $0x68] sm:$0xff]
      %v192 = vld [vmem:[%s169 + $0x70] sm:$0xff]
      %v193 = vld [vmem:[%s169 + $0x78] sm:$0xff]
      %v194 = vld [vmem:[%s169 + $0x80] sm:$0xff]
      %v195 = vld [vmem:[%s169 + $0x88] sm:$0xff]
      %v196 = vld [vmem:[%s169 + $0x90] sm:$0xff]
      %v197 = vld [vmem:[%s169 + $0x98] sm:$0xff]
      %v198 = vld [vmem:[%s169 + $0xa0] sm:$0xff]
      %v199 = vld [vmem:[%s169 + $0xa8] sm:$0xff]
      %v200 = vld [vmem:[%s169 + $0xb0] sm:$0xff]
      %v201 = vld [vmem:[%s169 + $0xb8] sm:$0xff]
      %v202 = vld [vmem:[%s169 + $0xc0] sm:$0xff]
      %v203 = vld [vmem:[%s169 + $0xc8] sm:$0xff]
      %v204 = vld [vmem:[%s169 + $0xd0] sm:$0xff]
      %v205 = vld [vmem:[%s169 + $0xd8] sm:$0xff]
      %v206 = vld [vmem:[%s169 + $0xe0] sm:$0xff]
      %v207 = vld [vmem:[%s169 + $0xe8] sm:$0xff]
      %v208 = vld [vmem:[%s169 + $0xf0] sm:$0xff]
      %v209 = vld [vmem:[%s169 + $0xf8] sm:$0xff]
      %v210 = vld [vmem:[%s169 + $0x100] sm:$0xff]
      %v211 = vld [vmem:[%s169 + $0x108] sm:$0xff]
      %v212 = vld [vmem:[%s169 + $0x110] sm:$0xff]
      %v213 = vld [vmem:[%s169 + $0x118] sm:$0xff]
      %v214 = vld [vmem:[%s169 + $0x120] sm:$0xff]
      %v215 = vld [vmem:[%s169 + $0x128] sm:$0xff]
      %v216 = vld [vmem:[%s169 + $0x130] sm:$0xff]
      %v217 = vld [vmem:[%s169 + $0x138] sm:$0xff]
      %v218 = vld [vmem:[%s169 + $0x140] sm:$0xff]
      %v219 = vld [vmem:[%s169 + $0x148] sm:$0xff]
      %v220 = vld [vmem:[%s169 + $0x150] sm:$0xff]
      %v221 = vld [vmem:[%s169 + $0x158] sm:$0xff]
      %v222 = vld [vmem:[%s169 + $0x160] sm:$0xff]
      %v223 = vld [vmem:[%s169 + $0x168] sm:$0xff]
      %v224 = vld [vmem:[%s169 + $0x170] sm:$0xff]
      %v225 = vld [vmem:[%s169 + $0x178] sm:$0xff]
      %v226 = vld [vmem:[%s169 + $0x180] sm:$0xff]
      %v227 = vld [vmem:[%s169 + $0x188] sm:$0xff]
      %v228 = vld [vmem:[%s1] sm:$0xf]
      %v229 = vld [vmem:[%s1 + $0x4] sm:$0xf]
      %v230 = vld [vmem:[%s1 + $0x8] sm:$0xf]
      %v231 = vld [vmem:[%s1 + $0xc] sm:$0xf]
      %v232 = vld [vmem:[%s1 + $0x10] sm:$0xf]
      %v233 = vld [vmem:[%s1 + $0x14] sm:$0xf]
      %v234 = vld [vmem:[%s1 + $0x18] sm:$0xf]
      %v235 = vld [vmem:[%s1 + $0x1c] sm:$0xf]
      %v236 = vld [vmem:[%s1 + $0x20] sm:$0xf]
      %v237 = vld [vmem:[%s1 + $0x24] sm:$0xf]
      %v238 = vld [vmem:[%s1 + $0x28] sm:$0xf]
      %v239 = vld [vmem:[%s1 + $0x2c] sm:$0xf]
      %v240 = vld [vmem:[%s1 + $0x30] sm:$0xf]
      %v241 = vld [vmem:[%s1 + $0x34] sm:$0xf]
      %v242 = vld [vmem:[%s1 + $0x38] sm:$0xf]
      %v243 = vld [vmem:[%s1 + $0x3c] sm:$0xf]
      %v244 = vld [vmem:[%s1 + $0x40] sm:$0xf]
      %v245 = vld [vmem:[%s1 + $0x44] sm:$0xf]
      %v246 = vld [vmem:[%s1 + $0x48] sm:$0xf]
      %v247 = vld [vmem:[%s1 + $0x4c] sm:$0xf]
      %v248 = vld [vmem:[%s1 + $0x50] sm:$0xf]
      %v249 = vld [vmem:[%s1 + $0x54] sm:$0xf]
      %v250 = vld [vmem:[%s1 + $0x58] sm:$0xf]
      %v251 = vld [vmem:[%s1 + $0x5c] sm:$0xf]
      %v252 = vld [vmem:[%s1 + $0x60] sm:$0xf]
      %v253 = vld [vmem:[%s1 + $0x64] sm:$0xf]
      %v254 = vld [vmem:[%s1 + $0x68] sm:$0xf]
      %v255 = vld [vmem:[%s1 + $0x6c] sm:$0xf]
      %v256 = vld [vmem:[%s1 + $0x70] sm:$0xf]
      %v257 = vld [vmem:[%s1 + $0x74] sm:$0xf]
      %v258 = vld [vmem:[%s1 + $0x78] sm:$0xf]
      %v259 = vld [vmem:[%s1 + $0x7c] sm:$0xf]
      %v260 = vld [vmem:[%s2] sm:$0x1]
      %v262 = vlaneseq
      %v263 = vshrl.u32 %v262, 7
      %v264 = vsub.s32 0, %v263
      %v265 = vrot.slane %v260, %v264
      %v317 = vunpack.c.l.b16 %v178
      %v318 = vunpack.c.h.b16 %v178
      %v319 = vunpack.c.l.b16 %v179
      %v320 = vunpack.c.h.b16 %v179
      %v321 = vunpack.c.l.b16 %v180
      %v322 = vunpack.c.h.b16 %v180
      %v323 = vunpack.c.l.b16 %v181
      %v324 = vunpack.c.h.b16 %v181
      %v325 = vunpack.c.l.b16 %v182
      %v326 = vunpack.c.h.b16 %v182
      %v327 = vunpack.c.l.b16 %v183
      %v328 = vunpack.c.h.b16 %v183
      %v329 = vunpack.c.l.b16 %v184
      %v330 = vunpack.c.h.b16 %v184
      %v331 = vunpack.c.l.b16 %v185
      %v332 = vunpack.c.h.b16 %v185
      %v333 = vunpack.c.l.b16 %v186
      %v334 = vunpack.c.h.b16 %v186
      %v335 = vunpack.c.l.b16 %v187
      %v336 = vunpack.c.h.b16 %v187
      %v337 = vunpack.c.l.b16 %v188
      %v338 = vunpack.c.h.b16 %v188
      %v339 = vunpack.c.l.b16 %v189
      %v340 = vunpack.c.h.b16 %v189
      %v341 = vunpack.c.l.b16 %v190
      %v342 = vunpack.c.h.b16 %v190
      %v343 = vunpack.c.l.b16 %v191
      %v344 = vunpack.c.h.b16 %v191
      %v345 = vunpack.c.l.b16 %v192
      %v346 = vunpack.c.h.b16 %v192
      %v347 = vunpack.c.l.b16 %v193
      %v348 = vunpack.c.h.b16 %v193
      %v349 = vunpack.c.l.b16 %v194
      %v350 = vunpack.c.h.b16 %v194
      %v351 = vunpack.c.l.b16 %v195
      %v352 = vunpack.c.h.b16 %v195
      %v353 = vunpack.c.l.b16 %v196
      %v354 = vunpack.c.h.b16 %v196
      %v355 = vunpack.c.l.b16 %v197
      %v356 = vunpack.c.h.b16 %v197
      %v357 = vunpack.c.l.b16 %v198
      %v358 = vunpack.c.h.b16 %v198
      %v359 = vunpack.c.l.b16 %v199
      %v360 = vunpack.c.h.b16 %v199
      %v361 = vunpack.c.l.b16 %v200
      %v362 = vunpack.c.h.b16 %v200
      %v363 = vunpack.c.l.b16 %v201
      %v364 = vunpack.c.h.b16 %v201
      %v365 = vunpack.c.l.b16 %v202
      %v366 = vunpack.c.h.b16 %v202
      %v367 = vunpack.c.l.b16 %v203
      %v368 = vunpack.c.h.b16 %v203
      %v369 = vunpack.c.l.b16 %v204
      %v370 = vunpack.c.h.b16 %v204
      %v371 = vunpack.c.l.b16 %v205
      %v372 = vunpack.c.h.b16 %v205
      %v373 = vunpack.c.l.b16 %v206
      %v374 = vunpack.c.h.b16 %v206
      %v375 = vunpack.c.l.b16 %v207
      %v376 = vunpack.c.h.b16 %v207
      %v377 = vunpack.c.l.b16 %v208
      %v378 = vunpack.c.h.b16 %v208
      %v379 = vunpack.c.l.b16 %v209
      %v380 = vunpack.c.h.b16 %v209
      %v381 = vunpack.c.l.b16 %v210
      %v382 = vunpack.c.h.b16 %v210
      %v383 = vunpack.c.l.b16 %v211
      %v384 = vunpack.c.h.b16 %v211
      %v385 = vunpack.c.l.b16 %v212
      %v386 = vunpack.c.h.b16 %v212
      %v387 = vunpack.c.l.b16 %v213
      %v388 = vunpack.c.h.b16 %v213
      %v389 = vunpack.c.l.b16 %v214
      %v390 = vunpack.c.h.b16 %v214
      %v391 = vunpack.c.l.b16 %v215
      %v392 = vunpack.c.h.b16 %v215
      %v393 = vunpack.c.l.b16 %v216
      %v394 = vunpack.c.h.b16 %v216
      %v395 = vunpack.c.l.b16 %v217
      %v396 = vunpack.c.h.b16 %v217
      %v397 = vunpack.c.l.b16 %v218
      %v398 = vunpack.c.h.b16 %v218
      %v399 = vunpack.c.l.b16 %v219
      %v400 = vunpack.c.h.b16 %v219
      %v401 = vunpack.c.l.b16 %v220
      %v402 = vunpack.c.h.b16 %v220
      %v403 = vunpack.c.l.b16 %v221
      %v404 = vunpack.c.h.b16 %v221
      %v405 = vunpack.c.l.b16 %v222
      %v406 = vunpack.c.h.b16 %v222
      %v407 = vunpack.c.l.b16 %v223
      %v408 = vunpack.c.h.b16 %v223
      %v409 = vunpack.c.l.b16 %v224
      %v410 = vunpack.c.h.b16 %v224
      %v411 = vunpack.c.l.b16 %v225
      %v412 = vunpack.c.h.b16 %v225
      %v413 = vunpack.c.l.b16 %v226
      %v414 = vunpack.c.h.b16 %v226
      %v415 = vunpack.c.l.b16 %v227
      %v416 = vunpack.c.h.b16 %v227
      %v417 = vpack.c.b16 %v319, %v317
      %v418 = vpack.c.b16 %v320, %v318
      %v419 = vpack.c.b16 %v323, %v321
      %v420 = vpack.c.b16 %v324, %v322
      %v421 = vpack.c.b16 %v327, %v325
      %v422 = vpack.c.b16 %v328, %v326
      %v423 = vpack.c.b16 %v331, %v329
      %v424 = vpack.c.b16 %v332, %v330
      %v425 = vpack.c.b16 %v335, %v333
      %v426 = vpack.c.b16 %v336, %v334
      %v427 = vpack.c.b16 %v339, %v337
      %v428 = vpack.c.b16 %v340, %v338
      %v429 = vpack.c.b16 %v343, %v341
      %v430 = vpack.c.b16 %v344, %v342
      %v431 = vpack.c.b16 %v347, %v345
      %v432 = vpack.c.b16 %v348, %v346
      %v433 = vpack.c.b16 %v351, %v349
      %v434 = vpack.c.b16 %v352, %v350
      %v435 = vpack.c.b16 %v355, %v353
      %v436 = vpack.c.b16 %v356, %v354
      %v437 = vpack.c.b16 %v359, %v357
      %v438 = vpack.c.b16 %v360, %v358
      %v439 = vpack.c.b16 %v363, %v361
      %v440 = vpack.c.b16 %v364, %v362
      %v441 = vpack.c.b16 %v367, %v365
      %v442 = vpack.c.b16 %v368, %v366
      %v443 = vpack.c.b16 %v371, %v369
      %v444 = vpack.c.b16 %v372, %v370
      %v445 = vpack.c.b16 %v375, %v373
      %v446 = vpack.c.b16 %v376, %v374
      %v447 = vpack.c.b16 %v379, %v377
      %v448 = vpack.c.b16 %v380, %v378
      %v449 = vpack.c.b16 %v383, %v381
      %v450 = vpack.c.b16 %v384, %v382
      %v451 = vpack.c.b16 %v387, %v385
      %v452 = vpack.c.b16 %v388, %v386
      %v453 = vpack.c.b16 %v391, %v389
      %v454 = vpack.c.b16 %v392, %v390
      %v455 = vpack.c.b16 %v395, %v393
      %v456 = vpack.c.b16 %v396, %v394
      %v457 = vpack.c.b16 %v399, %v397
      %v458 = vpack.c.b16 %v400, %v398
      %v459 = vpack.c.b16 %v403, %v401
      %v460 = vpack.c.b16 %v404, %v402
      %v461 = vpack.c.b16 %v407, %v405
      %v462 = vpack.c.b16 %v408, %v406
      %v463 = vpack.c.b16 %v411, %v409
      %v464 = vpack.c.b16 %v412, %v410
      %v465 = vpack.c.b16 %v415, %v413
      %v466 = vpack.c.b16 %v416, %v414
      %v549 = vunpack.c.l.b16 %v228
      %v550 = vunpack.c.l.b16 %v229
      %v551 = vunpack.c.l.b16 %v230
      %v552 = vunpack.c.l.b16 %v231
      %v553 = vunpack.c.l.b16 %v232
      %v554 = vunpack.c.l.b16 %v233
      %v555 = vunpack.c.l.b16 %v234
      %v556 = vunpack.c.l.b16 %v235
      %v557 = vunpack.c.l.b16 %v236
      %v558 = vunpack.c.l.b16 %v237
      %v559 = vunpack.c.l.b16 %v238
      %v560 = vunpack.c.l.b16 %v239
      %v561 = vunpack.c.l.b16 %v240
      %v562 = vunpack.c.l.b16 %v241
      %v563 = vunpack.c.l.b16 %v242
      %v564 = vunpack.c.l.b16 %v243
      %v565 = vunpack.c.l.b16 %v244
      %v566 = vunpack.c.l.b16 %v245
      %v567 = vunpack.c.l.b16 %v246
      %v568 = vunpack.c.l.b16 %v247
      %v569 = vunpack.c.l.b16 %v248
      %v570 = vunpack.c.l.b16 %v249
      %v571 = vunpack.c.l.b16 %v250
      %v572 = vunpack.c.l.b16 %v251
      %v573 = vunpack.c.l.b16 %v252
      %v574 = vunpack.c.l.b16 %v253
      %v575 = vunpack.c.l.b16 %v254
      %v576 = vunpack.c.l.b16 %v255
      %v577 = vunpack.c.l.b16 %v256
      %v578 = vunpack.c.l.b16 %v257
      %v579 = vunpack.c.l.b16 %v258
      %v580 = vunpack.c.l.b16 %v259
      %v581 = vpack.c.b16 %v550, %v549
      %v582 = vpack.c.b16 %v552, %v551
      %v583 = vpack.c.b16 %v554, %v553
      %v584 = vpack.c.b16 %v556, %v555
      %v585 = vpack.c.b16 %v558, %v557
      %v586 = vpack.c.b16 %v560, %v559
      %v587 = vpack.c.b16 %v562, %v561
      %v588 = vpack.c.b16 %v564, %v563
      %v589 = vpack.c.b16 %v566, %v565
      %v590 = vpack.c.b16 %v568, %v567
      %v591 = vpack.c.b16 %v570, %v569
      %v592 = vpack.c.b16 %v572, %v571
      %v593 = vpack.c.b16 %v574, %v573
      %v594 = vpack.c.b16 %v576, %v575
      %v595 = vpack.c.b16 %v578, %v577
      %v596 = vpack.c.b16 %v580, %v579
      %613 = vmatprep.subr.bf16.mxu0 0
      %614 = vmatpush1.bf16.msra.mxu0 %v581
      %615 = vmatprep.subr.bf16.mxu0 0
      %616 = vmatpush1.bf16.msra.mxu0 %v582
      %617 = vmatprep.subr.bf16.mxu0 0
      %618 = vmatpush1.bf16.msra.mxu0 %v583
      %619 = vmatprep.subr.bf16.mxu0 0
      %620 = vmatpush1.bf16.msra.mxu0 %v584
      %621 = vmatprep.subr.bf16.mxu0 0
      %622 = vmatpush1.bf16.msra.mxu0 %v585
      %623 = vmatprep.subr.bf16.mxu0 0
      %624 = vmatpush1.bf16.msra.mxu0 %v586
      %625 = vmatprep.subr.bf16.mxu0 0
      %626 = vmatpush1.bf16.msra.mxu0 %v587
      %627 = vmatprep.subr.bf16.mxu0 0
      %628 = vmatpush1.bf16.msra.mxu0 %v588
      %629 = vmatprep.subr.bf16.mxu0 0
      %630 = vmatpush1.bf16.msra.mxu0 %v589
      %631 = vmatprep.subr.bf16.mxu0 0
      %632 = vmatpush1.bf16.msra.mxu0 %v590
      %633 = vmatprep.subr.bf16.mxu0 0
      %634 = vmatpush1.bf16.msra.mxu0 %v591
      %635 = vmatprep.subr.bf16.mxu0 0
      %636 = vmatpush1.bf16.msra.mxu0 %v592
      %637 = vmatprep.subr.bf16.mxu0 0
      %638 = vmatpush1.bf16.msra.mxu0 %v593
      %639 = vmatprep.subr.bf16.mxu0 0
      %640 = vmatpush1.bf16.msra.mxu0 %v594
      %641 = vmatprep.subr.bf16.mxu0 0
      %642 = vmatpush1.bf16.msra.mxu0 %v595
      %643 = vmatprep.subr.bf16.mxu0 0
      %644 = vmatpush1.bf16.msra.mxu0 %v596
      %645 = vmatprep.mubr.bf16.mxu0 %v418
      %646 = vmatmul.mubr.bf16.gmra.mrb[0].mxu0 %v417
      %v647 = vpop.f32.mrb[0].mxu0
      %v648 = vadd.f32 %v265, %v647
      %v649 = vpop.f32.mrb[0].mxu0
      %v650 = vpop.f32.mrb[0].mxu0
      %v651 = vadd.f32 %v265, %v650
      %v652 = vpop.f32.mrb[0].mxu0
      %653 = vmatprep.mubr.bf16.mxu0 %v420
      %654 = vmatmul.mubr.bf16.gmra.mrb[0].mxu0 %v419
      %v655 = vpop.f32.mrb[0].mxu0
      %v656 = vadd.f32 %v265, %v655
      %v657 = vpop.f32.mrb[0].mxu0
      %v658 = vpop.f32.mrb[0].mxu0
      %v659 = vadd.f32 %v265, %v658
      %v660 = vpop.f32.mrb[0].mxu0
      %661 = vmatprep.mubr.bf16.mxu0 %v422
      %662 = vmatmul.mubr.bf16.gmra.mrb[0].mxu0 %v421
      %v663 = vpop.f32.mrb[0].mxu0
      %v664 = vadd.f32 %v265, %v663
      %v665 = vpop.f32.mrb[0].mxu0
      %v666 = vpop.f32.mrb[0].mxu0
      %v667 = vadd.f32 %v265, %v666
      %v668 = vpop.f32.mrb[0].mxu0
      %669 = vmatprep.mubr.bf16.mxu0 %v424
      %670 = vmatmul.mubr.bf16.gmra.mrb[0].mxu0 %v423
      %v671 = vpop.f32.mrb[0].mxu0
      %v672 = vadd.f32 %v265, %v671
      %v673 = vpop.f32.mrb[0].mxu0
      %v674 = vpop.f32.mrb[0].mxu0
      %v675 = vadd.f32 %v265, %v674
      %v676 = vpop.f32.mrb[0].mxu0
      %677 = vmatprep.mubr.bf16.mxu0 %v426
      %678 = vmatmul.mubr.bf16.gmra.mrb[0].mxu0 %v425
      %v679 = vpop.f32.mrb[0].mxu0
      %v680 = vadd.f32 %v265, %v679
      %v681 = vpop.f32.mrb[0].mxu0
      %v682 = vpop.f32.mrb[0].mxu0
      %v683 = vadd.f32 %v265, %v682
      %v684 = vpop.f32.mrb[0].mxu0
      %685 = vmatprep.mubr.bf16.mxu0 %v428
      %686 = vmatmul.mubr.bf16.gmra.mrb[0].mxu0 %v427
      %v687 = vpop.f32.mrb[0].mxu0
      %v688 = vadd.f32 %v265, %v687
      %v689 = vpop.f32.mrb[0].mxu0
      %v690 = vpop.f32.mrb[0].mxu0
      %v691 = vadd.f32 %v265, %v690
      %v692 = vpop.f32.mrb[0].mxu0
      %693 = vmatprep.mubr.bf16.mxu0 %v430
      %694 = vmatmul.mubr.bf16.gmra.mrb[0].mxu0 %v429
      %v695 = vpop.f32.mrb[0].mxu0
      %v696 = vadd.f32 %v265, %v695
      %v697 = vpop.f32.mrb[0].mxu0
      %v698 = vpop.f32.mrb[0].mxu0
      %v699 = vadd.f32 %v265, %v698
      %v700 = vpop.f32.mrb[0].mxu0
      %701 = vmatprep.mubr.bf16.mxu0 %v432
      %702 = vmatmul.mubr.bf16.gmra.mrb[0].mxu0 %v431
      %v703 = vpop.f32.mrb[0].mxu0
      %v704 = vadd.f32 %v265, %v703
      %v705 = vpop.f32.mrb[0].mxu0
      %v706 = vpop.f32.mrb[0].mxu0
      %v707 = vadd.f32 %v265, %v706
      %v708 = vpop.f32.mrb[0].mxu0
      %709 = vmatprep.mubr.bf16.mxu0 %v434
      %710 = vmatmul.mubr.bf16.gmra.mrb[0].mxu0 %v433
      %v711 = vpop.f32.mrb[0].mxu0
      %v712 = vadd.f32 %v265, %v711
      %v713 = vpop.f32.mrb[0].mxu0
      %v714 = vpop.f32.mrb[0].mxu0
      %v715 = vadd.f32 %v265, %v714
      %v716 = vpop.f32.mrb[0].mxu0
      %717 = vmatprep.mubr.bf16.mxu0 %v436
      %718 = vmatmul.mubr.bf16.gmra.mrb[0].mxu0 %v435
      %v719 = vpop.f32.mrb[0].mxu0
      %v720 = vadd.f32 %v265, %v719
      %v721 = vpop.f32.mrb[0].mxu0
      %v722 = vpop.f32.mrb[0].mxu0
      %v723 = vadd.f32 %v265, %v722
      %v724 = vpop.f32.mrb[0].mxu0
      %725 = vmatprep.mubr.bf16.mxu0 %v438
      %726 = vmatmul.mubr.bf16.gmra.mrb[0].mxu0 %v437
      %v727 = vpop.f32.mrb[0].mxu0
      %v728 = vadd.f32 %v265, %v727
      %v729 = vpop.f32.mrb[0].mxu0
      %v730 = vpop.f32.mrb[0].mxu0
      %v731 = vadd.f32 %v265, %v730
      %v732 = vpop.f32.mrb[0].mxu0
      %733 = vmatprep.mubr.bf16.mxu0 %v440
      %734 = vmatmul.mubr.bf16.gmra.mrb[0].mxu0 %v439
      %v735 = vpop.f32.mrb[0].mxu0
      %v736 = vadd.f32 %v265, %v735
      %v737 = vpop.f32.mrb[0].mxu0
      %v738 = vpop.f32.mrb[0].mxu0
      %v739 = vadd.f32 %v265, %v738
      %v740 = vpop.f32.mrb[0].mxu0
      %741 = vmatprep.mubr.bf16.mxu0 %v442
      %742 = vmatmul.mubr.bf16.gmra.mrb[0].mxu0 %v441
      %v743 = vpop.f32.mrb[0].mxu0
      %v744 = vadd.f32 %v265, %v743
      %v745 = vpop.f32.mrb[0].mxu0
      %v746 = vpop.f32.mrb[0].mxu0
      %v747 = vadd.f32 %v265, %v746
      %v748 = vpop.f32.mrb[0].mxu0
      %749 = vmatprep.mubr.bf16.mxu0 %v444
      %750 = vmatmul.mubr.bf16.gmra.mrb[0].mxu0 %v443
      %v751 = vpop.f32.mrb[0].mxu0
      %v752 = vadd.f32 %v265, %v751
      %v753 = vpop.f32.mrb[0].mxu0
      %v754 = vpop.f32.mrb[0].mxu0
      %v755 = vadd.f32 %v265, %v754
      %v756 = vpop.f32.mrb[0].mxu0
      %757 = vmatprep.mubr.bf16.mxu0 %v446
      %758 = vmatmul.mubr.bf16.gmra.mrb[0].mxu0 %v445
      %v759 = vpop.f32.mrb[0].mxu0
      %v760 = vadd.f32 %v265, %v759
      %v761 = vpop.f32.mrb[0].mxu0
      %v762 = vpop.f32.mrb[0].mxu0
      %v763 = vadd.f32 %v265, %v762
      %v764 = vpop.f32.mrb[0].mxu0
      %765 = vmatprep.mubr.bf16.mxu0 %v448
      %766 = vmatmul.mubr.bf16.gmra.mrb[0].mxu0 %v447
      %v767 = vpop.f32.mrb[0].mxu0
      %v768 = vadd.f32 %v265, %v767
      %v769 = vpop.f32.mrb[0].mxu0
      %v770 = vpop.f32.mrb[0].mxu0
      %v771 = vadd.f32 %v265, %v770
      %v772 = vpop.f32.mrb[0].mxu0
      %773 = vmatprep.mubr.bf16.mxu0 %v450
      %774 = vmatmul.mubr.bf16.gmra.mrb[0].mxu0 %v449
      %v775 = vpop.f32.mrb[0].mxu0
      %v776 = vadd.f32 %v265, %v775
      %v777 = vpop.f32.mrb[0].mxu0
      %v778 = vpop.f32.mrb[0].mxu0
      %v779 = vadd.f32 %v265, %v778
      %v780 = vpop.f32.mrb[0].mxu0
      %781 = vmatprep.mubr.bf16.mxu0 %v452
      %782 = vmatmul.mubr.bf16.gmra.mrb[0].mxu0 %v451
      %v783 = vpop.f32.mrb[0].mxu0
      %v784 = vadd.f32 %v265, %v783
      %v785 = vpop.f32.mrb[0].mxu0
      %v786 = vpop.f32.mrb[0].mxu0
      %v787 = vadd.f32 %v265, %v786
      %v788 = vpop.f32.mrb[0].mxu0
      %789 = vmatprep.mubr.bf16.mxu0 %v454
      %790 = vmatmul.mubr.bf16.gmra.mrb[0].mxu0 %v453
      %v791 = vpop.f32.mrb[0].mxu0
      %v792 = vadd.f32 %v265, %v791
      %v793 = vpop.f32.mrb[0].mxu0
      %v794 = vpop.f32.mrb[0].mxu0
      %v795 = vadd.f32 %v265, %v794
      %v796 = vpop.f32.mrb[0].mxu0
      %797 = vmatprep.mubr.bf16.mxu0 %v456
      %798 = vmatmul.mubr.bf16.gmra.mrb[0].mxu0 %v455
      %v799 = vpop.f32.mrb[0].mxu0
      %v800 = vadd.f32 %v265, %v799
      %v801 = vpop.f32.mrb[0].mxu0
      %v802 = vpop.f32.mrb[0].mxu0
      %v803 = vadd.f32 %v265, %v802
      %v804 = vpop.f32.mrb[0].mxu0
      %805 = vmatprep.mubr.bf16.mxu0 %v458
      %806 = vmatmul.mubr.bf16.gmra.mrb[0].mxu0 %v457
      %v807 = vpop.f32.mrb[0].mxu0
      %v808 = vadd.f32 %v265, %v807
      %v809 = vpop.f32.mrb[0].mxu0
      %v810 = vpop.f32.mrb[0].mxu0
      %v811 = vadd.f32 %v265, %v810
      %v812 = vpop.f32.mrb[0].mxu0
      %813 = vmatprep.mubr.bf16.mxu0 %v460
      %814 = vmatmul.mubr.bf16.gmra.mrb[0].mxu0 %v459
      %v815 = vpop.f32.mrb[0].mxu0
      %v816 = vadd.f32 %v265, %v815
      %v817 = vpop.f32.mrb[0].mxu0
      %v818 = vpop.f32.mrb[0].mxu0
      %v819 = vadd.f32 %v265, %v818
      %v820 = vpop.f32.mrb[0].mxu0
      %821 = vmatprep.mubr.bf16.mxu0 %v462
      %822 = vmatmul.mubr.bf16.gmra.mrb[0].mxu0 %v461
      %v823 = vpop.f32.mrb[0].mxu0
      %v824 = vadd.f32 %v265, %v823
      %v825 = vpop.f32.mrb[0].mxu0
      %v826 = vpop.f32.mrb[0].mxu0
      %v827 = vadd.f32 %v265, %v826
      %v828 = vpop.f32.mrb[0].mxu0
      %829 = vmatprep.mubr.bf16.mxu0 %v464
      %830 = vmatmul.mubr.bf16.gmra.mrb[0].mxu0 %v463
      %v831 = vpop.f32.mrb[0].mxu0
      %v832 = vadd.f32 %v265, %v831
      %v833 = vpop.f32.mrb[0].mxu0
      %v834 = vpop.f32.mrb[0].mxu0
      %v835 = vadd.f32 %v265, %v834
      %v836 = vpop.f32.mrb[0].mxu0
      %837 = vmatprep.mubr.bf16.mxu0 %v466
      %838 = vmatmul.mubr.bf16.gmra.mrb[0].mxu0 %v465
      %v839 = vpop.f32.mrb[0].mxu0
      %v840 = vadd.f32 %v265, %v839
      %v841 = vpop.f32.mrb[0].mxu0
      %v842 = vpop.f32.mrb[0].mxu0
      %v843 = vadd.f32 %v265, %v842
      %v844 = vpop.f32.mrb[0].mxu0
      %845 = vdwg.mxu0
      %v846 = vmax.f32 %v648, 0.0
      %v847 = vmax.f32 %v651, 0.0
      %v848 = vmax.f32 %v656, 0.0
      %v849 = vmax.f32 %v659, 0.0
      %v850 = vmax.f32 %v664, 0.0
      %v851 = vmax.f32 %v667, 0.0
      %v852 = vmax.f32 %v672, 0.0
      %v853 = vmax.f32 %v675, 0.0
      %v854 = vmax.f32 %v680, 0.0
      %v855 = vmax.f32 %v683, 0.0
      %v856 = vmax.f32 %v688, 0.0
      %v857 = vmax.f32 %v691, 0.0
      %v858 = vmax.f32 %v696, 0.0
      %v859 = vmax.f32 %v699, 0.0
      %v860 = vmax.f32 %v704, 0.0
      %v861 = vmax.f32 %v707, 0.0
      %v862 = vmax.f32 %v712, 0.0
      %v863 = vmax.f32 %v715, 0.0
      %v864 = vmax.f32 %v720, 0.0
      %v865 = vmax.f32 %v723, 0.0
      %v866 = vmax.f32 %v728, 0.0
      %v867 = vmax.f32 %v731, 0.0
      %v868 = vmax.f32 %v736, 0.0
      %v869 = vmax.f32 %v739, 0.0
      %v870 = vmax.f32 %v744, 0.0
      %v871 = vmax.f32 %v747, 0.0
      %v872 = vmax.f32 %v752, 0.0
      %v873 = vmax.f32 %v755, 0.0
      %v874 = vmax.f32 %v760, 0.0
      %v875 = vmax.f32 %v763, 0.0
      %v876 = vmax.f32 %v768, 0.0
      %v877 = vmax.f32 %v771, 0.0
      %v878 = vmax.f32 %v776, 0.0
      %v879 = vmax.f32 %v779, 0.0
      %v880 = vmax.f32 %v784, 0.0
      %v881 = vmax.f32 %v787, 0.0
      %v882 = vmax.f32 %v792, 0.0
      %v883 = vmax.f32 %v795, 0.0
      %v884 = vmax.f32 %v800, 0.0
      %v885 = vmax.f32 %v803, 0.0
      %v886 = vmax.f32 %v808, 0.0
      %v887 = vmax.f32 %v811, 0.0
      %v888 = vmax.f32 %v816, 0.0
      %v889 = vmax.f32 %v819, 0.0
      %v890 = vmax.f32 %v824, 0.0
      %v891 = vmax.f32 %v827, 0.0
      %v892 = vmax.f32 %v832, 0.0
      %v893 = vmax.f32 %v835, 0.0
      %v894 = vmax.f32 %v840, 0.0
      %v895 = vmax.f32 %v843, 0.0
      %v896 = vpack.c.bf16 %v847, %v846
      %v897 = vpack.c.bf16 %v849, %v848
      %v898 = vpack.c.bf16 %v851, %v850
      %v899 = vpack.c.bf16 %v853, %v852
      %v900 = vpack.c.bf16 %v855, %v854
      %v901 = vpack.c.bf16 %v857, %v856
      %v902 = vpack.c.bf16 %v859, %v858
      %v903 = vpack.c.bf16 %v861, %v860
      %v904 = vpack.c.bf16 %v863, %v862
      %v905 = vpack.c.bf16 %v865, %v864
      %v906 = vpack.c.bf16 %v867, %v866
      %v907 = vpack.c.bf16 %v869, %v868
      %v908 = vpack.c.bf16 %v871, %v870
      %v909 = vpack.c.bf16 %v873, %v872
      %v910 = vpack.c.bf16 %v875, %v874
      %v911 = vpack.c.bf16 %v877, %v876
      %v912 = vpack.c.bf16 %v879, %v878
      %v913 = vpack.c.bf16 %v881, %v880
      %v914 = vpack.c.bf16 %v883, %v882
      %v915 = vpack.c.bf16 %v885, %v884
      %v916 = vpack.c.bf16 %v887, %v886
      %v917 = vpack.c.bf16 %v889, %v888
      %v918 = vpack.c.bf16 %v891, %v890
      %v919 = vpack.c.bf16 %v893, %v892
      %v920 = vpack.c.bf16 %v895, %v894
      %v946 = vunpack.c.l.b16 %v896
      %v947 = vunpack.c.h.b16 %v896
      %v948 = vunpack.c.l.b16 %v897
      %v949 = vunpack.c.h.b16 %v897
      %v950 = vunpack.c.l.b16 %v898
      %v951 = vunpack.c.h.b16 %v898
      %v952 = vunpack.c.l.b16 %v899
      %v953 = vunpack.c.h.b16 %v899
      %v954 = vunpack.c.l.b16 %v900
      %v955 = vunpack.c.h.b16 %v900
      %v956 = vunpack.c.l.b16 %v901
      %v957 = vunpack.c.h.b16 %v901
      %v958 = vunpack.c.l.b16 %v902
      %v959 = vunpack.c.h.b16 %v902
      %v960 = vunpack.c.l.b16 %v903
      %v961 = vunpack.c.h.b16 %v903
      %v962 = vunpack.c.l.b16 %v904
      %v963 = vunpack.c.h.b16 %v904
      %v964 = vunpack.c.l.b16 %v905
      %v965 = vunpack.c.h.b16 %v905
      %v966 = vunpack.c.l.b16 %v906
      %v967 = vunpack.c.h.b16 %v906
      %v968 = vunpack.c.l.b16 %v907
      %v969 = vunpack.c.h.b16 %v907
      %v970 = vunpack.c.l.b16 %v908
      %v971 = vunpack.c.h.b16 %v908
      %v972 = vunpack.c.l.b16 %v909
      %v973 = vunpack.c.h.b16 %v909
      %v974 = vunpack.c.l.b16 %v910
      %v975 = vunpack.c.h.b16 %v910
      %v976 = vunpack.c.l.b16 %v911
      %v977 = vunpack.c.h.b16 %v911
      %v978 = vunpack.c.l.b16 %v912
      %v979 = vunpack.c.h.b16 %v912
      %v980 = vunpack.c.l.b16 %v913
      %v981 = vunpack.c.h.b16 %v913
      %v982 = vunpack.c.l.b16 %v914
      %v983 = vunpack.c.h.b16 %v914
      %v984 = vunpack.c.l.b16 %v915
      %v985 = vunpack.c.h.b16 %v915
      %v986 = vunpack.c.l.b16 %v916
      %v987 = vunpack.c.h.b16 %v916
      %v988 = vunpack.c.l.b16 %v917
      %v989 = vunpack.c.h.b16 %v917
      %v990 = vunpack.c.l.b16 %v918
      %v991 = vunpack.c.h.b16 %v918
      %v992 = vunpack.c.l.b16 %v919
      %v993 = vunpack.c.h.b16 %v919
      %v994 = vunpack.c.l.b16 %v920
      %v995 = vunpack.c.h.b16 %v920
      %v996 = vpack.c.b16 %v946, %v946
      %v997 = vpack.c.b16 %v947, %v947
      %v998 = vpack.c.b16 %v948, %v948
      %v999 = vpack.c.b16 %v949, %v949
      %v1000 = vpack.c.b16 %v950, %v950
      %v1001 = vpack.c.b16 %v951, %v951
      %v1002 = vpack.c.b16 %v952, %v952
      %v1003 = vpack.c.b16 %v953, %v953
      %v1004 = vpack.c.b16 %v954, %v954
      %v1005 = vpack.c.b16 %v955, %v955
      %v1006 = vpack.c.b16 %v956, %v956
      %v1007 = vpack.c.b16 %v957, %v957
      %v1008 = vpack.c.b16 %v958, %v958
      %v1009 = vpack.c.b16 %v959, %v959
      %v1010 = vpack.c.b16 %v960, %v960
      %v1011 = vpack.c.b16 %v961, %v961
      %v1012 = vpack.c.b16 %v962, %v962
      %v1013 = vpack.c.b16 %v963, %v963
      %v1014 = vpack.c.b16 %v964, %v964
      %v1015 = vpack.c.b16 %v965, %v965
      %v1016 = vpack.c.b16 %v966, %v966
      %v1017 = vpack.c.b16 %v967, %v967
      %v1018 = vpack.c.b16 %v968, %v968
      %v1019 = vpack.c.b16 %v969, %v969
      %v1020 = vpack.c.b16 %v970, %v970
      %v1021 = vpack.c.b16 %v971, %v971
      %v1022 = vpack.c.b16 %v972, %v972
      %v1023 = vpack.c.b16 %v973, %v973
      %v1024 = vpack.c.b16 %v974, %v974
      %v1025 = vpack.c.b16 %v975, %v975
      %v1026 = vpack.c.b16 %v976, %v976
      %v1027 = vpack.c.b16 %v977, %v977
      %v1028 = vpack.c.b16 %v978, %v978
      %v1029 = vpack.c.b16 %v979, %v979
      %v1030 = vpack.c.b16 %v980, %v980
      %v1031 = vpack.c.b16 %v981, %v981
      %v1032 = vpack.c.b16 %v982, %v982
      %v1033 = vpack.c.b16 %v983, %v983
      %v1034 = vpack.c.b16 %v984, %v984
      %v1035 = vpack.c.b16 %v985, %v985
      %v1036 = vpack.c.b16 %v986, %v986
      %v1037 = vpack.c.b16 %v987, %v987
      %v1038 = vpack.c.b16 %v988, %v988
      %v1039 = vpack.c.b16 %v989, %v989
      %v1040 = vpack.c.b16 %v990, %v990
      %v1041 = vpack.c.b16 %v991, %v991
      %v1042 = vpack.c.b16 %v992, %v992
      %v1043 = vpack.c.b16 %v993, %v993
      %v1044 = vpack.c.b16 %v994, %v994
      %v1045 = vpack.c.b16 %v995, %v995
      %vm1096 = vcmask 257024
      %1097 = vst.msk [vmem:[%s175] sm:$0xf] %vm1096, %v996
      %1098 = vst.msk [vmem:[%s175 + $0x4] sm:$0xf] %vm1096, %v997
      %1099 = vst.msk [vmem:[%s175 + $0x8] sm:$0xf] %vm1096, %v998
      %1100 = vst.msk [vmem:[%s175 + $0xc] sm:$0xf] %vm1096, %v999
      %1101 = vst.msk [vmem:[%s175 + $0x10] sm:$0xf] %vm1096, %v1000
      %1102 = vst.msk [vmem:[%s175 + $0x14] sm:$0xf] %vm1096, %v1001
      %1103 = vst.msk [vmem:[%s175 + $0x18] sm:$0xf] %vm1096, %v1002
      %1104 = vst.msk [vmem:[%s175 + $0x1c] sm:$0xf] %vm1096, %v1003
      %1105 = vst.msk [vmem:[%s175 + $0x20] sm:$0xf] %vm1096, %v1004
      %1106 = vst.msk [vmem:[%s175 + $0x24] sm:$0xf] %vm1096, %v1005
      %1107 = vst.msk [vmem:[%s175 + $0x28] sm:$0xf] %vm1096, %v1006
      %1108 = vst.msk [vmem:[%s175 + $0x2c] sm:$0xf] %vm1096, %v1007
      %1109 = vst.msk [vmem:[%s175 + $0x30] sm:$0xf] %vm1096, %v1008
      %1110 = vst.msk [vmem:[%s175 + $0x34] sm:$0xf] %vm1096, %v1009
      %1111 = vst.msk [vmem:[%s175 + $0x38] sm:$0xf] %vm1096, %v1010
      %1112 = vst.msk [vmem:[%s175 + $0x3c] sm:$0xf] %vm1096, %v1011
      %1113 = vst.msk [vmem:[%s175 + $0x40] sm:$0xf] %vm1096, %v1012
      %1114 = vst.msk [vmem:[%s175 + $0x44] sm:$0xf] %vm1096, %v1013
      %1115 = vst.msk [vmem:[%s175 + $0x48] sm:$0xf] %vm1096, %v1014
      %1116 = vst.msk [vmem:[%s175 + $0x4c] sm:$0xf] %vm1096, %v1015
      %1117 = vst.msk [vmem:[%s175 + $0x50] sm:$0xf] %vm1096, %v1016
      %1118 = vst.msk [vmem:[%s175 + $0x54] sm:$0xf] %vm1096, %v1017
      %1119 = vst.msk [vmem:[%s175 + $0x58] sm:$0xf] %vm1096, %v1018
      %1120 = vst.msk [vmem:[%s175 + $0x5c] sm:$0xf] %vm1096, %v1019
      %1121 = vst.msk [vmem:[%s175 + $0x60] sm:$0xf] %vm1096, %v1020
      %1122 = vst.msk [vmem:[%s175 + $0x64] sm:$0xf] %vm1096, %v1021
      %1123 = vst.msk [vmem:[%s175 + $0x68] sm:$0xf] %vm1096, %v1022
      %1124 = vst.msk [vmem:[%s175 + $0x6c] sm:$0xf] %vm1096, %v1023
      %1125 = vst.msk [vmem:[%s175 + $0x70] sm:$0xf] %vm1096, %v1024
      %1126 = vst.msk [vmem:[%s175 + $0x74] sm:$0xf] %vm1096, %v1025
      %1127 = vst.msk [vmem:[%s175 + $0x78] sm:$0xf] %vm1096, %v1026
      %1128 = vst.msk [vmem:[%s175 + $0x7c] sm:$0xf] %vm1096, %v1027
      %1129 = vst.msk [vmem:[%s175 + $0x80] sm:$0xf] %vm1096, %v1028
      %1130 = vst.msk [vmem:[%s175 + $0x84] sm:$0xf] %vm1096, %v1029
      %1131 = vst.msk [vmem:[%s175 + $0x88] sm:$0xf] %vm1096, %v1030
      %1132 = vst.msk [vmem:[%s175 + $0x8c] sm:$0xf] %vm1096, %v1031
      %1133 = vst.msk [vmem:[%s175 + $0x90] sm:$0xf] %vm1096, %v1032
      %1134 = vst.msk [vmem:[%s175 + $0x94] sm:$0xf] %vm1096, %v1033
      %1135 = vst.msk [vmem:[%s175 + $0x98] sm:$0xf] %vm1096, %v1034
      %1136 = vst.msk [vmem:[%s175 + $0x9c] sm:$0xf] %vm1096, %v1035
      %1137 = vst.msk [vmem:[%s175 + $0xa0] sm:$0xf] %vm1096, %v1036
      %1138 = vst.msk [vmem:[%s175 + $0xa4] sm:$0xf] %vm1096, %v1037
      %1139 = vst.msk [vmem:[%s175 + $0xa8] sm:$0xf] %vm1096, %v1038
      %1140 = vst.msk [vmem:[%s175 + $0xac] sm:$0xf] %vm1096, %v1039
      %1141 = vst.msk [vmem:[%s175 + $0xb0] sm:$0xf] %vm1096, %v1040
      %1142 = vst.msk [vmem:[%s175 + $0xb4] sm:$0xf] %vm1096, %v1041
      %1143 = vst.msk [vmem:[%s175 + $0xb8] sm:$0xf] %vm1096, %v1042
      %1144 = vst.msk [vmem:[%s175 + $0xbc] sm:$0xf] %vm1096, %v1043
      %1145 = vst.msk [vmem:[%s175 + $0xc0] sm:$0xf] %vm1096, %v1044
      %1146 = vst.msk [vmem:[%s175 + $0xc4] sm:$0xf] %vm1096, %v1045
      %s1147 = smul.u32 50, %s14
      %p1148 = scmp.lt.s32.totalorder %s1147, 99
      %s1149 = scalar_select %p1148, %s1147, 99
      %s1150 = smul.addr %s1149, 4
      %s1151 = scalar_lea.vmem %s3, %s1150
      // Predicated region
      $region33: #{da1qn_forward.4} parent=31 // pred_check
        %p1152 = pneg %p100
      $region34: #{da1qn_forward.4} parent=31 // pred_check_branch
        %1154 = sbr.rel (%p1152) target = $region36
      $region35: #{da1qn_forward.4} parent=31 // pred_region
        %s1155 = smul.u32 50, %s14
      $region36: #{da1qn_forward.4} parent=31 // pred_fallthru
        _
    $region32: #{da1qn_forward.4} parent=5 // pred_fallthru
      _
    %p1156 = scmp.le.s32.totalorder 2, %s9
    // Predicated region
    $region37: #{da1qn_forward.4} parent=5 // pred_check
      %p1157 = pneg %p1156
    $region38: #{da1qn_forward.4} parent=5 // pred_check_branch
      %1159 = sbr.rel (%p1157) target = $region40
    $region39: #{da1qn_forward.4} parent=5 // pred_region
      %s1160 = ssub.s32 %s9, 2
      // Predicated region
      $region41: #{da1qn_forward.4} parent=39 // pred_check
        %p1161 = pneg %p106
      $region42: #{da1qn_forward.4} parent=39 // pred_check_branch
        %1163 = sbr.rel (%p1161) target = $region44
      $region43: #{da1qn_forward.4} parent=39 // pred_region
        %s1164 = smul.u32 50, %s15
        %p1165 = scmp.lt.s32.totalorder %s1164, 99
        %s1166 = scalar_select %p1165, %s1164, 99
        %s1167 = smul.addr %s1166, 4
        %s1168 = scalar_lea.vmem %s3, %s1167
      $region44: #{da1qn_forward.4} parent=39 // pred_fallthru
        _
    $region40: #{da1qn_forward.4} parent=5 // pred_fallthru
      _
  $region6: #{da1qn_forward.4} parent=0 // loop_footer
    %s13 = sadd.s32 1, %s9
  $region7: #{da1qn_forward.4} parent=0 // loop_footer_branch
    %8 = sbr.rel target = $region3
  $region8: #{da1qn_forward.4} parent=0 // loop_exit
    _

// kernel: da1qn_forward.5
$region0: #{da1qn_forward.5}
  #allocation0 [shape = 'u32[]', space=smem, size = 0x4, offset = 0x4, fixed_abs, tag = 'smem constant byte address 0x4 - core index']
  #allocation1 [shape = 'u32[144,128]{1,0:T(1,128)}', space=vmem, size = 0x12000, scoped, tag = 'internal scratch']
  %s0 = inlined_call_operand.vmem [shape: bf16[162,512], index: 0, kind: input, shape index: {}]
  %s1 = inlined_call_operand.vmem [shape: bf16[512,64], index: 1, kind: input, shape index: {}]
  %s2 = inlined_call_operand.vmem [shape: f32[1,64], index: 2, kind: input, shape index: {}]
  %s3 = inlined_call_operand.vmem [shape: bf16[162,64], index: 3, kind: output, shape index: {}]
  %s4 = sld [smem:[#allocation0]]
  $region22: #{da1qn_forward.5} parent=0
    _
  %s6 = ssub.s32 1, %s4
  %s7 = scalar_select 0, %s6, %s4
  // Predicated region
  $region2: #{da1qn_forward.5} parent=0 // pred_check
    _
  $region3: #{da1qn_forward.5} parent=0 // pred_check_branch
    %9 = sbr.rel (0) target = $region5
  $region4: #{da1qn_forward.5} parent=0 // pred_region
    _
  $region5: #{da1qn_forward.5} parent=0 // pred_fallthru
    _
  // Predicated region
  $region6: #{da1qn_forward.5} parent=0 // pred_check
    _
  $region7: #{da1qn_forward.5} parent=0 // pred_check_branch
    %11 = sbr.rel (0) target = $region9
  $region8: #{da1qn_forward.5} parent=0 // pred_region
    _
  $region9: #{da1qn_forward.5} parent=0 // pred_fallthru
    _
  // Predicated region
  $region10: #{da1qn_forward.5} parent=0 // pred_check
    _
  $region11: #{da1qn_forward.5} parent=0 // pred_check_branch
    %13 = sbr.rel (0) target = $region13
  $region12: #{da1qn_forward.5} parent=0 // pred_region
    _
  $region13: #{da1qn_forward.5} parent=0 // pred_fallthru
    _
  %v15 = vld [vmem:[%s0] sm:$0xff]
  %v16 = vld [vmem:[%s0 + $0x8] sm:$0xff]
  %v17 = vld [vmem:[%s0 + $0x10] sm:$0xff]
  %v18 = vld [vmem:[%s0 + $0x18] sm:$0xff]
  %v19 = vld [vmem:[%s0 + $0x20] sm:$0xff]
  %v20 = vld [vmem:[%s0 + $0x28] sm:$0xff]
  %v21 = vld [vmem:[%s0 + $0x30] sm:$0xff]
  %v22 = vld [vmem:[%s0 + $0x38] sm:$0xff]
  %v23 = vld [vmem:[%s0 + $0x40] sm:$0xff]
  %v24 = vld [vmem:[%s0 + $0x48] sm:$0xff]
  %v25 = vld [vmem:[%s0 + $0x50] sm:$0xff]
  %v26 = vld [vmem:[%s0 + $0x58] sm:$0xff]
  %v27 = vld [vmem:[%s0 + $0x60] sm:$0xff]
  %v28 = vld [vmem:[%s0 + $0x68] sm:$0xff]
  %v29 = vld [vmem:[%s0 + $0x70] sm:$0xff]
  %v30 = vld [vmem:[%s0 + $0x78] sm:$0xff]
  %v31 = vld [vmem:[%s0 + $0x80] sm:$0xff]
  %v32 = vld [vmem:[%s0 + $0x88] sm:$0xff]
  %v33 = vld [vmem:[%s0 + $0x90] sm:$0xff]
  %v34 = vld [vmem:[%s0 + $0x98] sm:$0xff]
  %v35 = vld [vmem:[%s0 + $0xa0] sm:$0xff]
  %v36 = vld [vmem:[%s0 + $0xa8] sm:$0xff]
  %v37 = vld [vmem:[%s0 + $0xb0] sm:$0xff]
  %v38 = vld [vmem:[%s0 + $0xb8] sm:$0xff]
  %v39 = vld [vmem:[%s0 + $0xc0] sm:$0xff]
  %v40 = vld [vmem:[%s0 + $0xc8] sm:$0xff]
  %v41 = vld [vmem:[%s0 + $0xd0] sm:$0xff]
  %v42 = vld [vmem:[%s0 + $0xd8] sm:$0xff]
  %v43 = vld [vmem:[%s0 + $0xe0] sm:$0xff]
  %v44 = vld [vmem:[%s0 + $0xe8] sm:$0xff]
  %v45 = vld [vmem:[%s0 + $0xf0] sm:$0xff]
  %v46 = vld [vmem:[%s0 + $0xf8] sm:$0xff]
  %v47 = vld [vmem:[%s0 + $0x100] sm:$0xff]
  %v48 = vld [vmem:[%s0 + $0x108] sm:$0xff]
  %v49 = vld [vmem:[%s0 + $0x110] sm:$0xff]
  %v50 = vld [vmem:[%s0 + $0x118] sm:$0xff]
  %v51 = vld [vmem:[%s0 + $0x120] sm:$0xff]
  %v52 = vld [vmem:[%s0 + $0x128] sm:$0xff]
  %v53 = vld [vmem:[%s0 + $0x130] sm:$0xff]
  %v54 = vld [vmem:[%s0 + $0x138] sm:$0xff]
  %v55 = vld [vmem:[%s0 + $0x140] sm:$0xff]
  %v56 = vld [vmem:[%s0 + $0x148] sm:$0xff]
  %v57 = vld [vmem:[%s1] sm:$0xf]
  %v58 = vld [vmem:[%s1 + $0x4] sm:$0xf]
  %v59 = vld [vmem:[%s1 + $0x8] sm:$0xf]
  %v60 = vld [vmem:[%s1 + $0xc] sm:$0xf]
  %v61 = vld [vmem:[%s1 + $0x10] sm:$0xf]
  %v62 = vld [vmem:[%s1 + $0x14] sm:$0xf]
  %v63 = vld [vmem:[%s1 + $0x18] sm:$0xf]
  %v64 = vld [vmem:[%s1 + $0x1c] sm:$0xf]
  %v65 = vld [vmem:[%s1 + $0x20] sm:$0xf]
  %v66 = vld [vmem:[%s1 + $0x24] sm:$0xf]
  %v67 = vld [vmem:[%s1 + $0x28] sm:$0xf]
  %v68 = vld [vmem:[%s1 + $0x2c] sm:$0xf]
  %v69 = vld [vmem:[%s1 + $0x30] sm:$0xf]
  %v70 = vld [vmem:[%s1 + $0x34] sm:$0xf]
  %v71 = vld [vmem:[%s1 + $0x38] sm:$0xf]
  %v72 = vld [vmem:[%s1 + $0x3c] sm:$0xf]
  %v73 = vld [vmem:[%s1 + $0x40] sm:$0xf]
  %v74 = vld [vmem:[%s1 + $0x44] sm:$0xf]
  %v75 = vld [vmem:[%s1 + $0x48] sm:$0xf]
  %v76 = vld [vmem:[%s1 + $0x4c] sm:$0xf]
  %v77 = vld [vmem:[%s1 + $0x50] sm:$0xf]
  %v78 = vld [vmem:[%s1 + $0x54] sm:$0xf]
  %v79 = vld [vmem:[%s1 + $0x58] sm:$0xf]
  %v80 = vld [vmem:[%s1 + $0x5c] sm:$0xf]
  %v81 = vld [vmem:[%s1 + $0x60] sm:$0xf]
  %v82 = vld [vmem:[%s1 + $0x64] sm:$0xf]
  %v83 = vld [vmem:[%s1 + $0x68] sm:$0xf]
  %v84 = vld [vmem:[%s1 + $0x6c] sm:$0xf]
  %v85 = vld [vmem:[%s1 + $0x70] sm:$0xf]
  %v86 = vld [vmem:[%s1 + $0x74] sm:$0xf]
  %v87 = vld [vmem:[%s1 + $0x78] sm:$0xf]
  %v88 = vld [vmem:[%s1 + $0x7c] sm:$0xf]
  %v89 = vld [vmem:[%s1 + $0x80] sm:$0xf]
  %v90 = vld [vmem:[%s1 + $0x84] sm:$0xf]
  %v91 = vld [vmem:[%s1 + $0x88] sm:$0xf]
  %v92 = vld [vmem:[%s1 + $0x8c] sm:$0xf]
  %v93 = vld [vmem:[%s1 + $0x90] sm:$0xf]
  %v94 = vld [vmem:[%s1 + $0x94] sm:$0xf]
  %v95 = vld [vmem:[%s1 + $0x98] sm:$0xf]
  %v96 = vld [vmem:[%s1 + $0x9c] sm:$0xf]
  %v97 = vld [vmem:[%s1 + $0xa0] sm:$0xf]
  %v98 = vld [vmem:[%s1 + $0xa4] sm:$0xf]
  %v99 = vld [vmem:[%s1 + $0xa8] sm:$0xf]
  %v100 = vld [vmem:[%s1 + $0xac] sm:$0xf]
  %v101 = vld [vmem:[%s1 + $0xb0] sm:$0xf]
  %v102 = vld [vmem:[%s1 + $0xb4] sm:$0xf]
  %v103 = vld [vmem:[%s1 + $0xb8] sm:$0xf]
  %v104 = vld [vmem:[%s1 + $0xbc] sm:$0xf]
  %v105 = vld [vmem:[%s1 + $0xc0] sm:$0xf]
  %v106 = vld [vmem:[%s1 + $0xc4] sm:$0xf]
  %v107 = vld [vmem:[%s1 + $0xc8] sm:$0xf]
  %v108 = vld [vmem:[%s1 + $0xcc] sm:$0xf]
  %v109 = vld [vmem:[%s1 + $0xd0] sm:$0xf]
  %v110 = vld [vmem:[%s1 + $0xd4] sm:$0xf]
  %v111 = vld [vmem:[%s1 + $0xd8] sm:$0xf]
  %v112 = vld [vmem:[%s1 + $0xdc] sm:$0xf]
  %v113 = vld [vmem:[%s1 + $0xe0] sm:$0xf]
  %v114 = vld [vmem:[%s1 + $0xe4] sm:$0xf]
  %v115 = vld [vmem:[%s1 + $0xe8] sm:$0xf]
  %v116 = vld [vmem:[%s1 + $0xec] sm:$0xf]
  %v117 = vld [vmem:[%s1 + $0xf0] sm:$0xf]
  %v118 = vld [vmem:[%s1 + $0xf4] sm:$0xf]
  %v119 = vld [vmem:[%s1 + $0xf8] sm:$0xf]
  %v120 = vld [vmem:[%s1 + $0xfc] sm:$0xf]
  %v121 = vld [vmem:[%s2] sm:$0x1]
  %v123 = vlaneseq
  %v124 = vshrl.u32 %v123, 7
  %v125 = vsub.s32 0, %v124
  %v126 = vrot.slane %v121, %v125
  %v170 = vunpack.c.l.b16 %v15
  %v171 = vunpack.c.h.b16 %v15
  %v172 = vunpack.c.l.b16 %v16
  %v173 = vunpack.c.h.b16 %v16
  %v174 = vunpack.c.l.b16 %v17
  %v175 = vunpack.c.h.b16 %v17
  %v176 = vunpack.c.l.b16 %v18
  %v177 = vunpack.c.h.b16 %v18
  %v178 = vunpack.c.l.b16 %v19
  %v179 = vunpack.c.h.b16 %v19
  %v180 = vunpack.c.l.b16 %v20
  %v181 = vunpack.c.h.b16 %v20
  %v182 = vunpack.c.l.b16 %v21
  %v183 = vunpack.c.h.b16 %v21
  %v184 = vunpack.c.l.b16 %v22
  %v185 = vunpack.c.h.b16 %v22
  %v186 = vunpack.c.l.b16 %v23
  %v187 = vunpack.c.h.b16 %v23
  %v188 = vunpack.c.l.b16 %v24
  %v189 = vunpack.c.h.b16 %v24
  %v190 = vunpack.c.l.b16 %v25
  %v191 = vunpack.c.h.b16 %v25
  %v192 = vunpack.c.l.b16 %v26
  %v193 = vunpack.c.h.b16 %v26
  %v194 = vunpack.c.l.b16 %v27
  %v195 = vunpack.c.h.b16 %v27
  %v196 = vunpack.c.l.b16 %v28
  %v197 = vunpack.c.h.b16 %v28
  %v198 = vunpack.c.l.b16 %v29
  %v199 = vunpack.c.h.b16 %v29
  %v200 = vunpack.c.l.b16 %v30
  %v201 = vunpack.c.h.b16 %v30
  %v202 = vunpack.c.l.b16 %v31
  %v203 = vunpack.c.h.b16 %v31
  %v204 = vunpack.c.l.b16 %v32
  %v205 = vunpack.c.h.b16 %v32
  %v206 = vunpack.c.l.b16 %v33
  %v207 = vunpack.c.h.b16 %v33
  %v208 = vunpack.c.l.b16 %v34
  %v209 = vunpack.c.h.b16 %v34
  %v210 = vunpack.c.l.b16 %v35
  %v211 = vunpack.c.h.b16 %v35
  %v212 = vunpack.c.l.b16 %v36
  %v213 = vunpack.c.h.b16 %v36
  %v214 = vunpack.c.l.b16 %v37
  %v215 = vunpack.c.h.b16 %v37
  %v216 = vunpack.c.l.b16 %v38
  %v217 = vunpack.c.h.b16 %v38
  %v218 = vunpack.c.l.b16 %v39
  %v219 = vunpack.c.h.b16 %v39
  %v220 = vunpack.c.l.b16 %v40
  %v221 = vunpack.c.h.b16 %v40
  %v222 = vunpack.c.l.b16 %v41
  %v223 = vunpack.c.h.b16 %v41
  %v224 = vunpack.c.l.b16 %v42
  %v225 = vunpack.c.h.b16 %v42
  %v226 = vunpack.c.l.b16 %v43
  %v227 = vunpack.c.h.b16 %v43
  %v228 = vunpack.c.l.b16 %v44
  %v229 = vunpack.c.h.b16 %v44
  %v230 = vunpack.c.l.b16 %v45
  %v231 = vunpack.c.h.b16 %v45
  %v232 = vunpack.c.l.b16 %v46
  %v233 = vunpack.c.h.b16 %v46
  %v234 = vunpack.c.l.b16 %v47
  %v235 = vunpack.c.h.b16 %v47
  %v236 = vunpack.c.l.b16 %v48
  %v237 = vunpack.c.h.b16 %v48
  %v238 = vunpack.c.l.b16 %v49
  %v239 = vunpack.c.h.b16 %v49
  %v240 = vunpack.c.l.b16 %v50
  %v241 = vunpack.c.h.b16 %v50
  %v242 = vunpack.c.l.b16 %v51
  %v243 = vunpack.c.h.b16 %v51
  %v244 = vunpack.c.l.b16 %v52
  %v245 = vunpack.c.h.b16 %v52
  %v246 = vunpack.c.l.b16 %v53
  %v247 = vunpack.c.h.b16 %v53
  %v248 = vunpack.c.l.b16 %v54
  %v249 = vunpack.c.h.b16 %v54
  %v250 = vunpack.c.l.b16 %v55
  %v251 = vunpack.c.h.b16 %v55
  %v252 = vunpack.c.l.b16 %v56
  %v253 = vunpack.c.h.b16 %v56
  %v254 = vpack.c.b16 %v174, %v170
  %v255 = vpack.c.b16 %v175, %v171
  %v256 = vpack.c.b16 %v176, %v172
  %v257 = vpack.c.b16 %v177, %v173
  %v258 = vpack.c.b16 %v182, %v178
  %v259 = vpack.c.b16 %v183, %v179
  %v260 = vpack.c.b16 %v184, %v180
  %v261 = vpack.c.b16 %v185, %v181
  %v262 = vpack.c.b16 %v190, %v186
  %v263 = vpack.c.b16 %v191, %v187
  %v264 = vpack.c.b16 %v192, %v188
  %v265 = vpack.c.b16 %v193, %v189
  %v266 = vpack.c.b16 %v198, %v194
  %v267 = vpack.c.b16 %v199, %v195
  %v268 = vpack.c.b16 %v200, %v196
  %v269 = vpack.c.b16 %v201, %v197
  %v270 = vpack.c.b16 %v206, %v202
  %v271 = vpack.c.b16 %v207, %v203
  %v272 = vpack.c.b16 %v208, %v204
  %v273 = vpack.c.b16 %v209, %v205
  %v274 = vpack.c.b16 %v214, %v210
  %v275 = vpack.c.b16 %v215, %v211
  %v276 = vpack.c.b16 %v216, %v212
  %v277 = vpack.c.b16 %v217, %v213
  %v278 = vpack.c.b16 %v222, %v218
  %v279 = vpack.c.b16 %v223, %v219
  %v280 = vpack.c.b16 %v224, %v220
  %v281 = vpack.c.b16 %v225, %v221
  %v282 = vpack.c.b16 %v230, %v226
  %v283 = vpack.c.b16 %v231, %v227
  %v284 = vpack.c.b16 %v232, %v228
  %v285 = vpack.c.b16 %v233, %v229
  %v286 = vpack.c.b16 %v238, %v234
  %v287 = vpack.c.b16 %v239, %v235
  %v288 = vpack.c.b16 %v240, %v236
  %v289 = vpack.c.b16 %v241, %v237
  %v290 = vpack.c.b16 %v246, %v242
  %v291 = vpack.c.b16 %v247, %v243
  %v292 = vpack.c.b16 %v248, %v244
  %v293 = vpack.c.b16 %v249, %v245
  %v294 = vpack.c.b16 %v250, %v250
  %v295 = vpack.c.b16 %v251, %v251
  %v296 = vpack.c.b16 %v252, %v252
  %v297 = vpack.c.b16 %v253, %v253
  %v406 = vunpack.c.l.b16 %v57
  %v407 = vunpack.c.l.b16 %v58
  %v408 = vunpack.c.l.b16 %v59
  %v409 = vunpack.c.l.b16 %v60
  %v410 = vunpack.c.l.b16 %v61
  %v411 = vunpack.c.l.b16 %v62
  %v412 = vunpack.c.l.b16 %v63
  %v413 = vunpack.c.l.b16 %v64
  %v414 = vunpack.c.l.b16 %v65
  %v415 = vunpack.c.l.b16 %v66
  %v416 = vunpack.c.l.b16 %v67
  %v417 = vunpack.c.l.b16 %v68
  %v418 = vunpack.c.l.b16 %v69
  %v419 = vunpack.c.l.b16 %v70
  %v420 = vunpack.c.l.b16 %v71
  %v421 = vunpack.c.l.b16 %v72
  %v422 = vunpack.c.l.b16 %v73
  %v423 = vunpack.c.l.b16 %v74
  %v424 = vunpack.c.l.b16 %v75
  %v425 = vunpack.c.l.b16 %v76
  %v426 = vunpack.c.l.b16 %v77
  %v427 = vunpack.c.l.b16 %v78
  %v428 = vunpack.c.l.b16 %v79
  %v429 = vunpack.c.l.b16 %v80
  %v430 = vunpack.c.l.b16 %v81
  %v431 = vunpack.c.l.b16 %v82
  %v432 = vunpack.c.l.b16 %v83
  %v433 = vunpack.c.l.b16 %v84
  %v434 = vunpack.c.l.b16 %v85
  %v435 = vunpack.c.l.b16 %v86
  %v436 = vunpack.c.l.b16 %v87
  %v437 = vunpack.c.l.b16 %v88
  %v438 = vunpack.c.l.b16 %v89
  %v439 = vunpack.c.l.b16 %v90
  %v440 = vunpack.c.l.b16 %v91
  %v441 = vunpack.c.l.b16 %v92
  %v442 = vunpack.c.l.b16 %v93
  %v443 = vunpack.c.l.b16 %v94
  %v444 = vunpack.c.l.b16 %v95
  %v445 = vunpack.c.l.b16 %v96
  %v446 = vunpack.c.l.b16 %v97
  %v447 = vunpack.c.l.b16 %v98
  %v448 = vunpack.c.l.b16 %v99
  %v449 = vunpack.c.l.b16 %v100
  %v450 = vunpack.c.l.b16 %v101
  %v451 = vunpack.c.l.b16 %v102
  %v452 = vunpack.c.l.b16 %v103
  %v453 = vunpack.c.l.b16 %v104
  %v454 = vunpack.c.l.b16 %v105
  %v455 = vunpack.c.l.b16 %v106
  %v456 = vunpack.c.l.b16 %v107
  %v457 = vunpack.c.l.b16 %v108
  %v458 = vunpack.c.l.b16 %v109
  %v459 = vunpack.c.l.b16 %v110
  %v460 = vunpack.c.l.b16 %v111
  %v461 = vunpack.c.l.b16 %v112
  %v462 = vunpack.c.l.b16 %v113
  %v463 = vunpack.c.l.b16 %v114
  %v464 = vunpack.c.l.b16 %v115
  %v465 = vunpack.c.l.b16 %v116
  %v466 = vunpack.c.l.b16 %v117
  %v467 = vunpack.c.l.b16 %v118
  %v468 = vunpack.c.l.b16 %v119
  %v469 = vunpack.c.l.b16 %v120
  %v470 = vpack.c.b16 %v407, %v406
  %v471 = vpack.c.b16 %v409, %v408
  %v472 = vpack.c.b16 %v411, %v410
  %v473 = vpack.c.b16 %v413, %v412
  %v474 = vpack.c.b16 %v415, %v414
  %v475 = vpack.c.b16 %v417, %v416
  %v476 = vpack.c.b16 %v419, %v418
  %v477 = vpack.c.b16 %v421, %v420
  %v478 = vpack.c.b16 %v423, %v422
  %v479 = vpack.c.b16 %v425, %v424
  %v480 = vpack.c.b16 %v427, %v426
  %v481 = vpack.c.b16 %v429, %v428
  %v482 = vpack.c.b16 %v431, %v430
  %v483 = vpack.c.b16 %v433, %v432
  %v484 = vpack.c.b16 %v435, %v434
  %v485 = vpack.c.b16 %v437, %v436
  %v486 = vpack.c.b16 %v439, %v438
  %v487 = vpack.c.b16 %v441, %v440
  %v488 = vpack.c.b16 %v443, %v442
  %v489 = vpack.c.b16 %v445, %v444
  %v490 = vpack.c.b16 %v447, %v446
  %v491 = vpack.c.b16 %v449, %v448
  %v492 = vpack.c.b16 %v451, %v450
  %v493 = vpack.c.b16 %v453, %v452
  %v494 = vpack.c.b16 %v455, %v454
  %v495 = vpack.c.b16 %v457, %v456
  %v496 = vpack.c.b16 %v459, %v458
  %v497 = vpack.c.b16 %v461, %v460
  %v498 = vpack.c.b16 %v463, %v462
  %v499 = vpack.c.b16 %v465, %v464
  %v500 = vpack.c.b16 %v467, %v466
  %v501 = vpack.c.b16 %v469, %v468
  %534 = vmatprep.subr.bf16.mxu0 0
  %535 = vmatpush1.bf16.msra.mxu0 %v470
  %536 = vmatprep.subr.bf16.mxu0 0
  %537 = vmatpush1.bf16.msra.mxu0 %v471
  %538 = vmatprep.subr.bf16.mxu0 0
  %539 = vmatpush1.bf16.msra.mxu0 %v472
  %540 = vmatprep.subr.bf16.mxu0 0
  %541 = vmatpush1.bf16.msra.mxu0 %v473
  %542 = vmatprep.subr.bf16.mxu0 0
  %543 = vmatpush1.bf16.msra.mxu0 %v474
  %544 = vmatprep.subr.bf16.mxu0 0
  %545 = vmatpush1.bf16.msra.mxu0 %v475
  %546 = vmatprep.subr.bf16.mxu0 0
  %547 = vmatpush1.bf16.msra.mxu0 %v476
  %548 = vmatprep.subr.bf16.mxu0 0
  %549 = vmatpush1.bf16.msra.mxu0 %v477
  %550 = vmatprep.subr.bf16.mxu0 0
  %551 = vmatpush1.bf16.msra.mxu0 %v478
  %552 = vmatprep.subr.bf16.mxu0 0
  %553 = vmatpush1.bf16.msra.mxu0 %v479
  %554 = vmatprep.subr.bf16.mxu0 0
  %555 = vmatpush1.bf16.msra.mxu0 %v480
  %556 = vmatprep.subr.bf16.mxu0 0
  %557 = vmatpush1.bf16.msra.mxu0 %v481
  %558 = vmatprep.subr.bf16.mxu0 0
  %559 = vmatpush1.bf16.msra.mxu0 %v482
  %560 = vmatprep.subr.bf16.mxu0 0
  %561 = vmatpush1.bf16.msra.mxu0 %v483
  %562 = vmatprep.subr.bf16.mxu0 0
  %563 = vmatpush1.bf16.msra.mxu0 %v484
  %564 = vmatprep.subr.bf16.mxu0 0
  %565 = vmatpush1.bf16.msra.mxu0 %v485
  %566 = vmatprep.mubr.bf16.mxu0 %v255
  %567 = vmatmul.mubr.bf16.gmra.mrb[0].mxu0 %v254
  %v568 = vpop.f32.mrb[0].mxu0
  %v569 = vadd.f32 %v126, %v568
  %v570 = vpop.f32.mrb[0].mxu0
  %v571 = vpop.f32.mrb[0].mxu0
  %v572 = vadd.f32 %v126, %v571
  %v573 = vpop.f32.mrb[0].mxu0
  %574 = vmatprep.mubr.bf16.mxu0 %v259
  %575 = vmatmul.mubr.bf16.gmra.mrb[0].mxu0 %v258
  %v576 = vpop.f32.mrb[0].mxu0
  %v577 = vadd.f32 %v126, %v576
  %v578 = vpop.f32.mrb[0].mxu0
  %v579 = vpop.f32.mrb[0].mxu0
  %v580 = vadd.f32 %v126, %v579
  %v581 = vpop.f32.mrb[0].mxu0
  %582 = vmatprep.mubr.bf16.mxu0 %v263
  %583 = vmatmul.mubr.bf16.gmra.mrb[0].mxu0 %v262
  %v584 = vpop.f32.mrb[0].mxu0
  %v585 = vadd.f32 %v126, %v584
  %v586 = vpop.f32.mrb[0].mxu0
  %v587 = vpop.f32.mrb[0].mxu0
  %v588 = vadd.f32 %v126, %v587
  %v589 = vpop.f32.mrb[0].mxu0
  %590 = vmatprep.mubr.bf16.mxu0 %v267
  %591 = vmatmul.mubr.bf16.gmra.mrb[0].mxu0 %v266
  %v592 = vpop.f32.mrb[0].mxu0
  %v593 = vadd.f32 %v126, %v592
  %v594 = vpop.f32.mrb[0].mxu0
  %v595 = vpop.f32.mrb[0].mxu0
  %v596 = vadd.f32 %v126, %v595
  %v597 = vpop.f32.mrb[0].mxu0
  %598 = vmatprep.mubr.bf16.mxu0 %v271
  %599 = vmatmul.mubr.bf16.gmra.mrb[0].mxu0 %v270
  %v600 = vpop.f32.mrb[0].mxu0
  %v601 = vadd.f32 %v126, %v600
  %v602 = vpop.f32.mrb[0].mxu0
  %v603 = vpop.f32.mrb[0].mxu0
  %v604 = vadd.f32 %v126, %v603
  %v605 = vpop.f32.mrb[0].mxu0
  %606 = vmatprep.mubr.bf16.mxu0 %v275
  %607 = vmatmul.mubr.bf16.gmra.mrb[0].mxu0 %v274
  %v608 = vpop.f32.mrb[0].mxu0
  %v609 = vadd.f32 %v126, %v608
  %v610 = vpop.f32.mrb[0].mxu0
  %v611 = vpop.f32.mrb[0].mxu0
  %v612 = vadd.f32 %v126, %v611
  %v613 = vpop.f32.mrb[0].mxu0
  %614 = vmatprep.mubr.bf16.mxu0 %v279
  %615 = vmatmul.mubr.bf16.gmra.mrb[0].mxu0 %v278
  %v616 = vpop.f32.mrb[0].mxu0
  %v617 = vadd.f32 %v126, %v616
  %v618 = vpop.f32.mrb[0].mxu0
  %v619 = vpop.f32.mrb[0].mxu0
  %v620 = vadd.f32 %v126, %v619
  %v621 = vpop.f32.mrb[0].mxu0
  %622 = vmatprep.mubr.bf16.mxu0 %v283
  %623 = vmatmul.mubr.bf16.gmra.mrb[0].mxu0 %v282
  %v624 = vpop.f32.mrb[0].mxu0
  %v625 = vadd.f32 %v126, %v624
  %v626 = vpop.f32.mrb[0].mxu0
  %v627 = vpop.f32.mrb[0].mxu0
  %v628 = vadd.f32 %v126, %v627
  %v629 = vpop.f32.mrb[0].mxu0
  %630 = vmatprep.mubr.bf16.mxu0 %v287
  %631 = vmatmul.mubr.bf16.gmra.mrb[0].mxu0 %v286
  %v632 = vpop.f32.mrb[0].mxu0
  %v633 = vadd.f32 %v126, %v632
  %v634 = vpop.f32.mrb[0].mxu0
  %v635 = vpop.f32.mrb[0].mxu0
  %v636 = vadd.f32 %v126, %v635
  %v637 = vpop.f32.mrb[0].mxu0
  %638 = vmatprep.mubr.bf16.mxu0 %v291
  %639 = vmatmul.mubr.bf16.gmra.mrb[0].mxu0 %v290
  %v640 = vpop.f32.mrb[0].mxu0
  %v641 = vadd.f32 %v126, %v640
  %v642 = vpop.f32.mrb[0].mxu0
  %v643 = vpop.f32.mrb[0].mxu0
  %v644 = vadd.f32 %v126, %v643
  %v645 = vpop.f32.mrb[0].mxu0
  %646 = vmatprep.mubr.bf16.mxu0 %v295
  %647 = vmatmul.mubr.bf16.gmra.mrb[0].mxu0 %v294
  %v648 = vpop.f32.mrb[0].mxu0
  %v649 = vadd.f32 %v126, %v648
  %v650 = vpop.f32.mrb[0].mxu0
  %v651 = vpop.f32.mrb[0].mxu0
  %v652 = vpop.f32.mrb[0].mxu0
  %653 = vdwg.mxu0
  %654 = vmatprep.subr.bf16.mxu0 0
  %655 = vmatpush1.bf16.msra.mxu0 %v486
  %656 = vmatprep.subr.bf16.mxu0 0
  %657 = vmatpush1.bf16.msra.mxu0 %v487
  %658 = vmatprep.subr.bf16.mxu0 0
  %659 = vmatpush1.bf16.msra.mxu0 %v488
  %660 = vmatprep.subr.bf16.mxu0 0
  %661 = vmatpush1.bf16.msra.mxu0 %v489
  %662 = vmatprep.subr.bf16.mxu0 0
  %663 = vmatpush1.bf16.msra.mxu0 %v490
  %664 = vmatprep.subr.bf16.mxu0 0
  %665 = vmatpush1.bf16.msra.mxu0 %v491
  %666 = vmatprep.subr.bf16.mxu0 0
  %667 = vmatpush1.bf16.msra.mxu0 %v492
  %668 = vmatprep.subr.bf16.mxu0 0
  %669 = vmatpush1.bf16.msra.mxu0 %v493
  %670 = vmatprep.subr.bf16.mxu0 0
  %671 = vmatpush1.bf16.msra.mxu0 %v494
  %672 = vmatprep.subr.bf16.mxu0 0
  %673 = vmatpush1.bf16.msra.mxu0 %v495
  %674 = vmatprep.subr.bf16.mxu0 0
  %675 = vmatpush1.bf16.msra.mxu0 %v496
  %676 = vmatprep.subr.bf16.mxu0 0
  %677 = vmatpush1.bf16.msra.mxu0 %v497
  %678 = vmatprep.subr.bf16.mxu0 0
  %679 = vmatpush1.bf16.msra.mxu0 %v498
  %680 = vmatprep.subr.bf16.mxu0 0
  %681 = vmatpush1.bf16.msra.mxu0 %v499
  %682 = vmatprep.subr.bf16.mxu0 0
  %683 = vmatpush1.bf16.msra.mxu0 %v500
  %684 = vmatprep.subr.bf16.mxu0 0
  %685 = vmatpush1.bf16.msra.mxu0 %v501
  %686 = vmatprep.mubr.bf16.mxu0 %v257
  %687 = vmatmul.mubr.bf16.gmra.mrb[0].mxu0 %v256
  %v688 = vpop.f32.mrb[0].mxu0
  %v689 = vadd.f32 %v569, %v688
  %v690 = vpop.f32.mrb[0].mxu0
  %v691 = vpop.f32.mrb[0].mxu0
  %v692 = vadd.f32 %v572, %v691
  %v693 = vpop.f32.mrb[0].mxu0
  %694 = vmatprep.mubr.bf16.mxu0 %v261
  %695 = vmatmul.mubr.bf16.gmra.mrb[0].mxu0 %v260
  %v696 = vpop.f32.mrb[0].mxu0
  %v697 = vadd.f32 %v577, %v696
  %v698 = vpop.f32.mrb[0].mxu0
  %v699 = vpop.f32.mrb[0].mxu0
  %v700 = vadd.f32 %v580, %v699
  %v701 = vpop.f32.mrb[0].mxu0
  %702 = vmatprep.mubr.bf16.mxu0 %v265
  %703 = vmatmul.mubr.bf16.gmra.mrb[0].mxu0 %v264
  %v704 = vpop.f32.mrb[0].mxu0
  %v705 = vadd.f32 %v585, %v704
  %v706 = vpop.f32.mrb[0].mxu0
  %v707 = vpop.f32.mrb[0].mxu0
  %v708 = vadd.f32 %v588, %v707
  %v709 = vpop.f32.mrb[0].mxu0
  %710 = vmatprep.mubr.bf16.mxu0 %v269
  %711 = vmatmul.mubr.bf16.gmra.mrb[0].mxu0 %v268
  %v712 = vpop.f32.mrb[0].mxu0
  %v713 = vadd.f32 %v593, %v712
  %v714 = vpop.f32.mrb[0].mxu0
  %v715 = vpop.f32.mrb[0].mxu0
  %v716 = vadd.f32 %v596, %v715
  %v717 = vpop.f32.mrb[0].mxu0
  %718 = vmatprep.mubr.bf16.mxu0 %v273
  %719 = vmatmul.mubr.bf16.gmra.mrb[0].mxu0 %v272
  %v720 = vpop.f32.mrb[0].mxu0
  %v721 = vadd.f32 %v601, %v720
  %v722 = vpop.f32.mrb[0].mxu0
  %v723 = vpop.f32.mrb[0].mxu0
  %v724 = vadd.f32 %v604, %v723
  %v725 = vpop.f32.mrb[0].mxu0
  %726 = vmatprep.mubr.bf16.mxu0 %v277
  %727 = vmatmul.mubr.bf16.gmra.mrb[0].mxu0 %v276
  %v728 = vpop.f32.mrb[0].mxu0
  %v729 = vadd.f32 %v609, %v728
  %v730 = vpop.f32.mrb[0].mxu0
  %v731 = vpop.f32.mrb[0].mxu0
  %v732 = vadd.f32 %v612, %v731
  %v733 = vpop.f32.mrb[0].mxu0
  %734 = vmatprep.mubr.bf16.mxu0 %v281
  %735 = vmatmul.mubr.bf16.gmra.mrb[0].mxu0 %v280
  %v736 = vpop.f32.mrb[0].mxu0
  %v737 = vadd.f32 %v617, %v736
  %v738 = vpop.f32.mrb[0].mxu0
  %v739 = vpop.f32.mrb[0].mxu0
  %v740 = vadd.f32 %v620, %v739
  %v741 = vpop.f32.mrb[0].mxu0
  %742 = vmatprep.mubr.bf16.mxu0 %v285
  %743 = vmatmul.mubr.bf16.gmra.mrb[0].mxu0 %v284
  %v744 = vpop.f32.mrb[0].mxu0
  %v745 = vadd.f32 %v625, %v744
  %v746 = vpop.f32.mrb[0].mxu0
  %v747 = vpop.f32.mrb[0].mxu0
  %v748 = vadd.f32 %v628, %v747
  %v749 = vpop.f32.mrb[0].mxu0
  %750 = vmatprep.mubr.bf16.mxu0 %v289
  %751 = vmatmul.mubr.bf16.gmra.mrb[0].mxu0 %v288
  %v752 = vpop.f32.mrb[0].mxu0
  %v753 = vadd.f32 %v633, %v752
  %v754 = vpop.f32.mrb[0].mxu0
  %v755 = vpop.f32.mrb[0].mxu0
  %v756 = vadd.f32 %v636, %v755
  %v757 = vpop.f32.mrb[0].mxu0
  %758 = vmatprep.mubr.bf16.mxu0 %v293
  %759 = vmatmul.mubr.bf16.gmra.mrb[0].mxu0 %v292
  %v760 = vpop.f32.mrb[0].mxu0
  %v761 = vadd.f32 %v641, %v760
  %v762 = vpop.f32.mrb[0].mxu0
  %v763 = vpop.f32.mrb[0].mxu0
  %v764 = vadd.f32 %v644, %v763
  %v765 = vpop.f32.mrb[0].mxu0
  %766 = vmatprep.mubr.bf16.mxu0 %v297
  %767 = vmatmul.mubr.bf16.gmra.mrb[0].mxu0 %v296
  %v768 = vpop.f32.mrb[0].mxu0
  %v769 = vadd.f32 %v649, %v768
  %v770 = vpop.f32.mrb[0].mxu0
  %v771 = vpop.f32.mrb[0].mxu0
  %v772 = vpop.f32.mrb[0].mxu0
  %773 = vdwg.mxu0
  %v774 = vmax.f32 %v689, 0.0
  %v775 = vmax.f32 %v692, 0.0
  %v776 = vmax.f32 %v697, 0.0
  %v777 = vmax.f32 %v700, 0.0
  %v778 = vmax.f32 %v705, 0.0
  %v779 = vmax.f32 %v708, 0.0
  %v780 = vmax.f32 %v713, 0.0
  %v781 = vmax.f32 %v716, 0.0
  %v782 = vmax.f32 %v721, 0.0
  %v783 = vmax.f32 %v724, 0.0
  %v784 = vmax.f32 %v729, 0.0
  %v785 = vmax.f32 %v732, 0.0
  %v786 = vmax.f32 %v737, 0.0
  %v787 = vmax.f32 %v740, 0.0
  %v788 = vmax.f32 %v745, 0.0
  %v789 = vmax.f32 %v748, 0.0
  %v790 = vmax.f32 %v753, 0.0
  %v791 = vmax.f32 %v756, 0.0
  %v792 = vmax.f32 %v761, 0.0
  %v793 = vmax.f32 %v764, 0.0
  %v794 = vmax.f32 %v769, 0.0
  %v795 = vpack.c.bf16 %v775, %v774
  %v796 = vpack.c.bf16 %v777, %v776
  %v797 = vpack.c.bf16 %v779, %v778
  %v798 = vpack.c.bf16 %v781, %v780
  %v799 = vpack.c.bf16 %v783, %v782
  %v800 = vpack.c.bf16 %v785, %v784
  %v801 = vpack.c.bf16 %v787, %v786
  %v802 = vpack.c.bf16 %v789, %v788
  %v803 = vpack.c.bf16 %v791, %v790
  %v804 = vpack.c.bf16 %v793, %v792
  %v805 = vpack.c.bf16 %v794, %v794
  %v817 = vunpack.c.l.b16 %v795
  %v818 = vunpack.c.h.b16 %v795
  %v819 = vunpack.c.l.b16 %v796
  %v820 = vunpack.c.h.b16 %v796
  %v821 = vunpack.c.l.b16 %v797
  %v822 = vunpack.c.h.b16 %v797
  %v823 = vunpack.c.l.b16 %v798
  %v824 = vunpack.c.h.b16 %v798
  %v825 = vunpack.c.l.b16 %v799
  %v826 = vunpack.c.h.b16 %v799
  %v827 = vunpack.c.l.b16 %v800
  %v828 = vunpack.c.h.b16 %v800
  %v829 = vunpack.c.l.b16 %v801
  %v830 = vunpack.c.h.b16 %v801
  %v831 = vunpack.c.l.b16 %v802
  %v832 = vunpack.c.h.b16 %v802
  %v833 = vunpack.c.l.b16 %v803
  %v834 = vunpack.c.h.b16 %v803
  %v835 = vunpack.c.l.b16 %v804
  %v836 = vunpack.c.h.b16 %v804
  %v837 = vunpack.c.l.b16 %v805
  %v838 = vpack.c.b16 %v817, %v817
  %v839 = vpack.c.b16 %v818, %v818
  %v840 = vpack.c.b16 %v819, %v819
  %v841 = vpack.c.b16 %v820, %v820
  %v842 = vpack.c.b16 %v821, %v821
  %v843 = vpack.c.b16 %v822, %v822
  %v844 = vpack.c.b16 %v823, %v823
  %v845 = vpack.c.b16 %v824, %v824
  %v846 = vpack.c.b16 %v825, %v825
  %v847 = vpack.c.b16 %v826, %v826
  %v848 = vpack.c.b16 %v827, %v827
  %v849 = vpack.c.b16 %v828, %v828
  %v850 = vpack.c.b16 %v829, %v829
  %v851 = vpack.c.b16 %v830, %v830
  %v852 = vpack.c.b16 %v831, %v831
  %v853 = vpack.c.b16 %v832, %v832
  %v854 = vpack.c.b16 %v833, %v833
  %v855 = vpack.c.b16 %v834, %v834
  %v856 = vpack.c.b16 %v835, %v835
  %v857 = vpack.c.b16 %v836, %v836
  %v858 = vpack.c.b16 %v837, %v837
  %vm880 = vcmask 519168
  %881 = vst.msk [vmem:[%s3] sm:$0xf] %vm880, %v838
  %882 = vst.msk [vmem:[%s3 + $0x4] sm:$0xf] %vm880, %v839
  %883 = vst.msk [vmem:[%s3 + $0x8] sm:$0xf] %vm880, %v840
  %884 = vst.msk [vmem:[%s3 + $0xc] sm:$0xf] %vm880, %v841
  %885 = vst.msk [vmem:[%s3 + $0x10] sm:$0xf] %vm880, %v842
  %886 = vst.msk [vmem:[%s3 + $0x14] sm:$0xf] %vm880, %v843
  %887 = vst.msk [vmem:[%s3 + $0x18] sm:$0xf] %vm880, %v844
  %888 = vst.msk [vmem:[%s3 + $0x1c] sm:$0xf] %vm880, %v845
  %889 = vst.msk [vmem:[%s3 + $0x20] sm:$0xf] %vm880, %v846
  %890 = vst.msk [vmem:[%s3 + $0x24] sm:$0xf] %vm880, %v847
  %891 = vst.msk [vmem:[%s3 + $0x28] sm:$0xf] %vm880, %v848
  %892 = vst.msk [vmem:[%s3 + $0x2c] sm:$0xf] %vm880, %v849
  %893 = vst.msk [vmem:[%s3 + $0x30] sm:$0xf] %vm880, %v850
  %894 = vst.msk [vmem:[%s3 + $0x34] sm:$0xf] %vm880, %v851
  %895 = vst.msk [vmem:[%s3 + $0x38] sm:$0xf] %vm880, %v852
  %896 = vst.msk [vmem:[%s3 + $0x3c] sm:$0xf] %vm880, %v853
  %897 = vst.msk [vmem:[%s3 + $0x40] sm:$0xf] %vm880, %v854
  %898 = vst.msk [vmem:[%s3 + $0x44] sm:$0xf] %vm880, %v855
  %899 = vst.msk [vmem:[%s3 + $0x48] sm:$0xf] %vm880, %v856
  %900 = vst.msk [vmem:[%s3 + $0x4c] sm:$0xf] %vm880, %v857
  %901 = vst.msk [vmem:[%s3 + $0x50] sm:$0xf] %vm880, %v858
  // Predicated region
  $region14: #{da1qn_forward.5} parent=0 // pred_check
    _
  $region15: #{da1qn_forward.5} parent=0 // pred_check_branch
    %903 = sbr.rel (0) target = $region17
  $region16: #{da1qn_forward.5} parent=0 // pred_region
    _
  $region17: #{da1qn_forward.5} parent=0 // pred_fallthru
    _
  // Predicated region
  $region18: #{da1qn_forward.5} parent=0 // pred_check
    _
  $region19: #{da1qn_forward.5} parent=0 // pred_check_branch
    %905 = sbr.rel (0) target = $region21
  $region20: #{da1qn_forward.5} parent=0 // pred_region
    _
  $region21: #{da1qn_forward.5} parent=0 // pred_fallthru
    _

// kernel: da1qn_forward.6
$region0: #{da1qn_forward.6}
  #allocation0 [shape = 'u32[]', space=smem, size = 0x4, offset = 0x4, fixed_abs, tag = 'smem constant byte address 0x4 - core index']
  #allocation1 [shape = 'u32[144,128]{1,0:T(1,128)}', space=vmem, size = 0x12000, scoped, tag = 'internal scratch']
  %s0 = inlined_call_operand.vmem [shape: bf16[98,576], index: 0, kind: input, shape index: {}]
  %s1 = inlined_call_operand.vmem [shape: bf16[576,64], index: 1, kind: input, shape index: {}]
  %s2 = inlined_call_operand.vmem [shape: f32[1,64], index: 2, kind: input, shape index: {}]
  %s3 = inlined_call_operand.vmem [shape: bf16[64,32], index: 3, kind: input, shape index: {}]
  %s4 = inlined_call_operand.vmem [shape: f32[1,32], index: 4, kind: input, shape index: {}]
  %s5 = inlined_call_operand.vmem [shape: bf16[98,64], index: 5, kind: output, shape index: {0}]
  %s6 = inlined_call_operand.vmem [shape: bf16[98,32], index: 6, kind: output, shape index: {1}]
  %7 = xla_tuple %s5, %s6
  %s8 = sld [smem:[#allocation0]]
  $region38: #{da1qn_forward.6} parent=0
    _
  %s10 = ssub.s32 1, %s8
  %s11 = scalar_select 0, %s10, %s8
  // Predicated region
  $region2: #{da1qn_forward.6} parent=0 // pred_check
    _
  $region3: #{da1qn_forward.6} parent=0 // pred_check_branch
    %13 = sbr.rel (0) target = $region5
  $region4: #{da1qn_forward.6} parent=0 // pred_region
    _
  $region5: #{da1qn_forward.6} parent=0 // pred_fallthru
    _
  // Predicated region
  $region6: #{da1qn_forward.6} parent=0 // pred_check
    _
  $region7: #{da1qn_forward.6} parent=0 // pred_check_branch
    %15 = sbr.rel (0) target = $region9
  $region8: #{da1qn_forward.6} parent=0 // pred_region
    _
  $region9: #{da1qn_forward.6} parent=0 // pred_fallthru
    _
  // Predicated region
  $region10: #{da1qn_forward.6} parent=0 // pred_check
    _
  $region11: #{da1qn_forward.6} parent=0 // pred_check_branch
    %17 = sbr.rel (0) target = $region13
  $region12: #{da1qn_forward.6} parent=0 // pred_region
    _
  $region13: #{da1qn_forward.6} parent=0 // pred_fallthru
    _
  // Predicated region
  $region14: #{da1qn_forward.6} parent=0 // pred_check
    _
  $region15: #{da1qn_forward.6} parent=0 // pred_check_branch
    %19 = sbr.rel (0) target = $region17
  $region16: #{da1qn_forward.6} parent=0 // pred_region
    _
  $region17: #{da1qn_forward.6} parent=0 // pred_fallthru
    _
  // Predicated region
  $region18: #{da1qn_forward.6} parent=0 // pred_check
    _
  $region19: #{da1qn_forward.6} parent=0 // pred_check_branch
    %21 = sbr.rel (0) target = $region21
  $region20: #{da1qn_forward.6} parent=0 // pred_region
    _
  $region21: #{da1qn_forward.6} parent=0 // pred_fallthru
    _
  %v23 = vld [vmem:[%s0] sm:$0xff]
  %v24 = vld [vmem:[%s0 + $0x8] sm:$0xff]
  %v25 = vld [vmem:[%s0 + $0x10] sm:$0xf]
  %v26 = vld [vmem:[%s0 + $0x14] sm:$0xff]
  %v27 = vld [vmem:[%s0 + $0x1c] sm:$0xff]
  %v28 = vld [vmem:[%s0 + $0x24] sm:$0xf]
  %v29 = vld [vmem:[%s0 + $0x28] sm:$0xff]
  %v30 = vld [vmem:[%s0 + $0x30] sm:$0xff]
  %v31 = vld [vmem:[%s0 + $0x38] sm:$0xf]
  %v32 = vld [vmem:[%s0 + $0x3c] sm:$0xff]
  %v33 = vld [vmem:[%s0 + $0x44] sm:$0xff]
  %v34 = vld [vmem:[%s0 + $0x4c] sm:$0xf]
  %v35 = vld [vmem:[%s0 + $0x50] sm:$0xff]
  %v36 = vld [vmem:[%s0 + $0x58] sm:$0xff]
  %v37 = vld [vmem:[%s0 + $0x60] sm:$0xf]
  %v38 = vld [vmem:[%s0 + $0x64] sm:$0xff]
  %v39 = vld [vmem:[%s0 + $0x6c] sm:$0xff]
  %v40 = vld [vmem:[%s0 + $0x74] sm:$0xf]
  %v41 = vld [vmem:[%s0 + $0x78] sm:$0xff]
  %v42 = vld [vmem:[%s0 + $0x80] sm:$0xff]
  %v43 = vld [vmem:[%s0 + $0x88] sm:$0xf]
  %v44 = vld [vmem:[%s0 + $0x8c] sm:$0xff]
  %v45 = vld [vmem:[%s0 + $0x94] sm:$0xff]
  %v46 = vld [vmem:[%s0 + $0x9c] sm:$0xf]
  %v47 = vld [vmem:[%s0 + $0xa0] sm:$0xff]
  %v48 = vld [vmem:[%s0 + $0xa8] sm:$0xff]
  %v49 = vld [vmem:[%s0 + $0xb0] sm:$0xf]
  %v50 = vld [vmem:[%s0 + $0xb4] sm:$0xff]
  %v51 = vld [vmem:[%s0 + $0xbc] sm:$0xff]
  %v52 = vld [vmem:[%s0 + $0xc4] sm:$0xf]
  %v53 = vld [vmem:[%s0 + $0xc8] sm:$0xff]
  %v54 = vld [vmem:[%s0 + $0xd0] sm:$0xff]
  %v55 = vld [vmem:[%s0 + $0xd8] sm:$0xf]
  %v56 = vld [vmem:[%s0 + $0xdc] sm:$0xff]
  %v57 = vld [vmem:[%s0 + $0xe4] sm:$0xff]
  %v58 = vld [vmem:[%s0 + $0xec] sm:$0xf]
  %v59 = vld [vmem:[%s0 + $0xf0] sm:$0xff]
  %v60 = vld [vmem:[%s0 + $0xf8] sm:$0xff]
  %v61 = vld [vmem:[%s0 + $0x100] sm:$0xf]
  %v62 = vld [vmem:[%s1] sm:$0xf]
  %v63 = vld [vmem:[%s1 + $0x4] sm:$0xf]
  %v64 = vld [vmem:[%s1 + $0x8] sm:$0xf]
  %v65 = vld [vmem:[%s1 + $0xc] sm:$0xf]
  %v66 = vld [vmem:[%s1 + $0x10] sm:$0xf]
  %v67 = vld [vmem:[%s1 + $0x14] sm:$0xf]
  %v68 = vld [vmem:[%s1 + $0x18] sm:$0xf]
  %v69 = vld [vmem:[%s1 + $0x1c] sm:$0xf]
  %v70 = vld [vmem:[%s1 + $0x20] sm:$0xf]
  %v71 = vld [vmem:[%s1 + $0x24] sm:$0xf]
  %v72 = vld [vmem:[%s1 + $0x28] sm:$0xf]
  %v73 = vld [vmem:[%s1 + $0x2c] sm:$0xf]
  %v74 = vld [vmem:[%s1 + $0x30] sm:$0xf]
  %v75 = vld [vmem:[%s1 + $0x34] sm:$0xf]
  %v76 = vld [vmem:[%s1 + $0x38] sm:$0xf]
  %v77 = vld [vmem:[%s1 + $0x3c] sm:$0xf]
  %v78 = vld [vmem:[%s1 + $0x40] sm:$0xf]
  %v79 = vld [vmem:[%s1 + $0x44] sm:$0xf]
  %v80 = vld [vmem:[%s1 + $0x48] sm:$0xf]
  %v81 = vld [vmem:[%s1 + $0x4c] sm:$0xf]
  %v82 = vld [vmem:[%s1 + $0x50] sm:$0xf]
  %v83 = vld [vmem:[%s1 + $0x54] sm:$0xf]
  %v84 = vld [vmem:[%s1 + $0x58] sm:$0xf]
  %v85 = vld [vmem:[%s1 + $0x5c] sm:$0xf]
  %v86 = vld [vmem:[%s1 + $0x60] sm:$0xf]
  %v87 = vld [vmem:[%s1 + $0x64] sm:$0xf]
  %v88 = vld [vmem:[%s1 + $0x68] sm:$0xf]
  %v89 = vld [vmem:[%s1 + $0x6c] sm:$0xf]
  %v90 = vld [vmem:[%s1 + $0x70] sm:$0xf]
  %v91 = vld [vmem:[%s1 + $0x74] sm:$0xf]
  %v92 = vld [vmem:[%s1 + $0x78] sm:$0xf]
  %v93 = vld [vmem:[%s1 + $0x7c] sm:$0xf]
  %v94 = vld [vmem:[%s1 + $0x80] sm:$0xf]
  %v95 = vld [vmem:[%s1 + $0x84] sm:$0xf]
  %v96 = vld [vmem:[%s1 + $0x88] sm:$0xf]
  %v97 = vld [vmem:[%s1 + $0x8c] sm:$0xf]
  %v98 = vld [vmem:[%s1 + $0x90] sm:$0xf]
  %v99 = vld [vmem:[%s1 + $0x94] sm:$0xf]
  %v100 = vld [vmem:[%s1 + $0x98] sm:$0xf]
  %v101 = vld [vmem:[%s1 + $0x9c] sm:$0xf]
  %v102 = vld [vmem:[%s1 + $0xa0] sm:$0xf]
  %v103 = vld [vmem:[%s1 + $0xa4] sm:$0xf]
  %v104 = vld [vmem:[%s1 + $0xa8] sm:$0xf]
  %v105 = vld [vmem:[%s1 + $0xac] sm:$0xf]
  %v106 = vld [vmem:[%s1 + $0xb0] sm:$0xf]
  %v107 = vld [vmem:[%s1 + $0xb4] sm:$0xf]
  %v108 = vld [vmem:[%s1 + $0xb8] sm:$0xf]
  %v109 = vld [vmem:[%s1 + $0xbc] sm:$0xf]
  %v110 = vld [vmem:[%s1 + $0xc0] sm:$0xf]
  %v111 = vld [vmem:[%s1 + $0xc4] sm:$0xf]
  %v112 = vld [vmem:[%s1 + $0xc8] sm:$0xf]
  %v113 = vld [vmem:[%s1 + $0xcc] sm:$0xf]
  %v114 = vld [vmem:[%s1 + $0xd0] sm:$0xf]
  %v115 = vld [vmem:[%s1 + $0xd4] sm:$0xf]
  %v116 = vld [vmem:[%s1 + $0xd8] sm:$0xf]
  %v117 = vld [vmem:[%s1 + $0xdc] sm:$0xf]
  %v118 = vld [vmem:[%s1 + $0xe0] sm:$0xf]
  %v119 = vld [vmem:[%s1 + $0xe4] sm:$0xf]
  %v120 = vld [vmem:[%s1 + $0xe8] sm:$0xf]
  %v121 = vld [vmem:[%s1 + $0xec] sm:$0xf]
  %v122 = vld [vmem:[%s1 + $0xf0] sm:$0xf]
  %v123 = vld [vmem:[%s1 + $0xf4] sm:$0xf]
  %v124 = vld [vmem:[%s1 + $0xf8] sm:$0xf]
  %v125 = vld [vmem:[%s1 + $0xfc] sm:$0xf]
  %v126 = vld [vmem:[%s1 + $0x100] sm:$0xf]
  %v127 = vld [vmem:[%s1 + $0x104] sm:$0xf]
  %v128 = vld [vmem:[%s1 + $0x108] sm:$0xf]
  %v129 = vld [vmem:[%s1 + $0x10c] sm:$0xf]
  %v130 = vld [vmem:[%s1 + $0x110] sm:$0xf]
  %v131 = vld [vmem:[%s1 + $0x114] sm:$0xf]
  %v132 = vld [vmem:[%s1 + $0x118] sm:$0xf]
  %v133 = vld [vmem:[%s1 + $0x11c] sm:$0xf]
  %v134 = vld [vmem:[%s2] sm:$0x1]
  %v136 = vlaneseq
  %v137 = vshrl.u32 %v136, 7
  %v138 = vsub.s32 0, %v137
  %v139 = vrot.slane %v134, %v138
  %v180 = vunpack.c.l.b16 %v23
  %v181 = vunpack.c.h.b16 %v23
  %v182 = vunpack.c.l.b16 %v24
  %v183 = vunpack.c.h.b16 %v24
  %v184 = vunpack.c.l.b16 %v25
  %v185 = vunpack.c.l.b16 %v26
  %v186 = vunpack.c.h.b16 %v26
  %v187 = vunpack.c.l.b16 %v27
  %v188 = vunpack.c.h.b16 %v27
  %v189 = vunpack.c.l.b16 %v28
  %v190 = vunpack.c.l.b16 %v29
  %v191 = vunpack.c.h.b16 %v29
  %v192 = vunpack.c.l.b16 %v30
  %v193 = vunpack.c.h.b16 %v30
  %v194 = vunpack.c.l.b16 %v31
  %v195 = vunpack.c.l.b16 %v32
  %v196 = vunpack.c.h.b16 %v32
  %v197 = vunpack.c.l.b16 %v33
  %v198 = vunpack.c.h.b16 %v33
  %v199 = vunpack.c.l.b16 %v34
  %v200 = vunpack.c.l.b16 %v35
  %v201 = vunpack.c.h.b16 %v35
  %v202 = vunpack.c.l.b16 %v36
  %v203 = vunpack.c.h.b16 %v36
  %v204 = vunpack.c.l.b16 %v37
  %v205 = vunpack.c.l.b16 %v38
  %v206 = vunpack.c.h.b16 %v38
  %v207 = vunpack.c.l.b16 %v39
  %v208 = vunpack.c.h.b16 %v39
  %v209 = vunpack.c.l.b16 %v40
  %v210 = vunpack.c.l.b16 %v41
  %v211 = vunpack.c.h.b16 %v41
  %v212 = vunpack.c.l.b16 %v42
  %v213 = vunpack.c.h.b16 %v42
  %v214 = vunpack.c.l.b16 %v43
  %v215 = vunpack.c.l.b16 %v44
  %v216 = vunpack.c.h.b16 %v44
  %v217 = vunpack.c.l.b16 %v45
  %v218 = vunpack.c.h.b16 %v45
  %v219 = vunpack.c.l.b16 %v46
  %v220 = vunpack.c.l.b16 %v47
  %v221 = vunpack.c.h.b16 %v47
  %v222 = vunpack.c.l.b16 %v48
  %v223 = vunpack.c.h.b16 %v48
  %v224 = vunpack.c.l.b16 %v49
  %v225 = vunpack.c.l.b16 %v50
  %v226 = vunpack.c.h.b16 %v50
  %v227 = vunpack.c.l.b16 %v51
  %v228 = vunpack.c.h.b16 %v51
  %v229 = vunpack.c.l.b16 %v52
  %v230 = vunpack.c.l.b16 %v53
  %v231 = vunpack.c.h.b16 %v53
  %v232 = vunpack.c.l.b16 %v54
  %v233 = vunpack.c.h.b16 %v54
  %v234 = vunpack.c.l.b16 %v55
  %v235 = vunpack.c.l.b16 %v56
  %v236 = vunpack.c.h.b16 %v56
  %v237 = vunpack.c.l.b16 %v57
  %v238 = vunpack.c.h.b16 %v57
  %v239 = vunpack.c.l.b16 %v58
  %v240 = vunpack.c.l.b16 %v59
  %v241 = vunpack.c.h.b16 %v59
  %v242 = vunpack.c.l.b16 %v60
  %v243 = vunpack.c.h.b16 %v60
  %v244 = vunpack.c.l.b16 %v61
  %v245 = vpack.c.b16 %v185, %v180
  %v246 = vpack.c.b16 %v186, %v181
  %v247 = vpack.c.b16 %v187, %v182
  %v248 = vpack.c.b16 %v188, %v183
  %v249 = vpack.c.b16 %v189, %v184
  %v250 = vpack.c.b16 %v195, %v190
  %v251 = vpack.c.b16 %v196, %v191
  %v252 = vpack.c.b16 %v197, %v192
  %v253 = vpack.c.b16 %v198, %v193
  %v254 = vpack.c.b16 %v199, %v194
  %v255 = vpack.c.b16 %v205, %v200
  %v256 = vpack.c.b16 %v206, %v201
  %v257 = vpack.c.b16 %v207, %v202
  %v258 = vpack.c.b16 %v208, %v203
  %v259 = vpack.c.b16 %v209, %v204
  %v260 = vpack.c.b16 %v215, %v210
  %v261 = vpack.c.b16 %v216, %v211
  %v262 = vpack.c.b16 %v217, %v212
  %v263 = vpack.c.b16 %v218, %v213
  %v264 = vpack.c.b16 %v219, %v214
  %v265 = vpack.c.b16 %v225, %v220
  %v266 = vpack.c.b16 %v226, %v221
  %v267 = vpack.c.b16 %v227, %v222
  %v268 = vpack.c.b16 %v228, %v223
  %v269 = vpack.c.b16 %v229, %v224
  %v270 = vpack.c.b16 %v235, %v230
  %v271 = vpack.c.b16 %v236, %v231
  %v272 = vpack.c.b16 %v237, %v232
  %v273 = vpack.c.b16 %v238, %v233
  %v274 = vpack.c.b16 %v239, %v234
  %v275 = vpack.c.b16 %v240, %v240
  %v276 = vpack.c.b16 %v241, %v241
  %v277 = vpack.c.b16 %v242, %v242
  %v278 = vpack.c.b16 %v243, %v243
  %v279 = vpack.c.b16 %v244, %v244
  %v380 = vunpack.c.l.b16 %v62
  %v381 = vunpack.c.l.b16 %v63
  %v382 = vunpack.c.l.b16 %v64
  %v383 = vunpack.c.l.b16 %v65
  %v384 = vunpack.c.l.b16 %v66
  %v385 = vunpack.c.l.b16 %v67
  %v386 = vunpack.c.l.b16 %v68
  %v387 = vunpack.c.l.b16 %v69
  %v388 = vunpack.c.l.b16 %v70
  %v389 = vunpack.c.l.b16 %v71
  %v390 = vunpack.c.l.b16 %v72
  %v391 = vunpack.c.l.b16 %v73
  %v392 = vunpack.c.l.b16 %v74
  %v393 = vunpack.c.l.b16 %v75
  %v394 = vunpack.c.l.b16 %v76
  %v395 = vunpack.c.l.b16 %v77
  %v396 = vunpack.c.l.b16 %v78
  %v397 = vunpack.c.l.b16 %v79
  %v398 = vunpack.c.l.b16 %v80
  %v399 = vunpack.c.l.b16 %v81
  %v400 = vunpack.c.l.b16 %v82
  %v401 = vunpack.c.l.b16 %v83
  %v402 = vunpack.c.l.b16 %v84
  %v403 = vunpack.c.l.b16 %v85
  %v404 = vunpack.c.l.b16 %v86
  %v405 = vunpack.c.l.b16 %v87
  %v406 = vunpack.c.l.b16 %v88
  %v407 = vunpack.c.l.b16 %v89
  %v408 = vunpack.c.l.b16 %v90
  %v409 = vunpack.c.l.b16 %v91
  %v410 = vunpack.c.l.b16 %v92
  %v411 = vunpack.c.l.b16 %v93
  %v412 = vunpack.c.l.b16 %v94
  %v413 = vunpack.c.l.b16 %v95
  %v414 = vunpack.c.l.b16 %v96
  %v415 = vunpack.c.l.b16 %v97
  %v416 = vunpack.c.l.b16 %v98
  %v417 = vunpack.c.l.b16 %v99
  %v418 = vunpack.c.l.b16 %v100
  %v419 = vunpack.c.l.b16 %v101
  %v420 = vunpack.c.l.b16 %v102
  %v421 = vunpack.c.l.b16 %v103
  %v422 = vunpack.c.l.b16 %v104
  %v423 = vunpack.c.l.b16 %v105
  %v424 = vunpack.c.l.b16 %v106
  %v425 = vunpack.c.l.b16 %v107
  %v426 = vunpack.c.l.b16 %v108
  %v427 = vunpack.c.l.b16 %v109
  %v428 = vunpack.c.l.b16 %v110
  %v429 = vunpack.c.l.b16 %v111
  %v430 = vunpack.c.l.b16 %v112
  %v431 = vunpack.c.l.b16 %v113
  %v432 = vunpack.c.l.b16 %v114
  %v433 = vunpack.c.l.b16 %v115
  %v434 = vunpack.c.l.b16 %v116
  %v435 = vunpack.c.l.b16 %v117
  %v436 = vunpack.c.l.b16 %v118
  %v437 = vunpack.c.l.b16 %v119
  %v438 = vunpack.c.l.b16 %v120
  %v439 = vunpack.c.l.b16 %v121
  %v440 = vunpack.c.l.b16 %v122
  %v441 = vunpack.c.l.b16 %v123
  %v442 = vunpack.c.l.b16 %v124
  %v443 = vunpack.c.l.b16 %v125
  %v444 = vunpack.c.l.b16 %v126
  %v445 = vunpack.c.l.b16 %v127
  %v446 = vunpack.c.l.b16 %v128
  %v447 = vunpack.c.l.b16 %v129
  %v448 = vunpack.c.l.b16 %v130
  %v449 = vunpack.c.l.b16 %v131
  %v450 = vunpack.c.l.b16 %v132
  %v451 = vunpack.c.l.b16 %v133
  %v452 = vpack.c.b16 %v381, %v380
  %v453 = vpack.c.b16 %v383, %v382
  %v454 = vpack.c.b16 %v385, %v384
  %v455 = vpack.c.b16 %v387, %v386
  %v456 = vpack.c.b16 %v389, %v388
  %v457 = vpack.c.b16 %v391, %v390
  %v458 = vpack.c.b16 %v393, %v392
  %v459 = vpack.c.b16 %v395, %v394
  %v460 = vpack.c.b16 %v397, %v396
  %v461 = vpack.c.b16 %v399, %v398
  %v462 = vpack.c.b16 %v401, %v400
  %v463 = vpack.c.b16 %v403, %v402
  %v464 = vpack.c.b16 %v405, %v404
  %v465 = vpack.c.b16 %v407, %v406
  %v466 = vpack.c.b16 %v409, %v408
  %v467 = vpack.c.b16 %v411, %v410
  %v468 = vpack.c.b16 %v413, %v412
  %v469 = vpack.c.b16 %v415, %v414
  %v470 = vpack.c.b16 %v417, %v416
  %v471 = vpack.c.b16 %v419, %v418
  %v472 = vpack.c.b16 %v421, %v420
  %v473 = vpack.c.b16 %v423, %v422
  %v474 = vpack.c.b16 %v425, %v424
  %v475 = vpack.c.b16 %v427, %v426
  %v476 = vpack.c.b16 %v429, %v428
  %v477 = vpack.c.b16 %v431, %v430
  %v478 = vpack.c.b16 %v433, %v432
  %v479 = vpack.c.b16 %v435, %v434
  %v480 = vpack.c.b16 %v437, %v436
  %v481 = vpack.c.b16 %v439, %v438
  %v482 = vpack.c.b16 %v441, %v440
  %v483 = vpack.c.b16 %v443, %v442
  %v484 = vpack.c.b16 %v445, %v444
  %v485 = vpack.c.b16 %v447, %v446
  %v486 = vpack.c.b16 %v449, %v448
  %v487 = vpack.c.b16 %v451, %v450
  %vm524 = vcmask 523264
  %v526 = vsel %vm524, %v249, 0
  %v529 = vsel %vm524, %v254, 0
  %v532 = vsel %vm524, %v259, 0
  %v535 = vsel %vm524, %v264, 0
  %v538 = vsel %vm524, %v269, 0
  %v541 = vsel %vm524, %v274, 0
  %v544 = vsel %vm524, %v279, 0
  %546 = vmatprep.subr.bf16.mxu0 0
  %547 = vmatpush1.bf16.msra.mxu0 %v452
  %548 = vmatprep.subr.bf16.mxu0 0
  %549 = vmatpush1.bf16.msra.mxu0 %v453
  %550 = vmatprep.subr.bf16.mxu0 0
  %551 = vmatpush1.bf16.msra.mxu0 %v454
  %552 = vmatprep.subr.bf16.mxu0 0
  %553 = vmatpush1.bf16.msra.mxu0 %v455
  %554 = vmatprep.subr.bf16.mxu0 0
  %555 = vmatpush1.bf16.msra.mxu0 %v456
  %556 = vmatprep.subr.bf16.mxu0 0
  %557 = vmatpush1.bf16.msra.mxu0 %v457
  %558 = vmatprep.subr.bf16.mxu0 0
  %559 = vmatpush1.bf16.msra.mxu0 %v458
  %560 = vmatprep.subr.bf16.mxu0 0
  %561 = vmatpush1.bf16.msra.mxu0 %v459
  %562 = vmatprep.subr.bf16.mxu0 0
  %563 = vmatpush1.bf16.msra.mxu0 %v460
  %564 = vmatprep.subr.bf16.mxu0 0
  %565 = vmatpush1.bf16.msra.mxu0 %v461
  %566 = vmatprep.subr.bf16.mxu0 0
  %567 = vmatpush1.bf16.msra.mxu0 %v462
  %568 = vmatprep.subr.bf16.mxu0 0
  %569 = vmatpush1.bf16.msra.mxu0 %v463
  %570 = vmatprep.subr.bf16.mxu0 0
  %571 = vmatpush1.bf16.msra.mxu0 %v464
  %572 = vmatprep.subr.bf16.mxu0 0
  %573 = vmatpush1.bf16.msra.mxu0 %v465
  %574 = vmatprep.subr.bf16.mxu0 0
  %575 = vmatpush1.bf16.msra.mxu0 %v466
  %576 = vmatprep.subr.bf16.mxu0 0
  %577 = vmatpush1.bf16.msra.mxu0 %v467
  %578 = vmatprep.mubr.bf16.mxu0 %v246
  %579 = vmatmul.mubr.bf16.gmra.mrb[0].mxu0 %v245
  %v580 = vpop.f32.mrb[0].mxu0
  %v581 = vadd.f32 %v139, %v580
  %v582 = vpop.f32.mrb[0].mxu0
  %v583 = vpop.f32.mrb[0].mxu0
  %v584 = vadd.f32 %v139, %v583
  %v585 = vpop.f32.mrb[0].mxu0
  %586 = vmatprep.mubr.bf16.mxu0 %v251
  %587 = vmatmul.mubr.bf16.gmra.mrb[0].mxu0 %v250
  %v588 = vpop.f32.mrb[0].mxu0
  %v589 = vadd.f32 %v139, %v588
  %v590 = vpop.f32.mrb[0].mxu0
  %v591 = vpop.f32.mrb[0].mxu0
  %v592 = vadd.f32 %v139, %v591
  %v593 = vpop.f32.mrb[0].mxu0
  %594 = vmatprep.mubr.bf16.mxu0 %v256
  %595 = vmatmul.mubr.bf16.gmra.mrb[0].mxu0 %v255
  %v596 = vpop.f32.mrb[0].mxu0
  %v597 = vadd.f32 %v139, %v596
  %v598 = vpop.f32.mrb[0].mxu0
  %v599 = vpop.f32.mrb[0].mxu0
  %v600 = vadd.f32 %v139, %v599
  %v601 = vpop.f32.mrb[0].mxu0
  %602 = vmatprep.mubr.bf16.mxu0 %v261
  %603 = vmatmul.mubr.bf16.gmra.mrb[0].mxu0 %v260
  %v604 = vpop.f32.mrb[0].mxu0
  %v605 = vadd.f32 %v139, %v604
  %v606 = vpop.f32.mrb[0].mxu0
  %v607 = vpop.f32.mrb[0].mxu0
  %v608 = vadd.f32 %v139, %v607
  %v609 = vpop.f32.mrb[0].mxu0
  %610 = vmatprep.mubr.bf16.mxu0 %v266
  %611 = vmatmul.mubr.bf16.gmra.mrb[0].mxu0 %v265
  %v612 = vpop.f32.mrb[0].mxu0
  %v613 = vadd.f32 %v139, %v612
  %v614 = vpop.f32.mrb[0].mxu0
  %v615 = vpop.f32.mrb[0].mxu0
  %v616 = vadd.f32 %v139, %v615
  %v617 = vpop.f32.mrb[0].mxu0
  %618 = vmatprep.mubr.bf16.mxu0 %v271
  %619 = vmatmul.mubr.bf16.gmra.mrb[0].mxu0 %v270
  %v620 = vpop.f32.mrb[0].mxu0
  %v621 = vadd.f32 %v139, %v620
  %v622 = vpop.f32.mrb[0].mxu0
  %v623 = vpop.f32.mrb[0].mxu0
  %v624 = vadd.f32 %v139, %v623
  %v625 = vpop.f32.mrb[0].mxu0
  %626 = vmatprep.mubr.bf16.mxu0 %v276
  %627 = vmatmul.mubr.bf16.gmra.mrb[0].mxu0 %v275
  %v628 = vpop.f32.mrb[0].mxu0
  %v629 = vadd.f32 %v139, %v628
  %v630 = vpop.f32.mrb[0].mxu0
  %v631 = vpop.f32.mrb[0].mxu0
  %v632 = vpop.f32.mrb[0].mxu0
  %633 = vdwg.mxu0
  %634 = vmatprep.subr.bf16.mxu0 0
  %635 = vmatpush1.bf16.msra.mxu0 %v468
  %636 = vmatprep.subr.bf16.mxu0 0
  %637 = vmatpush1.bf16.msra.mxu0 %v469
  %638 = vmatprep.subr.bf16.mxu0 0
  %639 = vmatpush1.bf16.msra.mxu0 %v470
  %640 = vmatprep.subr.bf16.mxu0 0
  %641 = vmatpush1.bf16.msra.mxu0 %v471
  %642 = vmatprep.subr.bf16.mxu0 0
  %643 = vmatpush1.bf16.msra.mxu0 %v472
  %644 = vmatprep.subr.bf16.mxu0 0
  %645 = vmatpush1.bf16.msra.mxu0 %v473
  %646 = vmatprep.subr.bf16.mxu0 0
  %647 = vmatpush1.bf16.msra.mxu0 %v474
  %648 = vmatprep.subr.bf16.mxu0 0
  %649 = vmatpush1.bf16.msra.mxu0 %v475
  %650 = vmatprep.subr.bf16.mxu0 0
  %651 = vmatpush1.bf16.msra.mxu0 %v476
  %652 = vmatprep.subr.bf16.mxu0 0
  %653 = vmatpush1.bf16.msra.mxu0 %v477
  %654 = vmatprep.subr.bf16.mxu0 0
  %655 = vmatpush1.bf16.msra.mxu0 %v478
  %656 = vmatprep.subr.bf16.mxu0 0
  %657 = vmatpush1.bf16.msra.mxu0 %v479
  %658 = vmatprep.subr.bf16.mxu0 0
  %659 = vmatpush1.bf16.msra.mxu0 %v480
  %660 = vmatprep.subr.bf16.mxu0 0
  %661 = vmatpush1.bf16.msra.mxu0 %v481
  %662 = vmatprep.subr.bf16.mxu0 0
  %663 = vmatpush1.bf16.msra.mxu0 %v482
  %664 = vmatprep.subr.bf16.mxu0 0
  %665 = vmatpush1.bf16.msra.mxu0 %v483
  %666 = vmatprep.mubr.bf16.mxu0 %v248
  %667 = vmatmul.mubr.bf16.gmra.mrb[0].mxu0 %v247
  %v668 = vpop.f32.mrb[0].mxu0
  %v669 = vadd.f32 %v581, %v668
  %v670 = vpop.f32.mrb[0].mxu0
  %v671 = vpop.f32.mrb[0].mxu0
  %v672 = vadd.f32 %v584, %v671
  %v673 = vpop.f32.mrb[0].mxu0
  %674 = vmatprep.mubr.bf16.mxu0 %v253
  %675 = vmatmul.mubr.bf16.gmra.mrb[0].mxu0 %v252
  %v676 = vpop.f32.mrb[0].mxu0
  %v677 = vadd.f32 %v589, %v676
  %v678 = vpop.f32.mrb[0].mxu0
  %v679 = vpop.f32.mrb[0].mxu0
  %v680 = vadd.f32 %v592, %v679
  %v681 = vpop.f32.mrb[0].mxu0
  %682 = vmatprep.mubr.bf16.mxu0 %v258
  %683 = vmatmul.mubr.bf16.gmra.mrb[0].mxu0 %v257
  %v684 = vpop.f32.mrb[0].mxu0
  %v685 = vadd.f32 %v597, %v684
  %v686 = vpop.f32.mrb[0].mxu0
  %v687 = vpop.f32.mrb[0].mxu0
  %v688 = vadd.f32 %v600, %v687
  %v689 = vpop.f32.mrb[0].mxu0
  %690 = vmatprep.mubr.bf16.mxu0 %v263
  %691 = vmatmul.mubr.bf16.gmra.mrb[0].mxu0 %v262
  %v692 = vpop.f32.mrb[0].mxu0
  %v693 = vadd.f32 %v605, %v692
  %v694 = vpop.f32.mrb[0].mxu0
  %v695 = vpop.f32.mrb[0].mxu0
  %v696 = vadd.f32 %v608, %v695
  %v697 = vpop.f32.mrb[0].mxu0
  %698 = vmatprep.mubr.bf16.mxu0 %v268
  %699 = vmatmul.mubr.bf16.gmra.mrb[0].mxu0 %v267
  %v700 = vpop.f32.mrb[0].mxu0
  %v701 = vadd.f32 %v613, %v700
  %v702 = vpop.f32.mrb[0].mxu0
  %v703 = vpop.f32.mrb[0].mxu0
  %v704 = vadd.f32 %v616, %v703
  %v705 = vpop.f32.mrb[0].mxu0
  %706 = vmatprep.mubr.bf16.mxu0 %v273
  %707 = vmatmul.mubr.bf16.gmra.mrb[0].mxu0 %v272
  %v708 = vpop.f32.mrb[0].mxu0
  %v709 = vadd.f32 %v621, %v708
  %v710 = vpop.f32.mrb[0].mxu0
  %v711 = vpop.f32.mrb[0].mxu0
  %v712 = vadd.f32 %v624, %v711
  %v713 = vpop.f32.mrb[0].mxu0
  %714 = vmatprep.mubr.bf16.mxu0 %v278
  %715 = vmatmul.mubr.bf16.gmra.mrb[0].mxu0 %v277
  %v716 = vpop.f32.mrb[0].mxu0
  %v717 = vadd.f32 %v629, %v716
  %v718 = vpop.f32.mrb[0].mxu0
  %v719 = vpop.f32.mrb[0].mxu0
  %v720 = vpop.f32.mrb[0].mxu0
  %721 = vdwg.mxu0
  %722 = vmatprep.subr.bf16.mxu0 0
  %723 = vmatpush1.bf16.msra.mxu0 %v484
  %724 = vmatprep.subr.bf16.mxu0 0
  %725 = vmatpush1.bf16.msra.mxu0 %v485
  %726 = vmatprep.subr.bf16.mxu0 0
  %727 = vmatpush1.bf16.msra.mxu0 %v486
  %728 = vmatprep.subr.bf16.mxu0 0
  %729 = vmatpush1.bf16.msra.mxu0 %v487
  %730 = vmatprep.subr.bf16.mxu0 0
  %731 = vmatpush1.bf16.msra.mxu0 0
  %732 = vmatprep.subr.bf16.mxu0 0
  %733 = vmatpush1.bf16.msra.mxu0 0
  %734 = vmatprep.subr.bf16.mxu0 0
  %735 = vmatpush1.bf16.msra.mxu0 0
  %736 = vmatprep.subr.bf16.mxu0 0
  %737 = vmatpush1.bf16.msra.mxu0 0
  %738 = vmatprep.subr.bf16.mxu0 0
  %739 = vmatpush1.bf16.msra.mxu0 0
  %740 = vmatprep.subr.bf16.mxu0 0
  %741 = vmatpush1.bf16.msra.mxu0 0
  %742 = vmatprep.subr.bf16.mxu0 0
  %743 = vmatpush1.bf16.msra.mxu0 0
  %744 = vmatprep.subr.bf16.mxu0 0
  %745 = vmatpush1.bf16.msra.mxu0 0
  %746 = vmatprep.subr.bf16.mxu0 0
  %747 = vmatpush1.bf16.msra.mxu0 0
  %748 = vmatprep.subr.bf16.mxu0 0
  %749 = vmatpush1.bf16.msra.mxu0 0
  %750 = vmatprep.subr.bf16.mxu0 0
  %751 = vmatpush1.bf16.msra.mxu0 0
  %752 = vmatprep.subr.bf16.mxu0 0
  %753 = vmatpush1.bf16.msra.mxu0 0
  %754 = vmatprep.mubr.bf16.mxu0 0
  %755 = vmatmul.mubr.bf16.gmra.mrb[0].mxu0 %v526
  %v756 = vpop.f32.mrb[0].mxu0
  %v757 = vadd.f32 %v669, %v756
  %v758 = vpop.f32.mrb[0].mxu0
  %v759 = vpop.f32.mrb[0].mxu0
  %v760 = vadd.f32 %v672, %v759
  %v761 = vpop.f32.mrb[0].mxu0
  %762 = vmatprep.mubr.bf16.mxu0 0
  %763 = vmatmul.mubr.bf16.gmra.mrb[0].mxu0 %v529
  %v764 = vpop.f32.mrb[0].mxu0
  %v765 = vadd.f32 %v677, %v764
  %v766 = vpop.f32.mrb[0].mxu0
  %v767 = vpop.f32.mrb[0].mxu0
  %v768 = vadd.f32 %v680, %v767
  %v769 = vpop.f32.mrb[0].mxu0
  %770 = vmatprep.mubr.bf16.mxu0 0
  %771 = vmatmul.mubr.bf16.gmra.mrb[0].mxu0 %v532
  %v772 = vpop.f32.mrb[0].mxu0
  %v773 = vadd.f32 %v685, %v772
  %v774 = vpop.f32.mrb[0].mxu0
  %v775 = vpop.f32.mrb[0].mxu0
  %v776 = vadd.f32 %v688, %v775
  %v777 = vpop.f32.mrb[0].mxu0
  %778 = vmatprep.mubr.bf16.mxu0 0
  %779 = vmatmul.mubr.bf16.gmra.mrb[0].mxu0 %v535
  %v780 = vpop.f32.mrb[0].mxu0
  %v781 = vadd.f32 %v693, %v780
  %v782 = vpop.f32.mrb[0].mxu0
  %v783 = vpop.f32.mrb[0].mxu0
  %v784 = vadd.f32 %v696, %v783
  %v785 = vpop.f32.mrb[0].mxu0
  %786 = vmatprep.mubr.bf16.mxu0 0
  %787 = vmatmul.mubr.bf16.gmra.mrb[0].mxu0 %v538
  %v788 = vpop.f32.mrb[0].mxu0
  %v789 = vadd.f32 %v701, %v788
  %v790 = vpop.f32.mrb[0].mxu0
  %v791 = vpop.f32.mrb[0].mxu0
  %v792 = vadd.f32 %v704, %v791
  %v793 = vpop.f32.mrb[0].mxu0
  %794 = vmatprep.mubr.bf16.mxu0 0
  %795 = vmatmul.mubr.bf16.gmra.mrb[0].mxu0 %v541
  %v796 = vpop.f32.mrb[0].mxu0
  %v797 = vadd.f32 %v709, %v796
  %v798 = vpop.f32.mrb[0].mxu0
  %v799 = vpop.f32.mrb[0].mxu0
  %v800 = vadd.f32 %v712, %v799
  %v801 = vpop.f32.mrb[0].mxu0
  %802 = vmatprep.mubr.bf16.mxu0 0
  %803 = vmatmul.mubr.bf16.gmra.mrb[0].mxu0 %v544
  %v804 = vpop.f32.mrb[0].mxu0
  %v805 = vadd.f32 %v717, %v804
  %v806 = vpop.f32.mrb[0].mxu0
  %v807 = vpop.f32.mrb[0].mxu0
  %v808 = vpop.f32.mrb[0].mxu0
  %809 = vdwg.mxu0
  %v810 = vmax.f32 %v757, 0.0
  %v811 = vmax.f32 %v760, 0.0
  %v812 = vmax.f32 %v765, 0.0
  %v813 = vmax.f32 %v768, 0.0
  %v814 = vmax.f32 %v773, 0.0
  %v815 = vmax.f32 %v776, 0.0
  %v816 = vmax.f32 %v781, 0.0
  %v817 = vmax.f32 %v784, 0.0
  %v818 = vmax.f32 %v789, 0.0
  %v819 = vmax.f32 %v792, 0.0
  %v820 = vmax.f32 %v797, 0.0
  %v821 = vmax.f32 %v800, 0.0
  %v822 = vmax.f32 %v805, 0.0
  %v823 = vpack.c.bf16 %v811, %v810
  %v824 = vpack.c.bf16 %v813, %v812
  %v825 = vpack.c.bf16 %v815, %v814
  %v826 = vpack.c.bf16 %v817, %v816
  %v827 = vpack.c.bf16 %v819, %v818
  %v828 = vpack.c.bf16 %v821, %v820
  %v829 = vpack.c.bf16 %v822, %v822
  %v830 = vld [vmem:[%s3] sm:$0xf]
  %v831 = vld [vmem:[%s3 + $0x4] sm:$0xf]
  %v832 = vld [vmem:[%s3 + $0x8] sm:$0xf]
  %v833 = vld [vmem:[%s3 + $0xc] sm:$0xf]
  %v834 = vld [vmem:[%s3 + $0x10] sm:$0xf]
  %v835 = vld [vmem:[%s3 + $0x14] sm:$0xf]
  %v836 = vld [vmem:[%s3 + $0x18] sm:$0xf]
  %v837 = vld [vmem:[%s3 + $0x1c] sm:$0xf]
  %v838 = vld [vmem:[%s4] sm:$0x1]
  %v840 = vlaneseq
  %v841 = vshrl.u32 %v840, 7
  %v842 = vsub.s32 0, %v841
  %v843 = vrot.slane %v838, %v842
  %v853 = vunpack.c.l.b16 %v830
  %v854 = vunpack.c.l.b16 %v831
  %v855 = vunpack.c.l.b16 %v832
  %v856 = vunpack.c.l.b16 %v833
  %v857 = vunpack.c.l.b16 %v834
  %v858 = vunpack.c.l.b16 %v835
  %v859 = vunpack.c.l.b16 %v836
  %v860 = vunpack.c.l.b16 %v837
  %v861 = vpack.c.b16 %v854, %v853
  %v862 = vpack.c.b16 %v856, %v855
  %v863 = vpack.c.b16 %v858, %v857
  %v864 = vpack.c.b16 %v860, %v859
  %v870 = vsel %vm524, %v823, 0
  %v873 = vsel %vm524, %v824, 0
  %v876 = vsel %vm524, %v825, 0
  %v879 = vsel %vm524, %v826, 0
  %v882 = vsel %vm524, %v827, 0
  %v885 = vsel %vm524, %v828, 0
  %v888 = vsel %vm524, %v829, 0
  %890 = vmatprep.subr.bf16.mxu0 0
  %891 = vmatpush1.bf16.msra.mxu0 %v861
  %892 = vmatprep.subr.bf16.mxu0 0
  %893 = vmatpush1.bf16.msra.mxu0 %v862
  %894 = vmatprep.subr.bf16.mxu0 0
  %895 = vmatpush1.bf16.msra.mxu0 %v863
  %896 = vmatprep.subr.bf16.mxu0 0
  %897 = vmatpush1.bf16.msra.mxu0 %v864
  %898 = vmatprep.subr.bf16.mxu0 0
  %899 = vmatpush1.bf16.msra.mxu0 0
  %900 = vmatprep.subr.bf16.mxu0 0
  %901 = vmatpush1.bf16.msra.mxu0 0
  %902 = vmatprep.subr.bf16.mxu0 0
  %903 = vmatpush1.bf16.msra.mxu0 0
  %904 = vmatprep.subr.bf16.mxu0 0
  %905 = vmatpush1.bf16.msra.mxu0 0
  %906 = vmatprep.subr.bf16.mxu0 0
  %907 = vmatpush1.bf16.msra.mxu0 0
  %908 = vmatprep.subr.bf16.mxu0 0
  %909 = vmatpush1.bf16.msra.mxu0 0
  %910 = vmatprep.subr.bf16.mxu0 0
  %911 = vmatpush1.bf16.msra.mxu0 0
  %912 = vmatprep.subr.bf16.mxu0 0
  %913 = vmatpush1.bf16.msra.mxu0 0
  %914 = vmatprep.subr.bf16.mxu0 0
  %915 = vmatpush1.bf16.msra.mxu0 0
  %916 = vmatprep.subr.bf16.mxu0 0
  %917 = vmatpush1.bf16.msra.mxu0 0
  %918 = vmatprep.subr.bf16.mxu0 0
  %919 = vmatpush1.bf16.msra.mxu0 0
  %920 = vmatprep.subr.bf16.mxu0 0
  %921 = vmatpush1.bf16.msra.mxu0 0
  %922 = vmatprep.mubr.bf16.mxu0 0
  %923 = vmatmul.mubr.bf16.gmra.mrb[0].mxu0 %v870
  %v924 = vpop.f32.mrb[0].mxu0
  %v925 = vadd.f32 %v843, %v924
  %v926 = vpop.f32.mrb[0].mxu0
  %v927 = vpop.f32.mrb[0].mxu0
  %v928 = vadd.f32 %v843, %v927
  %v929 = vpop.f32.mrb[0].mxu0
  %930 = vmatprep.mubr.bf16.mxu0 0
  %931 = vmatmul.mubr.bf16.gmra.mrb[0].mxu0 %v873
  %v932 = vpop.f32.mrb[0].mxu0
  %v933 = vadd.f32 %v843, %v932
  %v934 = vpop.f32.mrb[0].mxu0
  %v935 = vpop.f32.mrb[0].mxu0
  %v936 = vadd.f32 %v843, %v935
  %v937 = vpop.f32.mrb[0].mxu0
  %938 = vmatprep.mubr.bf16.mxu0 0
  %939 = vmatmul.mubr.bf16.gmra.mrb[0].mxu0 %v876
  %v940 = vpop.f32.mrb[0].mxu0
  %v941 = vadd.f32 %v843, %v940
  %v942 = vpop.f32.mrb[0].mxu0
  %v943 = vpop.f32.mrb[0].mxu0
  %v944 = vadd.f32 %v843, %v943
  %v945 = vpop.f32.mrb[0].mxu0
  %946 = vmatprep.mubr.bf16.mxu0 0
  %947 = vmatmul.mubr.bf16.gmra.mrb[0].mxu0 %v879
  %v948 = vpop.f32.mrb[0].mxu0
  %v949 = vadd.f32 %v843, %v948
  %v950 = vpop.f32.mrb[0].mxu0
  %v951 = vpop.f32.mrb[0].mxu0
  %v952 = vadd.f32 %v843, %v951
  %v953 = vpop.f32.mrb[0].mxu0
  %954 = vmatprep.mubr.bf16.mxu0 0
  %955 = vmatmul.mubr.bf16.gmra.mrb[0].mxu0 %v882
  %v956 = vpop.f32.mrb[0].mxu0
  %v957 = vadd.f32 %v843, %v956
  %v958 = vpop.f32.mrb[0].mxu0
  %v959 = vpop.f32.mrb[0].mxu0
  %v960 = vadd.f32 %v843, %v959
  %v961 = vpop.f32.mrb[0].mxu0
  %962 = vmatprep.mubr.bf16.mxu0 0
  %963 = vmatmul.mubr.bf16.gmra.mrb[0].mxu0 %v885
  %v964 = vpop.f32.mrb[0].mxu0
  %v965 = vadd.f32 %v843, %v964
  %v966 = vpop.f32.mrb[0].mxu0
  %v967 = vpop.f32.mrb[0].mxu0
  %v968 = vadd.f32 %v843, %v967
  %v969 = vpop.f32.mrb[0].mxu0
  %970 = vmatprep.mubr.bf16.mxu0 0
  %971 = vmatmul.mubr.bf16.gmra.mrb[0].mxu0 %v888
  %v972 = vpop.f32.mrb[0].mxu0
  %v973 = vadd.f32 %v843, %v972
  %v974 = vpop.f32.mrb[0].mxu0
  %v975 = vpop.f32.mrb[0].mxu0
  %v976 = vpop.f32.mrb[0].mxu0
  %977 = vdwg.mxu0
  %v985 = vunpack.c.l.b16 %v823
  %v986 = vunpack.c.h.b16 %v823
  %v987 = vunpack.c.l.b16 %v824
  %v988 = vunpack.c.h.b16 %v824
  %v989 = vunpack.c.l.b16 %v825
  %v990 = vunpack.c.h.b16 %v825
  %v991 = vunpack.c.l.b16 %v826
  %v992 = vunpack.c.h.b16 %v826
  %v993 = vunpack.c.l.b16 %v827
  %v994 = vunpack.c.h.b16 %v827
  %v995 = vunpack.c.l.b16 %v828
  %v996 = vunpack.c.h.b16 %v828
  %v997 = vunpack.c.l.b16 %v829
  %v998 = vpack.c.b16 %v985, %v985
  %v999 = vpack.c.b16 %v986, %v986
  %v1000 = vpack.c.b16 %v987, %v987
  %v1001 = vpack.c.b16 %v988, %v988
  %v1002 = vpack.c.b16 %v989, %v989
  %v1003 = vpack.c.b16 %v990, %v990
  %v1004 = vpack.c.b16 %v991, %v991
  %v1005 = vpack.c.b16 %v992, %v992
  %v1006 = vpack.c.b16 %v993, %v993
  %v1007 = vpack.c.b16 %v994, %v994
  %v1008 = vpack.c.b16 %v995, %v995
  %v1009 = vpack.c.b16 %v996, %v996
  %v1010 = vpack.c.b16 %v997, %v997
  %vm1024 = vcmask 519168
  %1025 = vst.msk [vmem:[%s5] sm:$0xf] %vm1024, %v998
  %1026 = vst.msk [vmem:[%s5 + $0x4] sm:$0xf] %vm1024, %v999
  %1027 = vst.msk [vmem:[%s5 + $0x8] sm:$0xf] %vm1024, %v1000
  %1028 = vst.msk [vmem:[%s5 + $0xc] sm:$0xf] %vm1024, %v1001
  %1029 = vst.msk [vmem:[%s5 + $0x10] sm:$0xf] %vm1024, %v1002
  %1030 = vst.msk [vmem:[%s5 + $0x14] sm:$0xf] %vm1024, %v1003
  %1031 = vst.msk [vmem:[%s5 + $0x18] sm:$0xf] %vm1024, %v1004
  %1032 = vst.msk [vmem:[%s5 + $0x1c] sm:$0xf] %vm1024, %v1005
  %1033 = vst.msk [vmem:[%s5 + $0x20] sm:$0xf] %vm1024, %v1006
  %1034 = vst.msk [vmem:[%s5 + $0x24] sm:$0xf] %vm1024, %v1007
  %1035 = vst.msk [vmem:[%s5 + $0x28] sm:$0xf] %vm1024, %v1008
  %1036 = vst.msk [vmem:[%s5 + $0x2c] sm:$0xf] %vm1024, %v1009
  %1037 = vst.msk [vmem:[%s5 + $0x30] sm:$0xf] %vm1024, %v1010
  %v1038 = vpack.c.bf16 %v928, %v925
  %v1039 = vpack.c.bf16 %v936, %v933
  %v1040 = vpack.c.bf16 %v944, %v941
  %v1041 = vpack.c.bf16 %v952, %v949
  %v1042 = vpack.c.bf16 %v960, %v957
  %v1043 = vpack.c.bf16 %v968, %v965
  %v1044 = vpack.c.bf16 %v973, %v973
  %v1052 = vunpack.c.l.b16 %v1038
  %v1053 = vunpack.c.h.b16 %v1038
  %v1054 = vunpack.c.l.b16 %v1039
  %v1055 = vunpack.c.h.b16 %v1039
  %v1056 = vunpack.c.l.b16 %v1040
  %v1057 = vunpack.c.h.b16 %v1040
  %v1058 = vunpack.c.l.b16 %v1041
  %v1059 = vunpack.c.h.b16 %v1041
  %v1060 = vunpack.c.l.b16 %v1042
  %v1061 = vunpack.c.h.b16 %v1042
  %v1062 = vunpack.c.l.b16 %v1043
  %v1063 = vunpack.c.h.b16 %v1043
  %v1064 = vunpack.c.l.b16 %v1044
  %v1065 = vpack.c.b16 %v1052, %v1052
  %v1066 = vpack.c.b16 %v1053, %v1053
  %v1067 = vpack.c.b16 %v1054, %v1054
  %v1068 = vpack.c.b16 %v1055, %v1055
  %v1069 = vpack.c.b16 %v1056, %v1056
  %v1070 = vpack.c.b16 %v1057, %v1057
  %v1071 = vpack.c.b16 %v1058, %v1058
  %v1072 = vpack.c.b16 %v1059, %v1059
  %v1073 = vpack.c.b16 %v1060, %v1060
  %v1074 = vpack.c.b16 %v1061, %v1061
  %v1075 = vpack.c.b16 %v1062, %v1062
  %v1076 = vpack.c.b16 %v1063, %v1063
  %v1077 = vpack.c.b16 %v1064, %v1064
  %vm1091 = vcmask 257024
  %1092 = vst.msk [vmem:[%s6] sm:$0xf] %vm1091, %v1065
  %1093 = vst.msk [vmem:[%s6 + $0x4] sm:$0xf] %vm1091, %v1066
  %1094 = vst.msk [vmem:[%s6 + $0x8] sm:$0xf] %vm1091, %v1067
  %1095 = vst.msk [vmem:[%s6 + $0xc] sm:$0xf] %vm1091, %v1068
  %1096 = vst.msk [vmem:[%s6 + $0x10] sm:$0xf] %vm1091, %v1069
  %1097 = vst.msk [vmem:[%s6 + $0x14] sm:$0xf] %vm1091, %v1070
  %1098 = vst.msk [vmem:[%s6 + $0x18] sm:$0xf] %vm1091, %v1071
  %1099 = vst.msk [vmem:[%s6 + $0x1c] sm:$0xf] %vm1091, %v1072
  %1100 = vst.msk [vmem:[%s6 + $0x20] sm:$0xf] %vm1091, %v1073
  %1101 = vst.msk [vmem:[%s6 + $0x24] sm:$0xf] %vm1091, %v1074
  %1102 = vst.msk [vmem:[%s6 + $0x28] sm:$0xf] %vm1091, %v1075
  %1103 = vst.msk [vmem:[%s6 + $0x2c] sm:$0xf] %vm1091, %v1076
  %1104 = vst.msk [vmem:[%s6 + $0x30] sm:$0xf] %vm1091, %v1077
  // Predicated region
  $region22: #{da1qn_forward.6} parent=0 // pred_check
    _
  $region23: #{da1qn_forward.6} parent=0 // pred_check_branch
    %1106 = sbr.rel (0) target = $region25
  $region24: #{da1qn_forward.6} parent=0 // pred_region
    _
  $region25: #{da1qn_forward.6} parent=0 // pred_fallthru
    _
  // Predicated region
  $region26: #{da1qn_forward.6} parent=0 // pred_check
    _
  $region27: #{da1qn_forward.6} parent=0 // pred_check_branch
    %1108 = sbr.rel (0) target = $region29
  $region28: #{da1qn_forward.6} parent=0 // pred_region
    _
  $region29: #{da1qn_forward.6} parent=0 // pred_fallthru
    _
  // Predicated region
  $region30: #{da1qn_forward.6} parent=0 // pred_check
    _
  $region31: #{da1qn_forward.6} parent=0 // pred_check_branch
    %1110 = sbr.rel (0) target = $region33
  $region32: #{da1qn_forward.6} parent=0 // pred_region
    _
  $region33: #{da1qn_forward.6} parent=0 // pred_fallthru
    _
  // Predicated region
  $region34: #{da1qn_forward.6} parent=0 // pred_check
    _
  $region35: #{da1qn_forward.6} parent=0 // pred_check_branch
    %1112 = sbr.rel (0) target = $region37
  $region36: #{da1qn_forward.6} parent=0 // pred_region
    _
  $region37: #{da1qn_forward.6} parent=0 // pred_fallthru
    _

// kernel: da1qn_forward.7
$region0: #{da1qn_forward.7}
  #allocation0 [shape = 'u32[]', space=smem, size = 0x4, offset = 0x4, fixed_abs, tag = 'smem constant byte address 0x4 - core index']
  #allocation1 [shape = 'u32[144,128]{1,0:T(1,128)}', space=vmem, size = 0x12000, scoped, tag = 'internal scratch']
  %s0 = inlined_call_operand.vmem [shape: bf16[2,49,64], index: 0, kind: input, shape index: {}]
  %s1 = inlined_call_operand.vmem [shape: bf16[2,49,32], index: 1, kind: input, shape index: {}]
  %s2 = inlined_call_operand.vmem [shape: f32[2,8], index: 2, kind: input, shape index: {}]
  %s3 = inlined_call_operand.vmem [shape: f32[8,32], index: 3, kind: input, shape index: {}]
  %s4 = inlined_call_operand.vmem [shape: f32[1,32], index: 4, kind: input, shape index: {}]
  %s5 = inlined_call_operand.vmem [shape: bf16[64,512], index: 5, kind: input, shape index: {}]
  %s6 = inlined_call_operand.vmem [shape: f32[1,512], index: 6, kind: input, shape index: {}]
  %s7 = inlined_call_operand.vmem [shape: bf16[512,128], index: 7, kind: input, shape index: {}]
  %s8 = inlined_call_operand.vmem [shape: f32[8,128], index: 8, kind: input, shape index: {}]
  %s9 = inlined_call_operand.vmem [shape: f32[1,128], index: 9, kind: input, shape index: {}]
  %s10 = inlined_call_operand.hbm [shape: f32[2,128], index: 10, kind: output, shape index: {}]
  %s11 = sld [smem:[#allocation0]]
  $region50: #{da1qn_forward.7} parent=0
    _
  %s13 = ssub.s32 1, %s11
  %s14 = scalar_select 0, %s13, %s11
  $region1: #{da1qn_forward.7} parent=0
    #allocation2 [shape = 'u8[1024]{0}', space=vmem, size = 0x400, scoped, tag = 'output window, operand 0, single buffered']
    #allocation3 [shape = 's32[1]{0}', space=sflag, size = 0x4, scoped, tag = 'scoped memory for da1qn_forward.7']
    %15 = vsyncpa [#allocation3], 0
    // Predicated region
    $region2: #{da1qn_forward.7} parent=1 // pred_check
      _
    $region3: #{da1qn_forward.7} parent=1 // pred_check_branch
      %17 = sbr.rel (0) target = $region5
    $region4: #{da1qn_forward.7} parent=1 // pred_region
      _
    $region5: #{da1qn_forward.7} parent=1 // pred_fallthru
      _
    // Predicated region
    $region6: #{da1qn_forward.7} parent=1 // pred_check
      _
    $region7: #{da1qn_forward.7} parent=1 // pred_check_branch
      %19 = sbr.rel (0) target = $region9
    $region8: #{da1qn_forward.7} parent=1 // pred_region
      _
    $region9: #{da1qn_forward.7} parent=1 // pred_fallthru
      _
    // Predicated region
    $region10: #{da1qn_forward.7} parent=1 // pred_check
      _
    $region11: #{da1qn_forward.7} parent=1 // pred_check_branch
      %21 = sbr.rel (0) target = $region13
    $region12: #{da1qn_forward.7} parent=1 // pred_region
      _
    $region13: #{da1qn_forward.7} parent=1 // pred_fallthru
      _
    // Predicated region
    $region14: #{da1qn_forward.7} parent=1 // pred_check
      _
    $region15: #{da1qn_forward.7} parent=1 // pred_check_branch
      %23 = sbr.rel (0) target = $region17
    $region16: #{da1qn_forward.7} parent=1 // pred_region
      _
    $region17: #{da1qn_forward.7} parent=1 // pred_fallthru
      _
    // Predicated region
    $region18: #{da1qn_forward.7} parent=1 // pred_check
      _
    $region19: #{da1qn_forward.7} parent=1 // pred_check_branch
      %25 = sbr.rel (0) target = $region21
    $region20: #{da1qn_forward.7} parent=1 // pred_region
      _
    $region21: #{da1qn_forward.7} parent=1 // pred_fallthru
      _
    // Predicated region
    $region22: #{da1qn_forward.7} parent=1 // pred_check
      _
    $region23: #{da1qn_forward.7} parent=1 // pred_check_branch
      %27 = sbr.rel (0) target = $region25
    $region24: #{da1qn_forward.7} parent=1 // pred_region
      _
    $region25: #{da1qn_forward.7} parent=1 // pred_fallthru
      _
    // Predicated region
    $region26: #{da1qn_forward.7} parent=1 // pred_check
      _
    $region27: #{da1qn_forward.7} parent=1 // pred_check_branch
      %29 = sbr.rel (0) target = $region29
    $region28: #{da1qn_forward.7} parent=1 // pred_region
      _
    $region29: #{da1qn_forward.7} parent=1 // pred_fallthru
      _
    // Predicated region
    $region30: #{da1qn_forward.7} parent=1 // pred_check
      _
    $region31: #{da1qn_forward.7} parent=1 // pred_check_branch
      %31 = sbr.rel (0) target = $region33
    $region32: #{da1qn_forward.7} parent=1 // pred_region
      _
    $region33: #{da1qn_forward.7} parent=1 // pred_fallthru
      _
    // Predicated region
    $region34: #{da1qn_forward.7} parent=1 // pred_check
      _
    $region35: #{da1qn_forward.7} parent=1 // pred_check_branch
      %33 = sbr.rel (0) target = $region37
    $region36: #{da1qn_forward.7} parent=1 // pred_region
      _
    $region37: #{da1qn_forward.7} parent=1 // pred_fallthru
      _
    // Predicated region
    $region38: #{da1qn_forward.7} parent=1 // pred_check
      _
    $region39: #{da1qn_forward.7} parent=1 // pred_check_branch
      %35 = sbr.rel (0) target = $region41
    $region40: #{da1qn_forward.7} parent=1 // pred_region
      _
    $region41: #{da1qn_forward.7} parent=1 // pred_fallthru
      _
    %v37 = vld [vmem:[%s2] sm:$0x3]
    %v38 = vld [vmem:[%s3] sm:$0xff]
    %v39 = vld [vmem:[%s4] sm:$0x1]
    %v41 = vlaneseq
    %v42 = vshrl.u32 %v41, 7
    %v43 = vsub.s32 0, %v42
    %v44 = vrot.slane %v39, %v43
    %vm46 = vcmask 64512
    %v48 = vsel %vm46, %v37, 0
    %50 = vmatprep.subr.mxu0 0.0
    %51 = vmatpush1.msra.mxu0 %v38
    %52 = vmatprep.subr.mxu0 0.0
    %53 = vmatpush1.msra.mxu0 0.0
    %54 = vmatprep.subr.mxu0 0.0
    %55 = vmatpush1.msra.mxu0 0.0
    %56 = vmatprep.subr.mxu0 0.0
    %57 = vmatpush1.msra.mxu0 0.0
    %58 = vmatprep.subr.mxu0 0.0
    %59 = vmatpush1.msra.mxu0 0.0
    %60 = vmatprep.subr.mxu0 0.0
    %61 = vmatpush1.msra.mxu0 0.0
    %62 = vmatprep.subr.mxu0 0.0
    %63 = vmatpush1.msra.mxu0 0.0
    %64 = vmatprep.subr.mxu0 0.0
    %65 = vmatpush1.msra.mxu0 0.0
    %66 = vmatprep.subr.mxu0 0.0
    %67 = vmatpush1.msra.mxu0 0.0
    %68 = vmatprep.subr.mxu0 0.0
    %69 = vmatpush1.msra.mxu0 0.0
    %70 = vmatprep.subr.mxu0 0.0
    %71 = vmatpush1.msra.mxu0 0.0
    %72 = vmatprep.subr.mxu0 0.0
    %73 = vmatpush1.msra.mxu0 0.0
    %74 = vmatprep.subr.mxu0 0.0
    %75 = vmatpush1.msra.mxu0 0.0
    %76 = vmatprep.subr.mxu0 0.0
    %77 = vmatpush1.msra.mxu0 0.0
    %78 = vmatprep.subr.mxu0 0.0
    %79 = vmatpush1.msra.mxu0 0.0
    %80 = vmatprep.subr.mxu0 0.0
    %81 = vmatpush1.msra.mxu0 0.0
    %82 = vmatprep.subr.mxu0 0.0
    %83 = vmatpush1.msra.mxu0 0.0
    %84 = vmatprep.subr.mxu0 0.0
    %85 = vmatpush1.msra.mxu0 0.0
    %86 = vmatprep.subr.mxu0 0.0
    %87 = vmatpush1.msra.mxu0 0.0
    %88 = vmatprep.subr.mxu0 0.0
    %89 = vmatpush1.msra.mxu0 0.0
    %90 = vmatprep.subr.mxu0 0.0
    %91 = vmatpush1.msra.mxu0 0.0
    %92 = vmatprep.subr.mxu0 0.0
    %93 = vmatpush1.msra.mxu0 0.0
    %94 = vmatprep.subr.mxu0 0.0
    %95 = vmatpush1.msra.mxu0 0.0
    %96 = vmatprep.subr.mxu0 0.0
    %97 = vmatpush1.msra.mxu0 0.0
    %98 = vmatprep.subr.mxu0 0.0
    %99 = vmatpush1.msra.mxu0 0.0
    %100 = vmatprep.subr.mxu0 0.0
    %101 = vmatpush1.msra.mxu0 0.0
    %102 = vmatprep.subr.mxu0 0.0
    %103 = vmatpush1.msra.mxu0 0.0
    %104 = vmatprep.subr.mxu0 0.0
    %105 = vmatpush1.msra.mxu0 0.0
    %106 = vmatprep.subr.mxu0 0.0
    %107 = vmatpush1.msra.mxu0 0.0
    %108 = vmatprep.subr.mxu0 0.0
    %109 = vmatpush1.msra.mxu0 0.0
    %110 = vmatprep.subr.mxu0 0.0
    %111 = vmatpush1.msra.mxu0 0.0
    %112 = vmatprep.subr.mxu0 0.0
    %113 = vmatpush1.msra.mxu0 0.0
    %114 = vmatprep.mubr.f32.mxu0 0.0
    %115 = vmatmul.mubr.f32.gmra.mrb[0].mxu0 %v48
    %v116 = vpop.f32.mrb[0].mxu0
    %v117 = vadd.f32 %v44, %v116
    %v118 = vpop.f32.mrb[0].mxu0
    %119 = vdwg.mxu0
    %v120 = vld [vmem:[%s1] sm:$0xf]
    %v121 = vld [vmem:[%s1 + $0x4] sm:$0xf]
    %v122 = vld [vmem:[%s1 + $0x8] sm:$0xf]
    %v123 = vld [vmem:[%s1 + $0xc] sm:$0xf]
    %v124 = vld [vmem:[%s1 + $0x10] sm:$0xf]
    %v125 = vld [vmem:[%s1 + $0x14] sm:$0xf]
    %v126 = vld [vmem:[%s1 + $0x18] sm:$0x1]
    %v127 = vld [vmem:[%s1 + $0x1c] sm:$0xf]
    %v128 = vld [vmem:[%s1 + $0x20] sm:$0xf]
    %v129 = vld [vmem:[%s1 + $0x24] sm:$0xf]
    %v130 = vld [vmem:[%s1 + $0x28] sm:$0xf]
    %v131 = vld [vmem:[%s1 + $0x2c] sm:$0xf]
    %v132 = vld [vmem:[%s1 + $0x30] sm:$0xf]
    %v133 = vld [vmem:[%s1 + $0x34] sm:$0x1]
    %v134 = vunpack.c.l.bf16 %v120
    %v135 = vunpack.c.l.bf16 %v121
    %v136 = vunpack.c.l.bf16 %v122
    %v137 = vunpack.c.l.bf16 %v123
    %v138 = vunpack.c.l.bf16 %v124
    %v139 = vunpack.c.l.bf16 %v125
    %v140 = vunpack.c.l.bf16 %v126
    %v141 = vunpack.c.l.bf16 %v127
    %v142 = vunpack.c.l.bf16 %v128
    %v143 = vunpack.c.l.bf16 %v129
    %v144 = vunpack.c.l.bf16 %v130
    %v145 = vunpack.c.l.bf16 %v131
    %v146 = vunpack.c.l.bf16 %v132
    %v147 = vunpack.c.l.bf16 %v133
    %v150 = vunpack.c.l.s4 1966171168
    %v151 = vunpack.c.0.s8 %v150
    %v152 = vlaneseq
    %v153 = vshrl.u32 %v152, 7
    %v154 = vsub.s32 %v151, %v153
    %v155 = vrot.slane %v117, %v154
    %v156 = vcombine.high %v155, %v155
    %v158 = vunpack.c.l.s4 1966171168
    %v159 = vunpack.c.0.s8 %v158
    %v160 = vlaneseq
    %v161 = vshrl.u32 %v160, 7
    %v162 = vsub.s32 %v159, %v161
    %v163 = vrot.slane %v155, %v162
    %v165 = vunpack.c.l.s4 1966171168
    %v166 = vunpack.c.0.s8 %v165
    %v167 = vlaneseq
    %v168 = vshrl.u32 %v167, 7
    %v169 = vsub.s32 %v166, %v168
    %v170 = vrot.slane %v156, %v169
    %v171 = vlaneseq
    %v172 = vshrl.u32 %v171, 7
    %v173 = vsub.s32 0, %v172
    %v174 = vrot.slane %v163, %v173
    %v175 = vlaneseq
    %v176 = vshrl.u32 %v175, 7
    %v177 = vsub.s32 0, %v176
    %v178 = vrot.slane %v170, %v177
    %v181 = vmul.f32 %v134, %v174
    %v182 = vmul.f32 %v135, %v174
    %v183 = vmul.f32 %v136, %v174
    %v184 = vmul.f32 %v137, %v174
    %v185 = vmul.f32 %v138, %v174
    %v186 = vmul.f32 %v139, %v174
    %v187 = vmul.f32 %v140, %v174
    %v188 = vmul.f32 %v141, %v178
    %v189 = vmul.f32 %v142, %v178
    %v190 = vmul.f32 %v143, %v178
    %v191 = vmul.f32 %v144, %v178
    %v192 = vmul.f32 %v145, %v178
    %v193 = vmul.f32 %v146, %v178
    %v194 = vmul.f32 %v147, %v178
    %vm195 = vcmask 261120
    %v196 = vsel %vm195, %v181, 0.0
    %197 = vadd.xlane.f32.xlu0 %v196
    %v198 = vpop.xlane.xlu0 %197
    %v199 = vsel %vm195, %v182, 0.0
    %200 = vadd.xlane.f32.xlu0 %v199
    %v201 = vpop.xlane.xlu0 %200
    %v202 = vsel %vm195, %v183, 0.0
    %203 = vadd.xlane.f32.xlu0 %v202
    %v204 = vpop.xlane.xlu0 %203
    %v205 = vsel %vm195, %v184, 0.0
    %206 = vadd.xlane.f32.xlu0 %v205
    %v207 = vpop.xlane.xlu0 %206
    %v208 = vsel %vm195, %v185, 0.0
    %209 = vadd.xlane.f32.xlu0 %v208
    %v210 = vpop.xlane.xlu0 %209
    %v211 = vsel %vm195, %v186, 0.0
    %212 = vadd.xlane.f32.xlu0 %v211
    %v213 = vpop.xlane.xlu0 %212
    %vm214 = vcmask 253952
    %v215 = vsel %vm214, %v187, 0.0
    %216 = vadd.xlane.f32.xlu0 %v215
    %v217 = vpop.xlane.xlu0 %216
    %v218 = vsel %vm195, %v188, 0.0
    %219 = vadd.xlane.f32.xlu0 %v218
    %v220 = vpop.xlane.xlu0 %219
    %v221 = vsel %vm195, %v189, 0.0
    %222 = vadd.xlane.f32.xlu0 %v221
    %v223 = vpop.xlane.xlu0 %222
    %v224 = vsel %vm195, %v190, 0.0
    %225 = vadd.xlane.f32.xlu0 %v224
    %v226 = vpop.xlane.xlu0 %225
    %v227 = vsel %vm195, %v191, 0.0
    %228 = vadd.xlane.f32.xlu0 %v227
    %v229 = vpop.xlane.xlu0 %228
    %v230 = vsel %vm195, %v192, 0.0
    %231 = vadd.xlane.f32.xlu0 %v230
    %v232 = vpop.xlane.xlu0 %231
    %v233 = vsel %vm195, %v193, 0.0
    %234 = vadd.xlane.f32.xlu0 %v233
    %v235 = vpop.xlane.xlu0 %234
    %v236 = vsel %vm214, %v194, 0.0
    %237 = vadd.xlane.f32.xlu0 %v236
    %v238 = vpop.xlane.xlu0 %237
    %v253 = vlaneseq
    %v254 = vand.u32 %v253, 127
    %v255 = vlaneseq
    %v256 = vshrl.u32 %v255, 7
    %v257 = vsub.s32 %v254, %v256
    %v258 = vrot.slane %v198, %v257
    %v259 = vadd.s32 %v254, 4294967288
    %v260 = vlaneseq
    %v261 = vshrl.u32 %v260, 7
    %v262 = vsub.s32 %v259, %v261
    %v263 = vrot.slane %v201, %v262
    %vm264 = vcmask 130112
    %v265 = vsel %vm264, %v263, %v258
    %v266 = vadd.s32 %v254, 4294967280
    %v267 = vlaneseq
    %v268 = vshrl.u32 %v267, 7
    %v269 = vsub.s32 %v266, %v268
    %v270 = vrot.slane %v204, %v269
    %vm271 = vcmask 195712
    %v272 = vsel %vm271, %v270, %v265
    %v273 = vadd.s32 %v254, 4294967272
    %v274 = vlaneseq
    %v275 = vshrl.u32 %v274, 7
    %v276 = vsub.s32 %v273, %v275
    %v277 = vrot.slane %v207, %v276
    %vm278 = vcmask 261312
    %v279 = vsel %vm278, %v277, %v272
    %v280 = vadd.s32 %v254, 4294967264
    %v281 = vlaneseq
    %v282 = vshrl.u32 %v281, 7
    %v283 = vsub.s32 %v280, %v282
    %v284 = vrot.slane %v210, %v283
    %vm285 = vcmask 326912
    %v286 = vsel %vm285, %v284, %v279
    %v287 = vadd.s32 %v254, 4294967256
    %v288 = vlaneseq
    %v289 = vshrl.u32 %v288, 7
    %v290 = vsub.s32 %v287, %v289
    %v291 = vrot.slane %v213, %v290
    %vm292 = vcmask 392512
    %v293 = vsel %vm292, %v291, %v286
    %v294 = vadd.s32 %v254, 4294967248
    %v295 = vlaneseq
    %v296 = vshrl.u32 %v295, 7
    %v297 = vsub.s32 %v294, %v296
    %v298 = vrot.slane %v217, %v297
    %vm299 = vcmask 458112
    %v300 = vsel %vm299, %v298, %v293
    %v301 = vlaneseq
    %v302 = vshrl.u32 %v301, 7
    %v303 = vsub.s32 %v254, %v302
    %v304 = vrot.slane %v220, %v303
    %v305 = vlaneseq
    %v306 = vshrl.u32 %v305, 7
    %v307 = vsub.s32 %v259, %v306
    %v308 = vrot.slane %v223, %v307
    %v309 = vsel %vm264, %v308, %v304
    %v310 = vlaneseq
    %v311 = vshrl.u32 %v310, 7
    %v312 = vsub.s32 %v266, %v311
    %v313 = vrot.slane %v226, %v312
    %v314 = vsel %vm271, %v313, %v309
    %v315 = vlaneseq
    %v316 = vshrl.u32 %v315, 7
    %v317 = vsub.s32 %v273, %v316
    %v318 = vrot.slane %v229, %v317
    %v319 = vsel %vm278, %v318, %v314
    %v320 = vlaneseq
    %v321 = vshrl.u32 %v320, 7
    %v322 = vsub.s32 %v280, %v321
    %v323 = vrot.slane %v232, %v322
    %v324 = vsel %vm285, %v323, %v319
    %v325 = vlaneseq
    %v326 = vshrl.u32 %v325, 7
    %v327 = vsub.s32 %v287, %v326
    %v328 = vrot.slane %v235, %v327
    %v329 = vsel %vm292, %v328, %v324
    %v330 = vlaneseq
    %v331 = vshrl.u32 %v330, 7
    %v332 = vsub.s32 %v294, %v331
    %v333 = vrot.slane %v238, %v332
    %v334 = vsel %vm299, %v333, %v329
    %vm335 = vcmask 1041409
    %v336 = vsel %vm335, %v334, %v300
    %vm338 = vcmask 394240
    %v339 = vsel %vm338, %v336, -inf
    %340 = vmax.xlane.f32.xlu0 %v339
    %v341 = vpop.xlane.xlu0 %340
    %v343 = vlaneseq
    %v344 = vshrl.u32 %v343, 7
    %v345 = vsub.s32 0, %v344
    %v346 = vrot.slane %v341, %v345
    %v347 = vlaneseq
    %v348 = vshrl.u32 %v347, 7
    %v349 = vsub.s32 1, %v348
    %v350 = vrot.slane %v341, %v349
    %v353 = vsub.f32 %v198, %v346
    %v354 = vsub.f32 %v201, %v346
    %v355 = vsub.f32 %v204, %v346
    %v356 = vsub.f32 %v207, %v346
    %v357 = vsub.f32 %v210, %v346
    %v358 = vsub.f32 %v213, %v346
    %v359 = vsub.f32 %v217, %v346
    %v360 = vsub.f32 %v220, %v350
    %v361 = vsub.f32 %v223, %v350
    %v362 = vsub.f32 %v226, %v350
    %v363 = vsub.f32 %v229, %v350
    %v364 = vsub.f32 %v232, %v350
    %v365 = vsub.f32 %v235, %v350
    %v366 = vsub.f32 %v238, %v350
    %v367 = vmul.f32 %v353, 1.442695
    %v368 = vpow.pop %v367
    %v369 = vmul.f32 %v354, 1.442695
    %v370 = vpow.pop %v369
    %v371 = vmul.f32 %v355, 1.442695
    %v372 = vpow.pop %v371
    %v373 = vmul.f32 %v356, 1.442695
    %v374 = vpow.pop %v373
    %v375 = vmul.f32 %v357, 1.442695
    %v376 = vpow.pop %v375
    %v377 = vmul.f32 %v358, 1.442695
    %v378 = vpow.pop %v377
    %v379 = vmul.f32 %v359, 1.442695
    %v380 = vpow.pop %v379
    %v381 = vmul.f32 %v360, 1.442695
    %v382 = vpow.pop %v381
    %v383 = vmul.f32 %v361, 1.442695
    %v384 = vpow.pop %v383
    %v385 = vmul.f32 %v362, 1.442695
    %v386 = vpow.pop %v385
    %v387 = vmul.f32 %v363, 1.442695
    %v388 = vpow.pop %v387
    %v389 = vmul.f32 %v364, 1.442695
    %v390 = vpow.pop %v389
    %v391 = vmul.f32 %v365, 1.442695
    %v392 = vpow.pop %v391
    %v393 = vmul.f32 %v366, 1.442695
    %v394 = vpow.pop %v393
    %409 = vset.pattern.permute.xlu0 0
    %410 = vperm.xlu0 %409, %v368
    %v411 = vpop.permute.xlu0 %410
    %412 = vset.pattern.permute.xlu0 0
    %413 = vperm.xlu0 %412, %v370
    %v414 = vpop.permute.xlu0 %413
    %415 = vset.pattern.permute.xlu0 0
    %416 = vperm.xlu0 %415, %v372
    %v417 = vpop.permute.xlu0 %416
    %418 = vset.pattern.permute.xlu0 0
    %419 = vperm.xlu0 %418, %v374
    %v420 = vpop.permute.xlu0 %419
    %421 = vset.pattern.permute.xlu0 0
    %422 = vperm.xlu0 %421, %v376
    %v423 = vpop.permute.xlu0 %422
    %424 = vset.pattern.permute.xlu0 0
    %425 = vperm.xlu0 %424, %v378
    %v426 = vpop.permute.xlu0 %425
    %427 = vset.pattern.permute.xlu0 0
    %428 = vperm.xlu0 %427, %v380
    %v429 = vpop.permute.xlu0 %428
    %430 = vset.pattern.permute.xlu0 0
    %431 = vperm.xlu0 %430, %v382
    %v432 = vpop.permute.xlu0 %431
    %433 = vset.pattern.permute.xlu0 0
    %434 = vperm.xlu0 %433, %v384
    %v435 = vpop.permute.xlu0 %434
    %436 = vset.pattern.permute.xlu0 0
    %437 = vperm.xlu0 %436, %v386
    %v438 = vpop.permute.xlu0 %437
    %439 = vset.pattern.permute.xlu0 0
    %440 = vperm.xlu0 %439, %v388
    %v441 = vpop.permute.xlu0 %440
    %442 = vset.pattern.permute.xlu0 0
    %443 = vperm.xlu0 %442, %v390
    %v444 = vpop.permute.xlu0 %443
    %445 = vset.pattern.permute.xlu0 0
    %446 = vperm.xlu0 %445, %v392
    %v447 = vpop.permute.xlu0 %446
    %448 = vset.pattern.permute.xlu0 0
    %449 = vperm.xlu0 %448, %v394
    %v450 = vpop.permute.xlu0 %449
    %v451 = vlaneseq
    %v452 = vshrl.u32 %v451, 7
    %v453 = vsub.s32 %v254, %v452
    %v454 = vrot.slane %v411, %v453
    %v455 = vlaneseq
    %v456 = vshrl.u32 %v455, 7
    %v457 = vsub.s32 %v259, %v456
    %v458 = vrot.slane %v414, %v457
    %v459 = vsel %vm264, %v458, %v454
    %v460 = vlaneseq
    %v461 = vshrl.u32 %v460, 7
    %v462 = vsub.s32 %v266, %v461
    %v463 = vrot.slane %v417, %v462
    %v464 = vsel %vm271, %v463, %v459
    %v465 = vlaneseq
    %v466 = vshrl.u32 %v465, 7
    %v467 = vsub.s32 %v273, %v466
    %v468 = vrot.slane %v420, %v467
    %v469 = vsel %vm278, %v468, %v464
    %v470 = vlaneseq
    %v471 = vshrl.u32 %v470, 7
    %v472 = vsub.s32 %v280, %v471
    %v473 = vrot.slane %v423, %v472
    %v474 = vsel %vm285, %v473, %v469
    %v475 = vlaneseq
    %v476 = vshrl.u32 %v475, 7
    %v477 = vsub.s32 %v287, %v476
    %v478 = vrot.slane %v426, %v477
    %v479 = vsel %vm292, %v478, %v474
    %v480 = vlaneseq
    %v481 = vshrl.u32 %v480, 7
    %v482 = vsub.s32 %v294, %v481
    %v483 = vrot.slane %v429, %v482
    %v484 = vsel %vm299, %v483, %v479
    %v485 = vlaneseq
    %v486 = vshrl.u32 %v485, 7
    %v487 = vsub.s32 %v254, %v486
    %v488 = vrot.slane %v432, %v487
    %v489 = vlaneseq
    %v490 = vshrl.u32 %v489, 7
    %v491 = vsub.s32 %v259, %v490
    %v492 = vrot.slane %v435, %v491
    %v493 = vsel %vm264, %v492, %v488
    %v494 = vlaneseq
    %v495 = vshrl.u32 %v494, 7
    %v496 = vsub.s32 %v266, %v495
    %v497 = vrot.slane %v438, %v496
    %v498 = vsel %vm271, %v497, %v493
    %v499 = vlaneseq
    %v500 = vshrl.u32 %v499, 7
    %v501 = vsub.s32 %v273, %v500
    %v502 = vrot.slane %v441, %v501
    %v503 = vsel %vm278, %v502, %v498
    %v504 = vlaneseq
    %v505 = vshrl.u32 %v504, 7
    %v506 = vsub.s32 %v280, %v505
    %v507 = vrot.slane %v444, %v506
    %v508 = vsel %vm285, %v507, %v503
    %v509 = vlaneseq
    %v510 = vshrl.u32 %v509, 7
    %v511 = vsub.s32 %v287, %v510
    %v512 = vrot.slane %v447, %v511
    %v513 = vsel %vm292, %v512, %v508
    %v514 = vlaneseq
    %v515 = vshrl.u32 %v514, 7
    %v516 = vsub.s32 %v294, %v515
    %v517 = vrot.slane %v450, %v516
    %v518 = vsel %vm299, %v517, %v513
    %v519 = vsel %vm335, %v518, %v484
    %v521 = vsel %vm338, %v519, 0.0
    %522 = vadd.xlane.f32.xlu0 %v521
    %v523 = vpop.xlane.xlu0 %522
    %v524 = vrcp.pop %v523
    %v526 = vlaneseq
    %v527 = vshrl.u32 %v526, 7
    %v528 = vsub.s32 0, %v527
    %v529 = vrot.slane %v524, %v528
    %v530 = vlaneseq
    %v531 = vshrl.u32 %v530, 7
    %v532 = vsub.s32 1, %v531
    %v533 = vrot.slane %v524, %v532
    %v536 = vmul.f32 %v368, %v529
    %v537 = vmul.f32 %v370, %v529
    %v538 = vmul.f32 %v372, %v529
    %v539 = vmul.f32 %v374, %v529
    %v540 = vmul.f32 %v376, %v529
    %v541 = vmul.f32 %v378, %v529
    %v542 = vmul.f32 %v380, %v529
    %v543 = vmul.f32 %v382, %v533
    %v544 = vmul.f32 %v384, %v533
    %v545 = vmul.f32 %v386, %v533
    %v546 = vmul.f32 %v388, %v533
    %v547 = vmul.f32 %v390, %v533
    %v548 = vmul.f32 %v392, %v533
    %v549 = vmul.f32 %v394, %v533
    %v550 = vld [vmem:[%s0] sm:$0xf]
    %v551 = vld [vmem:[%s0 + $0x4] sm:$0xf]
    %v552 = vld [vmem:[%s0 + $0x8] sm:$0xf]
    %v553 = vld [vmem:[%s0 + $0xc] sm:$0xf]
    %v554 = vld [vmem:[%s0 + $0x10] sm:$0xf]
    %v555 = vld [vmem:[%s0 + $0x14] sm:$0xf]
    %v556 = vld [vmem:[%s0 + $0x18] sm:$0x1]
    %v557 = vld [vmem:[%s0 + $0x1c] sm:$0xf]
    %v558 = vld [vmem:[%s0 + $0x20] sm:$0xf]
    %v559 = vld [vmem:[%s0 + $0x24] sm:$0xf]
    %v560 = vld [vmem:[%s0 + $0x28] sm:$0xf]
    %v561 = vld [vmem:[%s0 + $0x2c] sm:$0xf]
    %v562 = vld [vmem:[%s0 + $0x30] sm:$0xf]
    %v563 = vld [vmem:[%s0 + $0x34] sm:$0x1]
    %v564 = vunpack.c.l.bf16 %v550
    %v565 = vunpack.c.l.bf16 %v551
    %v566 = vunpack.c.l.bf16 %v552
    %v567 = vunpack.c.l.bf16 %v553
    %v568 = vunpack.c.l.bf16 %v554
    %v569 = vunpack.c.l.bf16 %v555
    %v570 = vunpack.c.l.bf16 %v556
    %v571 = vunpack.c.l.bf16 %v557
    %v572 = vunpack.c.l.bf16 %v558
    %v573 = vunpack.c.l.bf16 %v559
    %v574 = vunpack.c.l.bf16 %v560
    %v575 = vunpack.c.l.bf16 %v561
    %v576 = vunpack.c.l.bf16 %v562
    %v577 = vunpack.c.l.bf16 %v563
    %579 = vset.pattern.permute.xlu0 0
    %580 = vperm.xlu0 %579, %v536
    %v581 = vpop.permute.xlu0 %580
    %584 = vset.pattern.permute.xlu0 0
    %585 = vperm.xlu0 %584, %v537
    %v586 = vpop.permute.xlu0 %585
    %589 = vset.pattern.permute.xlu0 0
    %590 = vperm.xlu0 %589, %v538
    %v591 = vpop.permute.xlu0 %590
    %594 = vset.pattern.permute.xlu0 0
    %595 = vperm.xlu0 %594, %v539
    %v596 = vpop.permute.xlu0 %595
    %599 = vset.pattern.permute.xlu0 0
    %600 = vperm.xlu0 %599, %v540
    %v601 = vpop.permute.xlu0 %600
    %604 = vset.pattern.permute.xlu0 0
    %605 = vperm.xlu0 %604, %v541
    %v606 = vpop.permute.xlu0 %605
    %609 = vset.pattern.permute.xlu0 0
    %610 = vperm.xlu0 %609, %v542
    %v611 = vpop.permute.xlu0 %610
    %614 = vset.pattern.permute.xlu0 0
    %615 = vperm.xlu0 %614, %v543
    %v616 = vpop.permute.xlu0 %615
    %619 = vset.pattern.permute.xlu0 0
    %620 = vperm.xlu0 %619, %v544
    %v621 = vpop.permute.xlu0 %620
    %624 = vset.pattern.permute.xlu0 0
    %625 = vperm.xlu0 %624, %v545
    %v626 = vpop.permute.xlu0 %625
    %629 = vset.pattern.permute.xlu0 0
    %630 = vperm.xlu0 %629, %v546
    %v631 = vpop.permute.xlu0 %630
    %634 = vset.pattern.permute.xlu0 0
    %635 = vperm.xlu0 %634, %v547
    %v636 = vpop.permute.xlu0 %635
    %639 = vset.pattern.permute.xlu0 0
    %640 = vperm.xlu0 %639, %v548
    %v641 = vpop.permute.xlu0 %640
    %644 = vset.pattern.permute.xlu0 0
    %645 = vperm.xlu0 %644, %v549
    %v646 = vpop.permute.xlu0 %645
    %v648 = vmul.f32 %v564, %v581
    %v649 = vmul.f32 %v565, %v586
    %v650 = vmul.f32 %v566, %v591
    %v651 = vmul.f32 %v567, %v596
    %v652 = vmul.f32 %v568, %v601
    %v653 = vmul.f32 %v569, %v606
    %v654 = vmul.f32 %v570, %v611
    %v655 = vmul.f32 %v571, %v616
    %v656 = vmul.f32 %v572, %v621
    %v657 = vmul.f32 %v573, %v626
    %v658 = vmul.f32 %v574, %v631
    %v659 = vmul.f32 %v575, %v636
    %v660 = vmul.f32 %v576, %v641
    %v661 = vmul.f32 %v577, %v646
    %vm662 = vcmask 523264
    %v663 = vsel %vm662, %v648, 0.0
    %v664 = vsel %vm662, %v649, 0.0
    %v665 = vadd.f32 %v663, %v664
    %v666 = vsel %vm662, %v650, 0.0
    %v667 = vadd.f32 %v665, %v666
    %v668 = vsel %vm662, %v651, 0.0
    %v669 = vadd.f32 %v667, %v668
    %v670 = vsel %vm662, %v652, 0.0
    %v671 = vadd.f32 %v669, %v670
    %v672 = vsel %vm662, %v653, 0.0
    %v673 = vadd.f32 %v671, %v672
    %vm674 = vcmask 516096
    %v675 = vsel %vm674, %v654, 0.0
    %v676 = vadd.f32 %v673, %v675
    %v677 = vrot.slane %v676, 4
    %v678 = vadd.f32 %v676, %v677
    %v679 = vrot.slane %v678, 2
    %v680 = vadd.f32 %v678, %v679
    %v681 = vrot.slane %v680, 1
    %v682 = vadd.f32 %v680, %v681
    %v683 = vsel %vm662, %v655, 0.0
    %v684 = vsel %vm662, %v656, 0.0
    %v685 = vadd.f32 %v683, %v684
    %v686 = vsel %vm662, %v657, 0.0
    %v687 = vadd.f32 %v685, %v686
    %v688 = vsel %vm662, %v658, 0.0
    %v689 = vadd.f32 %v687, %v688
    %v690 = vsel %vm662, %v659, 0.0
    %v691 = vadd.f32 %v689, %v690
    %v692 = vsel %vm662, %v660, 0.0
    %v693 = vadd.f32 %v691, %v692
    %v694 = vsel %vm674, %v661, 0.0
    %v695 = vadd.f32 %v693, %v694
    %v696 = vrot.slane %v695, 4
    %v697 = vadd.f32 %v695, %v696
    %v698 = vrot.slane %v697, 2
    %v699 = vadd.f32 %v697, %v698
    %v700 = vrot.slane %v699, 1
    %v701 = vadd.f32 %v699, %v700
    %v702 = vpack.c.bf16 %v682, %v682
    %v703 = vpack.c.bf16 %v701, %v701
    %v704 = vld [vmem:[%s5] sm:$0xff]
    %v705 = vld [vmem:[%s5 + $0x8] sm:$0xff]
    %v706 = vld [vmem:[%s5 + $0x10] sm:$0xff]
    %v707 = vld [vmem:[%s5 + $0x18] sm:$0xff]
    %v708 = vld [vmem:[%s5 + $0x20] sm:$0xff]
    %v709 = vld [vmem:[%s5 + $0x28] sm:$0xff]
    %v710 = vld [vmem:[%s5 + $0x30] sm:$0xff]
    %v711 = vld [vmem:[%s5 + $0x38] sm:$0xff]
    %v712 = vld [vmem:[%s5 + $0x40] sm:$0xff]
    %v713 = vld [vmem:[%s5 + $0x48] sm:$0xff]
    %v714 = vld [vmem:[%s5 + $0x50] sm:$0xff]
    %v715 = vld [vmem:[%s5 + $0x58] sm:$0xff]
    %v716 = vld [vmem:[%s5 + $0x60] sm:$0xff]
    %v717 = vld [vmem:[%s5 + $0x68] sm:$0xff]
    %v718 = vld [vmem:[%s5 + $0x70] sm:$0xff]
    %v719 = vld [vmem:[%s5 + $0x78] sm:$0xff]
    %v720 = vld [vmem:[%s6] sm:$0xf]
    %v722 = vlaneseq
    %v723 = vshrl.u32 %v722, 7
    %v724 = vsub.s32 0, %v723
    %v725 = vrot.slane %v720, %v724
    %v726 = vlaneseq
    %v727 = vshrl.u32 %v726, 7
    %v728 = vsub.s32 1, %v727
    %v729 = vrot.slane %v720, %v728
    %v730 = vlaneseq
    %v731 = vshrl.u32 %v730, 7
    %v732 = vsub.s32 2, %v731
    %v733 = vrot.slane %v720, %v732
    %v734 = vlaneseq
    %v735 = vshrl.u32 %v734, 7
    %v736 = vsub.s32 3, %v735
    %v737 = vrot.slane %v720, %v736
    %v744 = vunpack.c.l.b16 %v702
    %v745 = vunpack.c.l.b16 %v703
    %v746 = vsel %vm335, %v745, %v744
    %v747 = vpack.c.b16 %v746, %v746
    %v764 = vunpack.c.l.b16 %v704
    %v765 = vunpack.c.h.b16 %v704
    %v766 = vunpack.c.l.b16 %v705
    %v767 = vunpack.c.h.b16 %v705
    %v768 = vunpack.c.l.b16 %v706
    %v769 = vunpack.c.h.b16 %v706
    %v770 = vunpack.c.l.b16 %v707
    %v771 = vunpack.c.h.b16 %v707
    %v772 = vunpack.c.l.b16 %v708
    %v773 = vunpack.c.h.b16 %v708
    %v774 = vunpack.c.l.b16 %v709
    %v775 = vunpack.c.h.b16 %v709
    %v776 = vunpack.c.l.b16 %v710
    %v777 = vunpack.c.h.b16 %v710
    %v778 = vunpack.c.l.b16 %v711
    %v779 = vunpack.c.h.b16 %v711
    %v780 = vunpack.c.l.b16 %v712
    %v781 = vunpack.c.h.b16 %v712
    %v782 = vunpack.c.l.b16 %v713
    %v783 = vunpack.c.h.b16 %v713
    %v784 = vunpack.c.l.b16 %v714
    %v785 = vunpack.c.h.b16 %v714
    %v786 = vunpack.c.l.b16 %v715
    %v787 = vunpack.c.h.b16 %v715
    %v788 = vunpack.c.l.b16 %v716
    %v789 = vunpack.c.h.b16 %v716
    %v790 = vunpack.c.l.b16 %v717
    %v791 = vunpack.c.h.b16 %v717
    %v792 = vunpack.c.l.b16 %v718
    %v793 = vunpack.c.h.b16 %v718
    %v794 = vunpack.c.l.b16 %v719
    %v795 = vunpack.c.h.b16 %v719
    %v796 = vpack.c.b16 %v768, %v764
    %v797 = vpack.c.b16 %v769, %v765
    %v798 = vpack.c.b16 %v770, %v766
    %v799 = vpack.c.b16 %v771, %v767
    %v800 = vpack.c.b16 %v776, %v772
    %v801 = vpack.c.b16 %v777, %v773
    %v802 = vpack.c.b16 %v778, %v774
    %v803 = vpack.c.b16 %v779, %v775
    %v804 = vpack.c.b16 %v784, %v780
    %v805 = vpack.c.b16 %v785, %v781
    %v806 = vpack.c.b16 %v786, %v782
    %v807 = vpack.c.b16 %v787, %v783
    %v808 = vpack.c.b16 %v792, %v788
    %v809 = vpack.c.b16 %v793, %v789
    %v810 = vpack.c.b16 %v794, %v790
    %v811 = vpack.c.b16 %v795, %v791
    %v829 = vsel %vm662, %v747, 0
    %831 = vmatprep.subr.bf16.mxu0 %v797
    %832 = vmatpush1.bf16.msra.mxu0 %v796
    %833 = vmatprep.subr.bf16.mxu0 %v801
    %834 = vmatpush1.bf16.msra.mxu0 %v800
    %835 = vmatprep.subr.bf16.mxu0 %v805
    %836 = vmatpush1.bf16.msra.mxu0 %v804
    %837 = vmatprep.subr.bf16.mxu0 %v809
    %838 = vmatpush1.bf16.msra.mxu0 %v808
    %839 = vmatprep.subr.bf16.mxu0 0
    %840 = vmatpush1.bf16.msra.mxu0 0
    %841 = vmatprep.subr.bf16.mxu0 0
    %842 = vmatpush1.bf16.msra.mxu0 0
    %843 = vmatprep.subr.bf16.mxu0 0
    %844 = vmatpush1.bf16.msra.mxu0 0
    %845 = vmatprep.subr.bf16.mxu0 0
    %846 = vmatpush1.bf16.msra.mxu0 0
    %847 = vmatprep.subr.bf16.mxu0 0
    %848 = vmatpush1.bf16.msra.mxu0 0
    %849 = vmatprep.subr.bf16.mxu0 0
    %850 = vmatpush1.bf16.msra.mxu0 0
    %851 = vmatprep.subr.bf16.mxu0 0
    %852 = vmatpush1.bf16.msra.mxu0 0
    %853 = vmatprep.subr.bf16.mxu0 0
    %854 = vmatpush1.bf16.msra.mxu0 0
    %855 = vmatprep.subr.bf16.mxu0 0
    %856 = vmatpush1.bf16.msra.mxu0 0
    %857 = vmatprep.subr.bf16.mxu0 0
    %858 = vmatpush1.bf16.msra.mxu0 0
    %859 = vmatprep.subr.bf16.mxu0 0
    %860 = vmatpush1.bf16.msra.mxu0 0
    %861 = vmatprep.subr.bf16.mxu0 0
    %862 = vmatpush1.bf16.msra.mxu0 0
    %863 = vmatprep.mubr.bf16.mxu0 0
    %864 = vmatmul.mubr.bf16.gmra.mrb[0].mxu0 %v829
    %v865 = vpop.f32.mrb[0].mxu0
    %v866 = vadd.f32 %v725, %v865
    %v867 = vpop.f32.mrb[0].mxu0
    %v868 = vadd.f32 %v729, %v867
    %v869 = vpop.f32.mrb[0].mxu0
    %v870 = vpop.f32.mrb[0].mxu0
    %871 = vdwg.mxu0
    %872 = vmatprep.subr.bf16.mxu0 %v799
    %873 = vmatpush1.bf16.msra.mxu0 %v798
    %874 = vmatprep.subr.bf16.mxu0 %v803
    %875 = vmatpush1.bf16.msra.mxu0 %v802
    %876 = vmatprep.subr.bf16.mxu0 %v807
    %877 = vmatpush1.bf16.msra.mxu0 %v806
    %878 = vmatprep.subr.bf16.mxu0 %v811
    %879 = vmatpush1.bf16.msra.mxu0 %v810
    %880 = vmatprep.subr.bf16.mxu0 0
    %881 = vmatpush1.bf16.msra.mxu0 0
    %882 = vmatprep.subr.bf16.mxu0 0
    %883 = vmatpush1.bf16.msra.mxu0 0
    %884 = vmatprep.subr.bf16.mxu0 0
    %885 = vmatpush1.bf16.msra.mxu0 0
    %886 = vmatprep.subr.bf16.mxu0 0
    %887 = vmatpush1.bf16.msra.mxu0 0
    %888 = vmatprep.subr.bf16.mxu0 0
    %889 = vmatpush1.bf16.msra.mxu0 0
    %890 = vmatprep.subr.bf16.mxu0 0
    %891 = vmatpush1.bf16.msra.mxu0 0
    %892 = vmatprep.subr.bf16.mxu0 0
    %893 = vmatpush1.bf16.msra.mxu0 0
    %894 = vmatprep.subr.bf16.mxu0 0
    %895 = vmatpush1.bf16.msra.mxu0 0
    %896 = vmatprep.subr.bf16.mxu0 0
    %897 = vmatpush1.bf16.msra.mxu0 0
    %898 = vmatprep.subr.bf16.mxu0 0
    %899 = vmatpush1.bf16.msra.mxu0 0
    %900 = vmatprep.subr.bf16.mxu0 0
    %901 = vmatpush1.bf16.msra.mxu0 0
    %902 = vmatprep.subr.bf16.mxu0 0
    %903 = vmatpush1.bf16.msra.mxu0 0
    %904 = vmatprep.mubr.bf16.mxu0 0
    %905 = vmatmul.mubr.bf16.gmra.mrb[0].mxu0 %v829
    %v906 = vpop.f32.mrb[0].mxu0
    %v907 = vadd.f32 %v733, %v906
    %v908 = vpop.f32.mrb[0].mxu0
    %v909 = vadd.f32 %v737, %v908
    %v910 = vpop.f32.mrb[0].mxu0
    %v911 = vpop.f32.mrb[0].mxu0
    %912 = vdwg.mxu0
    %v913 = vmax.f32 %v866, 0.0
    %v914 = vmax.f32 %v868, 0.0
    %v915 = vmax.f32 %v907, 0.0
    %v916 = vmax.f32 %v909, 0.0
    %v917 = vpack.c.bf16 %v913, %v913
    %v918 = vpack.c.bf16 %v914, %v914
    %v919 = vpack.c.bf16 %v915, %v915
    %v920 = vpack.c.bf16 %v916, %v916
    %v921 = vld [vmem:[%s7] sm:$0xf]
    %v922 = vld [vmem:[%s7 + $0x4] sm:$0xf]
    %v923 = vld [vmem:[%s7 + $0x8] sm:$0xf]
    %v924 = vld [vmem:[%s7 + $0xc] sm:$0xf]
    %v925 = vld [vmem:[%s7 + $0x10] sm:$0xf]
    %v926 = vld [vmem:[%s7 + $0x14] sm:$0xf]
    %v927 = vld [vmem:[%s7 + $0x18] sm:$0xf]
    %v928 = vld [vmem:[%s7 + $0x1c] sm:$0xf]
    %v929 = vld [vmem:[%s7 + $0x20] sm:$0xf]
    %v930 = vld [vmem:[%s7 + $0x24] sm:$0xf]
    %v931 = vld [vmem:[%s7 + $0x28] sm:$0xf]
    %v932 = vld [vmem:[%s7 + $0x2c] sm:$0xf]
    %v933 = vld [vmem:[%s7 + $0x30] sm:$0xf]
    %v934 = vld [vmem:[%s7 + $0x34] sm:$0xf]
    %v935 = vld [vmem:[%s7 + $0x38] sm:$0xf]
    %v936 = vld [vmem:[%s7 + $0x3c] sm:$0xf]
    %v937 = vld [vmem:[%s7 + $0x40] sm:$0xf]
    %v938 = vld [vmem:[%s7 + $0x44] sm:$0xf]
    %v939 = vld [vmem:[%s7 + $0x48] sm:$0xf]
    %v940 = vld [vmem:[%s7 + $0x4c] sm:$0xf]
    %v941 = vld [vmem:[%s7 + $0x50] sm:$0xf]
    %v942 = vld [vmem:[%s7 + $0x54] sm:$0xf]
    %v943 = vld [vmem:[%s7 + $0x58] sm:$0xf]
    %v944 = vld [vmem:[%s7 + $0x5c] sm:$0xf]
    %v945 = vld [vmem:[%s7 + $0x60] sm:$0xf]
    %v946 = vld [vmem:[%s7 + $0x64] sm:$0xf]
    %v947 = vld [vmem:[%s7 + $0x68] sm:$0xf]
    %v948 = vld [vmem:[%s7 + $0x6c] sm:$0xf]
    %v949 = vld [vmem:[%s7 + $0x70] sm:$0xf]
    %v950 = vld [vmem:[%s7 + $0x74] sm:$0xf]
    %v951 = vld [vmem:[%s7 + $0x78] sm:$0xf]
    %v952 = vld [vmem:[%s7 + $0x7c] sm:$0xf]
    %v953 = vld [vmem:[%s7 + $0x80] sm:$0xf]
    %v954 = vld [vmem:[%s7 + $0x84] sm:$0xf]
    %v955 = vld [vmem:[%s7 + $0x88] sm:$0xf]
    %v956 = vld [vmem:[%s7 + $0x8c] sm:$0xf]
    %v957 = vld [vmem:[%s7 + $0x90] sm:$0xf]
    %v958 = vld [vmem:[%s7 + $0x94] sm:$0xf]
    %v959 = vld [vmem:[%s7 + $0x98] sm:$0xf]
    %v960 = vld [vmem:[%s7 + $0x9c] sm:$0xf]
    %v961 = vld [vmem:[%s7 + $0xa0] sm:$0xf]
    %v962 = vld [vmem:[%s7 + $0xa4] sm:$0xf]
    %v963 = vld [vmem:[%s7 + $0xa8] sm:$0xf]
    %v964 = vld [vmem:[%s7 + $0xac] sm:$0xf]
    %v965 = vld [vmem:[%s7 + $0xb0] sm:$0xf]
    %v966 = vld [vmem:[%s7 + $0xb4] sm:$0xf]
    %v967 = vld [vmem:[%s7 + $0xb8] sm:$0xf]
    %v968 = vld [vmem:[%s7 + $0xbc] sm:$0xf]
    %v969 = vld [vmem:[%s7 + $0xc0] sm:$0xf]
    %v970 = vld [vmem:[%s7 + $0xc4] sm:$0xf]
    %v971 = vld [vmem:[%s7 + $0xc8] sm:$0xf]
    %v972 = vld [vmem:[%s7 + $0xcc] sm:$0xf]
    %v973 = vld [vmem:[%s7 + $0xd0] sm:$0xf]
    %v974 = vld [vmem:[%s7 + $0xd4] sm:$0xf]
    %v975 = vld [vmem:[%s7 + $0xd8] sm:$0xf]
    %v976 = vld [vmem:[%s7 + $0xdc] sm:$0xf]
    %v977 = vld [vmem:[%s7 + $0xe0] sm:$0xf]
    %v978 = vld [vmem:[%s7 + $0xe4] sm:$0xf]
    %v979 = vld [vmem:[%s7 + $0xe8] sm:$0xf]
    %v980 = vld [vmem:[%s7 + $0xec] sm:$0xf]
    %v981 = vld [vmem:[%s7 + $0xf0] sm:$0xf]
    %v982 = vld [vmem:[%s7 + $0xf4] sm:$0xf]
    %v983 = vld [vmem:[%s7 + $0xf8] sm:$0xf]
    %v984 = vld [vmem:[%s7 + $0xfc] sm:$0xf]
    %v985 = vld [vmem:[%s8] sm:$0xff]
    %986 = vmatprep.subr.mxu0 0.0
    %987 = vmatpush1.msra.mxu0 %v985
    %988 = vmatprep.subr.mxu0 0.0
    %989 = vmatpush1.msra.mxu0 0.0
    %990 = vmatprep.subr.mxu0 0.0
    %991 = vmatpush1.msra.mxu0 0.0
    %992 = vmatprep.subr.mxu0 0.0
    %993 = vmatpush1.msra.mxu0 0.0
    %994 = vmatprep.subr.mxu0 0.0
    %995 = vmatpush1.msra.mxu0 0.0
    %996 = vmatprep.subr.mxu0 0.0
    %997 = vmatpush1.msra.mxu0 0.0
    %998 = vmatprep.subr.mxu0 0.0
    %999 = vmatpush1.msra.mxu0 0.0
    %1000 = vmatprep.subr.mxu0 0.0
    %1001 = vmatpush1.msra.mxu0 0.0
    %1002 = vmatprep.subr.mxu0 0.0
    %1003 = vmatpush1.msra.mxu0 0.0
    %1004 = vmatprep.subr.mxu0 0.0
    %1005 = vmatpush1.msra.mxu0 0.0
    %1006 = vmatprep.subr.mxu0 0.0
    %1007 = vmatpush1.msra.mxu0 0.0
    %1008 = vmatprep.subr.mxu0 0.0
    %1009 = vmatpush1.msra.mxu0 0.0
    %1010 = vmatprep.subr.mxu0 0.0
    %1011 = vmatpush1.msra.mxu0 0.0
    %1012 = vmatprep.subr.mxu0 0.0
    %1013 = vmatpush1.msra.mxu0 0.0
    %1014 = vmatprep.subr.mxu0 0.0
    %1015 = vmatpush1.msra.mxu0 0.0
    %1016 = vmatprep.subr.mxu0 0.0
    %1017 = vmatpush1.msra.mxu0 0.0
    %1018 = vmatprep.subr.mxu0 0.0
    %1019 = vmatpush1.msra.mxu0 0.0
    %1020 = vmatprep.subr.mxu0 0.0
    %1021 = vmatpush1.msra.mxu0 0.0
    %1022 = vmatprep.subr.mxu0 0.0
    %1023 = vmatpush1.msra.mxu0 0.0
    %1024 = vmatprep.subr.mxu0 0.0
    %1025 = vmatpush1.msra.mxu0 0.0
    %1026 = vmatprep.subr.mxu0 0.0
    %1027 = vmatpush1.msra.mxu0 0.0
    %1028 = vmatprep.subr.mxu0 0.0
    %1029 = vmatpush1.msra.mxu0 0.0
    %1030 = vmatprep.subr.mxu0 0.0
    %1031 = vmatpush1.msra.mxu0 0.0
    %1032 = vmatprep.subr.mxu0 0.0
    %1033 = vmatpush1.msra.mxu0 0.0
    %1034 = vmatprep.subr.mxu0 0.0
    %1035 = vmatpush1.msra.mxu0 0.0
    %1036 = vmatprep.subr.mxu0 0.0
    %1037 = vmatpush1.msra.mxu0 0.0
    %1038 = vmatprep.subr.mxu0 0.0
    %1039 = vmatpush1.msra.mxu0 0.0
    %1040 = vmatprep.subr.mxu0 0.0
    %1041 = vmatpush1.msra.mxu0 0.0
    %1042 = vmatprep.subr.mxu0 0.0
    %1043 = vmatpush1.msra.mxu0 0.0
    %1044 = vmatprep.subr.mxu0 0.0
    %1045 = vmatpush1.msra.mxu0 0.0
    %1046 = vmatprep.subr.mxu0 0.0
    %1047 = vmatpush1.msra.mxu0 0.0
    %1048 = vmatprep.subr.mxu0 0.0
    %1049 = vmatpush1.msra.mxu0 0.0
    %1050 = vmatprep.mubr.f32.mxu0 0.0
    %1051 = vmatmul.mubr.f32.gmra.mrb[0].mxu0 %v48
    %v1052 = vpop.f32.mrb[0].mxu0
    %v1053 = vadd.f32 0.0, %v1052
    %v1054 = vpop.f32.mrb[0].mxu0
    %1055 = vdwg.mxu0
    %v1120 = vunpack.c.l.b16 %v921
    %v1121 = vunpack.c.l.b16 %v922
    %v1122 = vunpack.c.l.b16 %v923
    %v1123 = vunpack.c.l.b16 %v924
    %v1124 = vunpack.c.l.b16 %v925
    %v1125 = vunpack.c.l.b16 %v926
    %v1126 = vunpack.c.l.b16 %v927
    %v1127 = vunpack.c.l.b16 %v928
    %v1128 = vunpack.c.l.b16 %v929
    %v1129 = vunpack.c.l.b16 %v930
    %v1130 = vunpack.c.l.b16 %v931
    %v1131 = vunpack.c.l.b16 %v932
    %v1132 = vunpack.c.l.b16 %v933
    %v1133 = vunpack.c.l.b16 %v934
    %v1134 = vunpack.c.l.b16 %v935
    %v1135 = vunpack.c.l.b16 %v936
    %v1136 = vunpack.c.l.b16 %v937
    %v1137 = vunpack.c.l.b16 %v938
    %v1138 = vunpack.c.l.b16 %v939
    %v1139 = vunpack.c.l.b16 %v940
    %v1140 = vunpack.c.l.b16 %v941
    %v1141 = vunpack.c.l.b16 %v942
    %v1142 = vunpack.c.l.b16 %v943
    %v1143 = vunpack.c.l.b16 %v944
    %v1144 = vunpack.c.l.b16 %v945
    %v1145 = vunpack.c.l.b16 %v946
    %v1146 = vunpack.c.l.b16 %v947
    %v1147 = vunpack.c.l.b16 %v948
    %v1148 = vunpack.c.l.b16 %v949
    %v1149 = vunpack.c.l.b16 %v950
    %v1150 = vunpack.c.l.b16 %v951
    %v1151 = vunpack.c.l.b16 %v952
    %v1152 = vunpack.c.l.b16 %v953
    %v1153 = vunpack.c.l.b16 %v954
    %v1154 = vunpack.c.l.b16 %v955
    %v1155 = vunpack.c.l.b16 %v956
    %v1156 = vunpack.c.l.b16 %v957
    %v1157 = vunpack.c.l.b16 %v958
    %v1158 = vunpack.c.l.b16 %v959
    %v1159 = vunpack.c.l.b16 %v960
    %v1160 = vunpack.c.l.b16 %v961
    %v1161 = vunpack.c.l.b16 %v962
    %v1162 = vunpack.c.l.b16 %v963
    %v1163 = vunpack.c.l.b16 %v964
    %v1164 = vunpack.c.l.b16 %v965
    %v1165 = vunpack.c.l.b16 %v966
    %v1166 = vunpack.c.l.b16 %v967
    %v1167 = vunpack.c.l.b16 %v968
    %v1168 = vunpack.c.l.b16 %v969
    %v1169 = vunpack.c.l.b16 %v970
    %v1170 = vunpack.c.l.b16 %v971
    %v1171 = vunpack.c.l.b16 %v972
    %v1172 = vunpack.c.l.b16 %v973
    %v1173 = vunpack.c.l.b16 %v974
    %v1174 = vunpack.c.l.b16 %v975
    %v1175 = vunpack.c.l.b16 %v976
    %v1176 = vunpack.c.l.b16 %v977
    %v1177 = vunpack.c.l.b16 %v978
    %v1178 = vunpack.c.l.b16 %v979
    %v1179 = vunpack.c.l.b16 %v980
    %v1180 = vunpack.c.l.b16 %v981
    %v1181 = vunpack.c.l.b16 %v982
    %v1182 = vunpack.c.l.b16 %v983
    %v1183 = vunpack.c.l.b16 %v984
    %v1184 = vpack.c.b16 %v1121, %v1120
    %v1185 = vpack.c.b16 %v1123, %v1122
    %v1186 = vpack.c.b16 %v1125, %v1124
    %v1187 = vpack.c.b16 %v1127, %v1126
    %v1188 = vpack.c.b16 %v1129, %v1128
    %v1189 = vpack.c.b16 %v1131, %v1130
    %v1190 = vpack.c.b16 %v1133, %v1132
    %v1191 = vpack.c.b16 %v1135, %v1134
    %v1192 = vpack.c.b16 %v1137, %v1136
    %v1193 = vpack.c.b16 %v1139, %v1138
    %v1194 = vpack.c.b16 %v1141, %v1140
    %v1195 = vpack.c.b16 %v1143, %v1142
    %v1196 = vpack.c.b16 %v1145, %v1144
    %v1197 = vpack.c.b16 %v1147, %v1146
    %v1198 = vpack.c.b16 %v1149, %v1148
    %v1199 = vpack.c.b16 %v1151, %v1150
    %v1200 = vpack.c.b16 %v1153, %v1152
    %v1201 = vpack.c.b16 %v1155, %v1154
    %v1202 = vpack.c.b16 %v1157, %v1156
    %v1203 = vpack.c.b16 %v1159, %v1158
    %v1204 = vpack.c.b16 %v1161, %v1160
    %v1205 = vpack.c.b16 %v1163, %v1162
    %v1206 = vpack.c.b16 %v1165, %v1164
    %v1207 = vpack.c.b16 %v1167, %v1166
    %v1208 = vpack.c.b16 %v1169, %v1168
    %v1209 = vpack.c.b16 %v1171, %v1170
    %v1210 = vpack.c.b16 %v1173, %v1172
    %v1211 = vpack.c.b16 %v1175, %v1174
    %v1212 = vpack.c.b16 %v1177, %v1176
    %v1213 = vpack.c.b16 %v1179, %v1178
    %v1214 = vpack.c.b16 %v1181, %v1180
    %v1215 = vpack.c.b16 %v1183, %v1182
    %1248 = vmatprep.subr.bf16.mxu0 0
    %1249 = vmatpush1.bf16.msra.mxu0 %v1184
    %1250 = vmatprep.subr.bf16.mxu0 0
    %1251 = vmatpush1.bf16.msra.mxu0 %v1185
    %1252 = vmatprep.subr.bf16.mxu0 0
    %1253 = vmatpush1.bf16.msra.mxu0 %v1186
    %1254 = vmatprep.subr.bf16.mxu0 0
    %1255 = vmatpush1.bf16.msra.mxu0 %v1187
    %1256 = vmatprep.subr.bf16.mxu0 0
    %1257 = vmatpush1.bf16.msra.mxu0 %v1188
    %1258 = vmatprep.subr.bf16.mxu0 0
    %1259 = vmatpush1.bf16.msra.mxu0 %v1189
    %1260 = vmatprep.subr.bf16.mxu0 0
    %1261 = vmatpush1.bf16.msra.mxu0 %v1190
    %1262 = vmatprep.subr.bf16.mxu0 0
    %1263 = vmatpush1.bf16.msra.mxu0 %v1191
    %1264 = vmatprep.subr.bf16.mxu0 0
    %1265 = vmatpush1.bf16.msra.mxu0 %v1192
    %1266 = vmatprep.subr.bf16.mxu0 0
    %1267 = vmatpush1.bf16.msra.mxu0 %v1193
    %1268 = vmatprep.subr.bf16.mxu0 0
    %1269 = vmatpush1.bf16.msra.mxu0 %v1194
    %1270 = vmatprep.subr.bf16.mxu0 0
    %1271 = vmatpush1.bf16.msra.mxu0 %v1195
    %1272 = vmatprep.subr.bf16.mxu0 0
    %1273 = vmatpush1.bf16.msra.mxu0 %v1196
    %1274 = vmatprep.subr.bf16.mxu0 0
    %1275 = vmatpush1.bf16.msra.mxu0 %v1197
    %1276 = vmatprep.subr.bf16.mxu0 0
    %1277 = vmatpush1.bf16.msra.mxu0 %v1198
    %1278 = vmatprep.subr.bf16.mxu0 0
    %1279 = vmatpush1.bf16.msra.mxu0 %v1199
    %1280 = vmatprep.mubr.bf16.mxu0 %v918
    %1281 = vmatmul.mubr.bf16.gmra.mrb[0].mxu0 %v917
    %v1282 = vpop.f32.mrb[0].mxu0
    %v1283 = vadd.f32 %v1053, %v1282
    %v1284 = vpop.f32.mrb[0].mxu0
    %v1285 = vpop.f32.mrb[0].mxu0
    %v1286 = vpop.f32.mrb[0].mxu0
    %1287 = vdwg.mxu0
    %1288 = vmatprep.subr.bf16.mxu0 0
    %1289 = vmatpush1.bf16.msra.mxu0 %v1200
    %1290 = vmatprep.subr.bf16.mxu0 0
    %1291 = vmatpush1.bf16.msra.mxu0 %v1201
    %1292 = vmatprep.subr.bf16.mxu0 0
    %1293 = vmatpush1.bf16.msra.mxu0 %v1202
    %1294 = vmatprep.subr.bf16.mxu0 0
    %1295 = vmatpush1.bf16.msra.mxu0 %v1203
    %1296 = vmatprep.subr.bf16.mxu0 0
    %1297 = vmatpush1.bf16.msra.mxu0 %v1204
    %1298 = vmatprep.subr.bf16.mxu0 0
    %1299 = vmatpush1.bf16.msra.mxu0 %v1205
    %1300 = vmatprep.subr.bf16.mxu0 0
    %1301 = vmatpush1.bf16.msra.mxu0 %v1206
    %1302 = vmatprep.subr.bf16.mxu0 0
    %1303 = vmatpush1.bf16.msra.mxu0 %v1207
    %1304 = vmatprep.subr.bf16.mxu0 0
    %1305 = vmatpush1.bf16.msra.mxu0 %v1208
    %1306 = vmatprep.subr.bf16.mxu0 0
    %1307 = vmatpush1.bf16.msra.mxu0 %v1209
    %1308 = vmatprep.subr.bf16.mxu0 0
    %1309 = vmatpush1.bf16.msra.mxu0 %v1210
    %1310 = vmatprep.subr.bf16.mxu0 0
    %1311 = vmatpush1.bf16.msra.mxu0 %v1211
    %1312 = vmatprep.subr.bf16.mxu0 0
    %1313 = vmatpush1.bf16.msra.mxu0 %v1212
    %1314 = vmatprep.subr.bf16.mxu0 0
    %1315 = vmatpush1.bf16.msra.mxu0 %v1213
    %1316 = vmatprep.subr.bf16.mxu0 0
    %1317 = vmatpush1.bf16.msra.mxu0 %v1214
    %1318 = vmatprep.subr.bf16.mxu0 0
    %1319 = vmatpush1.bf16.msra.mxu0 %v1215
    %1320 = vmatprep.mubr.bf16.mxu0 %v920
    %1321 = vmatmul.mubr.bf16.gmra.mrb[0].mxu0 %v919
    %v1322 = vpop.f32.mrb[0].mxu0
    %v1323 = vadd.f32 %v1283, %v1322
    %v1324 = vpop.f32.mrb[0].mxu0
    %v1325 = vpop.f32.mrb[0].mxu0
    %v1326 = vpop.f32.mrb[0].mxu0
    %1327 = vdwg.mxu0
    %v1328 = vld [vmem:[%s9] sm:$0x1]
    %v1330 = vlaneseq
    %v1331 = vshrl.u32 %v1330, 7
    %v1332 = vsub.s32 0, %v1331
    %v1333 = vrot.slane %v1328, %v1332
    %v1335 = vadd.f32 %v1323, %v1333
    %1336 = vst [vmem:[#allocation2] sm:$0x3] %v1335
    // Predicated region
    $region42: #{da1qn_forward.7} parent=1 // pred_check
      _
    $region43: #{da1qn_forward.7} parent=1 // pred_check_branch
      %1338 = sbr.rel (0) target = $region45
    $region44: #{da1qn_forward.7} parent=1 // pred_region
      %s1340 = ssub.s32 32, 32
      %1341 = vsyncadd [#allocation3], %s1340
      %s1343 = sshll.u32 [#allocation2], 4
      %s1344 = int_to_ptr.vmem [resolvable:$true] %s1343
      %1346 = dma.vmem_to_hbm [thread:$0]  %s1344, 32, %s10, [#allocation3]
    $region45: #{da1qn_forward.7} parent=1 // pred_fallthru
      _
    // Predicated region
    $region46: #{da1qn_forward.7} parent=1 // pred_check
      _
    $region47: #{da1qn_forward.7} parent=1 // pred_check_branch
      %1348 = sbr.rel (0) target = $region49
    $region48: #{da1qn_forward.7} parent=1 // pred_region
      %1349 = dma.done [#allocation3], 32
    $region49: #{da1qn_forward.7} parent=1 // pred_fallthru
      _
    %1350 = vsyncpa [#allocation3], 1

</llo_original>
